<compile_context>
chip_gen: v7x
topology: tpu7x:2x2x1
jax: 0.10.0
libtpu: 0.0.40
codegen_flags: <defaults>
</compile_context>

<pallas_src>
import functools

import jax
import jax.numpy as jnp
from jax import lax
from jax.experimental import pallas as pl
from jax.experimental.pallas import tpu as pltpu


LANE = 128      # vreg lane width
SUBLANE = 8     # f32 sublane count
ROW_TILE = 256  # row tile for the projection / FC grids


def _ceil_to(x, m):
    return ((x + m - 1) // m) * m


# ------------------------------ in-kernel math ------------------------------

def _sigmoid_fast(x):
    # sigmoid via EUP exp + approximate reciprocal (keeps the divide off VALU).
    return pl.reciprocal(1.0 + jnp.exp(-x), approx=True)


def _sigmoid_exact(x):
    return 1.0 / (1.0 + jnp.exp(-x))


def _gelu(x):
    # tanh-approximation GELU (exp/tanh run on the EUP slot).
    # TODO(synk): torch nn.GELU() default is exact erf; tanh approx differs by ~1e-3 max.
    c = 0.7978845608028654  # sqrt(2/pi)
    return 0.5 * x * (1.0 + jnp.tanh(c * (x + 0.044715 * x * x * x)))


# ----------------- hoisted input projection (both directions) ----------------

def _proj_kernel(x_ref, w_ref, b_ref, gif_ref, gib_ref, *, hp3):
    # x: (tile, Din) bf16, w: (Din, 6Hp) bf16, b: (1, 6Hp) f32 (biases folded)
    g = jnp.dot(x_ref[...], w_ref[...],
                preferred_element_type=jnp.float32) + b_ref[...]   # (tile, 6Hp)
    gif_ref[...] = g[:, 0:hp3]          # 128-aligned lane slices
    gib_ref[...] = g[:, hp3:2 * hp3]


def _run_proj(x_flat, w_cat, b_cat):
    r_pad, din = x_flat.shape
    hp6 = w_cat.shape[1]
    hp3 = hp6 // 2
    grid = (r_pad // ROW_TILE,)
    out_shape = (jax.ShapeDtypeStruct((r_pad, hp3), jnp.float32),
                 jax.ShapeDtypeStruct((r_pad, hp3), jnp.float32))
    return pl.pallas_call(
        functools.partial(_proj_kernel, hp3=hp3),
        grid=grid,
        in_specs=[pl.BlockSpec((ROW_TILE, din), lambda i: (i, 0)),
                  pl.BlockSpec((din, hp6), lambda i: (0, 0)),
                  pl.BlockSpec((1, hp6), lambda i: (0, 0))],
        out_specs=(pl.BlockSpec((ROW_TILE, hp3), lambda i: (i, 0)),
                   pl.BlockSpec((ROW_TILE, hp3), lambda i: (i, 0))),
        out_shape=out_shape,
        compiler_params=pltpu.CompilerParams(
            dimension_semantics=("parallel",)),
    )(x_flat, w_cat, b_cat)


# ------------------- fused bidirectional GRU recurrence ----------------------

def _bigru_kernel(gif_ref, gib_ref, whhf_ref, whhb_ref, bnf_ref, bnb_ref,
                  out_ref, *, hidden_p):
    # gi_f/gi_b : (T, Bp, 3Hp) f32  (precomputed x@W_ih + folded biases)
    # whh_f/b   : (Hp, 3Hp) bf16    bn_f/b: (1, Hp) f32 (b_hh of the n gate)
    # out       : (T, Bp, 2Hp) f32  (fwd -> [:, :, :Hp], bwd -> [:, :, Hp:])
    T = gif_ref.shape[0]
    Bp = gif_ref.shape[1]
    Hp = hidden_p

    whh_f = whhf_ref[...]
    whh_b = whhb_ref[...]
    bn_f = bnf_ref[...]
    bn_b = bnb_ref[...]

    def cell(gi, h, whh, bn):
        # Only the recurrent matmul + gate math lives on the sequential path.
        gh = jnp.dot(h.astype(jnp.bfloat16), whh,
                     preferred_element_type=jnp.float32)            # (Bp, 3Hp)
        r = _sigmoid_fast(gi[:, 0:Hp] + gh[:, 0:Hp])
        z = _sigmoid_fast(gi[:, Hp:2 * Hp] + gh[:, Hp:2 * Hp])
        n = jnp.tanh(gi[:, 2 * Hp:3 * Hp] + r * (gh[:, 2 * Hp:3 * Hp] + bn))
        return (1.0 - z) * n + z * h

    def step(i, carry):
        h_f, h_b = carry
        t_b = T - 1 - i
        h_f = cell(gif_ref[i], h_f, whh_f, bn_f)       # two independent chains
        h_b = cell(gib_ref[t_b], h_b, whh_b, bn_b)     # interleave -> hide latency
        out_ref[i, :, 0:Hp] = h_f                      # 128-lane aligned stores
        out_ref[t_b, :, Hp:2 * Hp] = h_b
        return (h_f, h_b)

    h0 = jnp.zeros((Bp, Hp), jnp.float32)
    lax.fori_loop(0, T, step, (h0, h0))


def _run_bigru(gi_f, gi_b, whh_f, whh_b, bn_f, bn_b):
    T, Bp, hp3 = gi_f.shape
    Hp = hp3 // 3
    # TODO(synk): for very long T the GI / output tensors are fully VMEM-resident
    # here; chunk time with manual make_async_copy double buffering for v7x.
    return pl.pallas_call(
        functools.partial(_bigru_kernel, hidden_p=Hp),
        out_shape=jax.ShapeDtypeStruct((T, Bp, 2 * Hp), jnp.float32),
        compiler_params=pltpu.CompilerParams(
            vmem_limit_bytes=64 * 1024 * 1024),
    )(gi_f, gi_b, whh_f, whh_b, bn_f, bn_b)


# ------------------------------ FC head kernel -------------------------------

def _fc_kernel(x_ref, w1_ref, b1_ref, w2_ref, b2_ref, w3_ref, b3_ref, out_ref):
    # Transposed orientation: x (2Hp, tile), weights (out_dim, in_dim),
    # output (8, tile) -> lane-dense stores (row 0 holds the real scores).
    h = jnp.dot(w1_ref[...], x_ref[...],
                preferred_element_type=jnp.float32) + b1_ref[...]     # (64, tile)
    h = _gelu(h)
    h = jnp.dot(w2_ref[...], h.astype(jnp.bfloat16),
                preferred_element_type=jnp.float32) + b2_ref[...]     # (16, tile)
    h = _gelu(h)
    h = jnp.dot(w3_ref[...], h.astype(jnp.bfloat16),
                preferred_element_type=jnp.float32) + b3_ref[...]     # (8, tile)
    out_ref[...] = _sigmoid_exact(h)
    # TODO(synk): dropout layers (p=0.0) are identity at inference and omitted.


def _run_fc(x_t, fc):
    d2hp, r_pad = x_t.shape
    grid = (r_pad // ROW_TILE,)
    return pl.pallas_call(
        _fc_kernel,
        grid=grid,
        in_specs=[pl.BlockSpec((d2hp, ROW_TILE), lambda i: (0, i)),
                  pl.BlockSpec(fc["w1t"].shape, lambda i: (0, 0)),
                  pl.BlockSpec(fc["b1"].shape, lambda i: (0, 0)),
                  pl.BlockSpec(fc["w2t"].shape, lambda i: (0, 0)),
                  pl.BlockSpec(fc["b2"].shape, lambda i: (0, 0)),
                  pl.BlockSpec(fc["w3t"].shape, lambda i: (0, 0)),
                  pl.BlockSpec(fc["b3"].shape, lambda i: (0, 0))],
        out_specs=pl.BlockSpec((8, ROW_TILE), lambda i: (0, i)),
        out_shape=jax.ShapeDtypeStruct((8, r_pad), jnp.float32),
        compiler_params=pltpu.CompilerParams(
            dimension_semantics=("parallel",)),
    )(x_t, fc["w1t"], fc["b1"], fc["w2t"], fc["b2"], fc["w3t"], fc["b3"])


# -------------------------------- full forward -------------------------------

def gru_fc_forward(x, params):
    """x: (B, T, d_features) batch-first, like the PyTorch module."""
    B, T, _ = x.shape
    Hp = params["gru"][0]["w_hh_f"].shape[0]          # padded hidden size
    Bp = _ceil_to(B, SUBLANE)
    R = T * Bp
    R_pad = _ceil_to(R, ROW_TILE)

    # time-major, batch-padded activations: (T, Bp, Din)
    h = jnp.transpose(x, (1, 0, 2)).astype(jnp.float32)
    h = jnp.pad(h, ((0, 0), (0, Bp - B), (0, 0)))

    for lp in params["gru"]:
        din = h.shape[-1]
        flat = jnp.pad(h.reshape(R, din), ((0, R_pad - R), (0, 0)))
        gi_f, gi_b = _run_proj(flat.astype(jnp.bfloat16), lp["w_ih"], lp["bias"])
        gi_f = gi_f[:R].reshape(T, Bp, 3 * Hp)
        gi_b = gi_b[:R].reshape(T, Bp, 3 * Hp)
        h = _run_bigru(gi_f, gi_b, lp["w_hh_f"], lp["w_hh_b"],
                       lp["b_n_f"], lp["b_n_b"])       # (T, Bp, 2Hp)
        # TODO(synk): inter-layer dropout omitted (module built with dropout=0.0)

    flat = jnp.pad(h.reshape(R, 2 * Hp), ((0, R_pad - R), (0, 0)))
    scores = _run_fc(jnp.transpose(flat).astype(jnp.bfloat16), params["fc"])
    y = scores[0, :R].reshape(T, Bp)[:, :B]            # (T, B) real rows/cols
    return jnp.transpose(y)[:, :, None]                # (B, T, 1)


# ------------------------------ parameter init -------------------------------

def _uniform(key, shape, bound):
    return jax.random.uniform(key, shape, jnp.float32, -bound, bound)


def _place_rows_bidir(w, h_real, hp):
    # w: (2H, C) with fwd rows [0:H], bwd rows [H:2H]
    # -> (2Hp, C) with fwd at [0:H], bwd at [Hp:Hp+H], zeros elsewhere.
    top = jnp.pad(w[:h_real], ((0, hp - h_real), (0, 0)))
    bot = jnp.pad(w[h_real:], ((0, hp - h_real), (0, 0)))
    return jnp.concatenate([top, bot], axis=0)


def _pad_gates_cols(w, h_real, hp):
    # w: (rows, 3H) gates [r|z|n] -> (rows, 3Hp), each gate zero-padded to Hp lanes.
    gates = [jnp.pad(w[:, g * h_real:(g + 1) * h_real], ((0, 0), (0, hp - h_real)))
             for g in range(3)]
    return jnp.concatenate(gates, axis=1)


def init_params(key, d_features, d_model, n_layers):
    """Build parameters directly in the padded / kernel-friendly layout."""
    H = d_model
    Hp = _ceil_to(H, LANE)
    k_gru = 1.0 / (H ** 0.5)
    layers = []
    for layer in range(n_layers):
        din = d_features if layer == 0 else 2 * H
        per_dir = []
        for _ in range(2):  # fwd, bwd
            key, k1, k2, k3, k4 = jax.random.split(key, 5)
            w_ih = _uniform(k1, (din, 3 * H), k_gru)    # (Din, 3H), gates r|z|n
            w_hh = _uniform(k2, (H, 3 * H), k_gru)
            b_ih = _uniform(k3, (1, 3 * H), k_gru)
            b_hh = _uniform(k4, (1, 3 * H), k_gru)
            w_ih_rows = w_ih if layer == 0 else _place_rows_bidir(w_ih, H, Hp)
            w_ih_p = _pad_gates_cols(w_ih_rows, H, Hp)                      # (Din_p, 3Hp)
            w_hh_p = _pad_gates_cols(jnp.pad(w_hh, ((0, Hp - H), (0, 0))), H, Hp)  # (Hp, 3Hp)
            # bias folding: r,z gates get b_ih + b_hh once; n gate keeps b_hh separate
            b_fold = jnp.concatenate(
                [b_ih[:, 0:H] + b_hh[:, 0:H],
                 b_ih[:, H:2 * H] + b_hh[:, H:2 * H],
                 b_ih[:, 2 * H:3 * H]], axis=1)
            b_fold_p = _pad_gates_cols(b_fold, H, Hp)                       # (1, 3Hp)
            b_n_p = jnp.pad(b_hh[:, 2 * H:3 * H], ((0, 0), (0, Hp - H)))    # (1, Hp)
            per_dir.append((w_ih_p, w_hh_p, b_fold_p, b_n_p))
        (wf, whf, bf, bnf), (wb, whb, bb, bnb) = per_dir
        layers.append({
            "w_ih": jnp.concatenate([wf, wb], axis=1).astype(jnp.bfloat16),  # (Din_p, 6Hp)
            "bias": jnp.concatenate([bf, bb], axis=1),                       # (1, 6Hp) f32
            "w_hh_f": whf.astype(jnp.bfloat16),                              # (Hp, 3Hp)
            "w_hh_b": whb.astype(jnp.bfloat16),
            "b_n_f": bnf, "b_n_b": bnb,                                      # (1, Hp) f32
        })

    key, k1, k2, k3, k4, k5, k6 = jax.random.split(key, 7)
    s1 = 1.0 / ((2 * H) ** 0.5)
    s2 = 1.0 / (64 ** 0.5)
    s3 = 1.0 / (16 ** 0.5)
    w1 = _uniform(k1, (2 * H, 64), s1)
    w2 = _uniform(k3, (64, 16), s2)
    w3 = _uniform(k5, (16, 1), s3)
    fc = {
        "w1t": jnp.transpose(_place_rows_bidir(w1, H, Hp)).astype(jnp.bfloat16),   # (64, 2Hp)
        "b1": _uniform(k2, (64, 1), s1),
        "w2t": jnp.transpose(w2).astype(jnp.bfloat16),                             # (16, 64)
        "b2": _uniform(k4, (16, 1), s2),
        "w3t": jnp.pad(jnp.transpose(w3), ((0, 7), (0, 0))).astype(jnp.bfloat16),  # (8, 16)
        "b3": jnp.pad(_uniform(k6, (1, 1), s3), ((0, 7), (0, 0))),                 # (8, 1)
    }
    return {"gru": layers, "fc": fc}


# ------------------------------------ main ------------------------------------

if __name__ == "__main__":
    B, T = 2, 8
    d_features, d_model, n_layers = 16, 32, 2

    key = jax.random.PRNGKey(0)
    pkey, xkey = jax.random.split(key)
    params = init_params(pkey, d_features, d_model, n_layers)
    x = jax.random.normal(xkey, (B, T, d_features), jnp.float32)

    y = jax.jit(gru_fc_forward)(x, params)
    y = jax.block_until_ready(y)

    assert y.shape == (B, T, 1), y.shape
    assert bool(jnp.all(jnp.isfinite(y)))
    assert bool(jnp.all((y >= 0.0) & (y <= 1.0)))  # sigmoid output range
    print("KERNEL_OK")
</pallas_src>

<mosaic_0001>
module attributes {stable_mosaic.version = 11 : i64} {
  func.func @_proj_kernel(%arg0: i32, %arg1: memref<256x256xbf16, #tpu.memory_space<vmem>>, %arg2: memref<256x768xbf16, #tpu.memory_space<vmem>>, %arg3: memref<1x768xf32, #tpu.memory_space<vmem>>, %arg4: memref<256x384xf32, #tpu.memory_space<vmem>>, %arg5: memref<256x384xf32, #tpu.memory_space<vmem>>) attributes {dimension_semantics = [#tpu.dimension_semantics<parallel>], iteration_bounds = array<i64: 1>, scalar_prefetch = 0 : i64, scratch_operands = 0 : i64, tpu.core_type = #tpu.core_type<tc>, window_params = [{transform_indices = @transform_0, window_bounds = array<i64: 256, 256>}, {pipeline_mode = #tpu.pipeline_mode<synchronous>, transform_indices = @transform_1, window_bounds = array<i64: 256, 768>}, {pipeline_mode = #tpu.pipeline_mode<synchronous>, transform_indices = @transform_2, window_bounds = array<i64: 1, 768>}, {transform_indices = @transform_3, window_bounds = array<i64: 256, 384>}, {transform_indices = @transform_4, window_bounds = array<i64: 256, 384>}]} {
    %c0 = arith.constant 0 : index
    %c0_0 = arith.constant 0 : index
    %0 = vector.load %arg1[%c0, %c0_0] : memref<256x256xbf16, #tpu.memory_space<vmem>>, vector<256x256xbf16>
    %c0_1 = arith.constant 0 : index
    %c0_2 = arith.constant 0 : index
    %1 = vector.load %arg2[%c0_1, %c0_2] : memref<256x768xbf16, #tpu.memory_space<vmem>>, vector<256x768xbf16>
    %cst = arith.constant dense<0.000000e+00> : vector<256x768xf32>
    %2 = tpu.matmul %0, %1, %cst {dimension_numbers = #tpu.dot_dimension_numbers<[1], [0], [0], [1], [0, 0, 1, 1], [], []>} : vector<256x256xbf16>, vector<256x768xbf16>, vector<256x768xf32> -> vector<256x768xf32>
    %c0_3 = arith.constant 0 : index
    %c0_4 = arith.constant 0 : index
    %3 = vector.load %arg3[%c0_3, %c0_4] : memref<1x768xf32, #tpu.memory_space<vmem>>, vector<1x768xf32>
    %4 = vector.broadcast %3 : vector<1x768xf32> to vector<256x768xf32>
    %5 = arith.addf %2, %4 : vector<256x768xf32>
    %6 = vector.extract_strided_slice %5 {offsets = [0, 0], sizes = [256, 384], strides = [1, 1]} : vector<256x768xf32> to vector<256x384xf32>
    %c0_5 = arith.constant 0 : index
    %c0_6 = arith.constant 0 : index
    %7 = vector.load %arg4[%c0_5, %c0_6] : memref<256x384xf32, #tpu.memory_space<vmem>>, vector<256x384xf32>
    tpu.vector_store %arg4[%c0_5, %c0_6], %6 {strides = array<i32>} : memref<256x384xf32, #tpu.memory_space<vmem>>, vector<256x384xf32>,
    %8 = vector.extract_strided_slice %5 {offsets = [0, 384], sizes = [256, 384], strides = [1, 1]} : vector<256x768xf32> to vector<256x384xf32>
    %c0_7 = arith.constant 0 : index
    %c0_8 = arith.constant 0 : index
    %9 = vector.load %arg5[%c0_7, %c0_8] : memref<256x384xf32, #tpu.memory_space<vmem>>, vector<256x384xf32>
    tpu.vector_store %arg5[%c0_7, %c0_8], %8 {strides = array<i32>} : memref<256x384xf32, #tpu.memory_space<vmem>>, vector<256x384xf32>,
    return
  }
  func.func @transform_0(%arg0: i32) -> (i32, i32) {
    %c0_i32 = arith.constant 0 : i32
    %c0_i32_0 = arith.constant 0 : i32
    return %arg0, %c0_i32 : i32, i32
  }
  func.func @transform_1(%arg0: i32) -> (i32, i32) {
    %c0_i32 = arith.constant 0 : i32
    %c0_i32_0 = arith.constant 0 : i32
    %c0_i32_1 = arith.constant 0 : i32
    return %c0_i32, %c0_i32_0 : i32, i32
  }
  func.func @transform_2(%arg0: i32) -> (i32, i32) {
    %c0_i32 = arith.constant 0 : i32
    %c0_i32_0 = arith.constant 0 : i32
    %c0_i32_1 = arith.constant 0 : i32
    return %c0_i32, %c0_i32_0 : i32, i32
  }
  func.func @transform_3(%arg0: i32) -> (i32, i32) {
    %c0_i32 = arith.constant 0 : i32
    %c0_i32_0 = arith.constant 0 : i32
    return %arg0, %c0_i32 : i32, i32
  }
  func.func @transform_4(%arg0: i32) -> (i32, i32) {
    %c0_i32 = arith.constant 0 : i32
    %c0_i32_0 = arith.constant 0 : i32
    return %arg0, %c0_i32 : i32, i32
  }
}

module attributes {stable_mosaic.version = 11 : i64} {
  func.func @_proj_kernel(%arg0: i32, %arg1: memref<256x16xbf16, #tpu.memory_space<vmem>>, %arg2: memref<16x768xbf16, #tpu.memory_space<vmem>>, %arg3: memref<1x768xf32, #tpu.memory_space<vmem>>, %arg4: memref<256x384xf32, #tpu.memory_space<vmem>>, %arg5: memref<256x384xf32, #tpu.memory_space<vmem>>) attributes {dimension_semantics = [#tpu.dimension_semantics<parallel>], iteration_bounds = array<i64: 1>, scalar_prefetch = 0 : i64, scratch_operands = 0 : i64, tpu.core_type = #tpu.core_type<tc>, window_params = [{transform_indices = @transform_0, window_bounds = array<i64: 256, 16>}, {pipeline_mode = #tpu.pipeline_mode<synchronous>, transform_indices = @transform_1, window_bounds = array<i64: 16, 768>}, {pipeline_mode = #tpu.pipeline_mode<synchronous>, transform_indices = @transform_2, window_bounds = array<i64: 1, 768>}, {transform_indices = @transform_3, window_bounds = array<i64: 256, 384>}, {transform_indices = @transform_4, window_bounds = array<i64: 256, 384>}]} {
    %c0 = arith.constant 0 : index
    %c0_0 = arith.constant 0 : index
    %0 = vector.load %arg1[%c0, %c0_0] : memref<256x16xbf16, #tpu.memory_space<vmem>>, vector<256x16xbf16>
    %c0_1 = arith.constant 0 : index
    %c0_2 = arith.constant 0 : index
    %1 = vector.load %arg2[%c0_1, %c0_2] : memref<16x768xbf16, #tpu.memory_space<vmem>>, vector<16x768xbf16>
    %cst = arith.constant dense<0.000000e+00> : vector<256x768xf32>
    %2 = tpu.matmul %0, %1, %cst {dimension_numbers = #tpu.dot_dimension_numbers<[1], [0], [0], [1], [0, 0, 1, 1], [], []>} : vector<256x16xbf16>, vector<16x768xbf16>, vector<256x768xf32> -> vector<256x768xf32>
    %c0_3 = arith.constant 0 : index
    %c0_4 = arith.constant 0 : index
    %3 = vector.load %arg3[%c0_3, %c0_4] : memref<1x768xf32, #tpu.memory_space<vmem>>, vector<1x768xf32>
    %4 = vector.broadcast %3 : vector<1x768xf32> to vector<256x768xf32>
    %5 = arith.addf %2, %4 : vector<256x768xf32>
    %6 = vector.extract_strided_slice %5 {offsets = [0, 0], sizes = [256, 384], strides = [1, 1]} : vector<256x768xf32> to vector<256x384xf32>
    %c0_5 = arith.constant 0 : index
    %c0_6 = arith.constant 0 : index
    %7 = vector.load %arg4[%c0_5, %c0_6] : memref<256x384xf32, #tpu.memory_space<vmem>>, vector<256x384xf32>
    tpu.vector_store %arg4[%c0_5, %c0_6], %6 {strides = array<i32>} : memref<256x384xf32, #tpu.memory_space<vmem>>, vector<256x384xf32>,
    %8 = vector.extract_strided_slice %5 {offsets = [0, 384], sizes = [256, 384], strides = [1, 1]} : vector<256x768xf32> to vector<256x384xf32>
    %c0_7 = arith.constant 0 : index
    %c0_8 = arith.constant 0 : index
    %9 = vector.load %arg5[%c0_7, %c0_8] : memref<256x384xf32, #tpu.memory_space<vmem>>, vector<256x384xf32>
    tpu.vector_store %arg5[%c0_7, %c0_8], %8 {strides = array<i32>} : memref<256x384xf32, #tpu.memory_space<vmem>>, vector<256x384xf32>,
    return
  }
  func.func @transform_0(%arg0: i32) -> (i32, i32) {
    %c0_i32 = arith.constant 0 : i32
    %c0_i32_0 = arith.constant 0 : i32
    return %arg0, %c0_i32 : i32, i32
  }
  func.func @transform_1(%arg0: i32) -> (i32, i32) {
    %c0_i32 = arith.constant 0 : i32
    %c0_i32_0 = arith.constant 0 : i32
    %c0_i32_1 = arith.constant 0 : i32
    return %c0_i32, %c0_i32_0 : i32, i32
  }
  func.func @transform_2(%arg0: i32) -> (i32, i32) {
    %c0_i32 = arith.constant 0 : i32
    %c0_i32_0 = arith.constant 0 : i32
    %c0_i32_1 = arith.constant 0 : i32
    return %c0_i32, %c0_i32_0 : i32, i32
  }
  func.func @transform_3(%arg0: i32) -> (i32, i32) {
    %c0_i32 = arith.constant 0 : i32
    %c0_i32_0 = arith.constant 0 : i32
    return %arg0, %c0_i32 : i32, i32
  }
  func.func @transform_4(%arg0: i32) -> (i32, i32) {
    %c0_i32 = arith.constant 0 : i32
    %c0_i32_0 = arith.constant 0 : i32
    return %arg0, %c0_i32 : i32, i32
  }
}

module attributes {stable_mosaic.version = 11 : i64} {
  func.func @_bigru_kernel(%arg0: memref<8x8x384xf32, #tpu.memory_space<vmem>>, %arg1: memref<8x8x384xf32, #tpu.memory_space<vmem>>, %arg2: memref<128x384xbf16, #tpu.memory_space<vmem>>, %arg3: memref<128x384xbf16, #tpu.memory_space<vmem>>, %arg4: memref<1x128xf32, #tpu.memory_space<vmem>>, %arg5: memref<1x128xf32, #tpu.memory_space<vmem>>, %arg6: memref<8x8x256xf32, #tpu.memory_space<vmem>>) attributes {dimension_semantics = [], scalar_prefetch = 0 : i64, scratch_operands = 0 : i64, tpu.core_type = #tpu.core_type<tc>} {
    %c0 = arith.constant 0 : index
    %c0_0 = arith.constant 0 : index
    %0 = vector.load %arg2[%c0, %c0_0] : memref<128x384xbf16, #tpu.memory_space<vmem>>, vector<128x384xbf16>
    %c0_1 = arith.constant 0 : index
    %c0_2 = arith.constant 0 : index
    %1 = vector.load %arg3[%c0_1, %c0_2] : memref<128x384xbf16, #tpu.memory_space<vmem>>, vector<128x384xbf16>
    %c0_3 = arith.constant 0 : index
    %c0_4 = arith.constant 0 : index
    %2 = vector.load %arg4[%c0_3, %c0_4] : memref<1x128xf32, #tpu.memory_space<vmem>>, vector<1x128xf32>
    %c0_5 = arith.constant 0 : index
    %c0_6 = arith.constant 0 : index
    %3 = vector.load %arg5[%c0_5, %c0_6] : memref<1x128xf32, #tpu.memory_space<vmem>>, vector<1x128xf32>
    %cst = arith.constant 0.000000e+00 : f32
    %4 = vector.broadcast %cst : f32 to vector<8x128xf32>
    %c0_i32 = arith.constant 0 : i32
    %c8_i32 = arith.constant 8 : i32
    %5 = arith.addi %c0_i32, %c8_i32 : i32
    %c1_i32 = arith.constant 1 : i32
    %6:2 = scf.for %arg7 = %c0_i32 to %5 step %c1_i32 iter_args(%arg8 = %4, %arg9 = %4) -> (vector<8x128xf32>, vector<8x128xf32>)  : i32 {
      %c7_i32 = arith.constant 7 : i32
      %7 = arith.subi %c7_i32, %arg7 : i32
      %8 = arith.index_cast %arg7 : i32 to index
      %c0_8 = arith.constant 0 : index
      %c0_9 = arith.constant 0 : index
      %9 = vector.load %arg0[%8, %c0_8, %c0_9] : memref<8x8x384xf32, #tpu.memory_space<vmem>>, vector<1x8x384xf32>
      %10 = vector.shape_cast %9 : vector<1x8x384xf32> to vector<8x384xf32>
      %11 = arith.truncf %arg8 : vector<8x128xf32> to vector<8x128xbf16>
      %cst_10 = arith.constant dense<0.000000e+00> : vector<8x384xf32>
      %12 = tpu.matmul %11, %0, %cst_10 {dimension_numbers = #tpu.dot_dimension_numbers<[1], [0], [0], [1], [0, 0, 1, 1], [], []>} : vector<8x128xbf16>, vector<128x384xbf16>, vector<8x384xf32> -> vector<8x384xf32>
      %13 = vector.extract_strided_slice %10 {offsets = [0, 0], sizes = [8, 128], strides = [1, 1]} : vector<8x384xf32> to vector<8x128xf32>
      %14 = vector.extract_strided_slice %12 {offsets = [0, 0], sizes = [8, 128], strides = [1, 1]} : vector<8x384xf32> to vector<8x128xf32>
      %15 = arith.addf %13, %14 : vector<8x128xf32>
      %cst_11 = arith.constant 0.000000e+00 : f32
      %16 = vector.broadcast %cst_11 : f32 to vector<8x128xf32>
      %17 = arith.subf %16, %15 : vector<8x128xf32>
      %18 = math.exp %17 : vector<8x128xf32>
      %cst_12 = arith.constant 1.000000e+00 : f32
      %19 = vector.broadcast %cst_12 : f32 to vector<8x128xf32>
      %20 = arith.addf %19, %18 : vector<8x128xf32>
      %21 = tpu.reciprocal %20 {approx = true} : vector<8x128xf32> -> vector<8x128xf32>
      %22 = vector.extract_strided_slice %10 {offsets = [0, 128], sizes = [8, 128], strides = [1, 1]} : vector<8x384xf32> to vector<8x128xf32>
      %23 = vector.extract_strided_slice %12 {offsets = [0, 128], sizes = [8, 128], strides = [1, 1]} : vector<8x384xf32> to vector<8x128xf32>
      %24 = arith.addf %22, %23 : vector<8x128xf32>
      %cst_13 = arith.constant 0.000000e+00 : f32
      %25 = vector.broadcast %cst_13 : f32 to vector<8x128xf32>
      %26 = arith.subf %25, %24 : vector<8x128xf32>
      %27 = math.exp %26 : vector<8x128xf32>
      %cst_14 = arith.constant 1.000000e+00 : f32
      %28 = vector.broadcast %cst_14 : f32 to vector<8x128xf32>
      %29 = arith.addf %28, %27 : vector<8x128xf32>
      %30 = tpu.reciprocal %29 {approx = true} : vector<8x128xf32> -> vector<8x128xf32>
      %31 = vector.extract_strided_slice %10 {offsets = [0, 256], sizes = [8, 128], strides = [1, 1]} : vector<8x384xf32> to vector<8x128xf32>
      %32 = vector.extract_strided_slice %12 {offsets = [0, 256], sizes = [8, 128], strides = [1, 1]} : vector<8x384xf32> to vector<8x128xf32>
      %33 = vector.broadcast %2 : vector<1x128xf32> to vector<8x128xf32>
      %34 = arith.addf %32, %33 : vector<8x128xf32>
      %35 = arith.mulf %21, %34 : vector<8x128xf32>
      %36 = arith.addf %31, %35 : vector<8x128xf32>
      %37 = math.tanh %36 : vector<8x128xf32>
      %cst_15 = arith.constant 1.000000e+00 : f32
      %38 = vector.broadcast %cst_15 : f32 to vector<8x128xf32>
      %39 = arith.subf %38, %30 : vector<8x128xf32>
      %40 = arith.mulf %39, %37 : vector<8x128xf32>
      %41 = arith.mulf %30, %arg8 : vector<8x128xf32>
      %42 = arith.addf %40, %41 : vector<8x128xf32>
      %43 = arith.index_cast %7 : i32 to index
      %c0_16 = arith.constant 0 : index
      %c0_17 = arith.constant 0 : index
      %44 = vector.load %arg1[%43, %c0_16, %c0_17] : memref<8x8x384xf32, #tpu.memory_space<vmem>>, vector<1x8x384xf32>
      %45 = vector.shape_cast %44 : vector<1x8x384xf32> to vector<8x384xf32>
      %46 = arith.truncf %arg9 : vector<8x128xf32> to vector<8x128xbf16>
      %cst_18 = arith.constant dense<0.000000e+00> : vector<8x384xf32>
      %47 = tpu.matmul %46, %1, %cst_18 {dimension_numbers = #tpu.dot_dimension_numbers<[1], [0], [0], [1], [0, 0, 1, 1], [], []>} : vector<8x128xbf16>, vector<128x384xbf16>, vector<8x384xf32> -> vector<8x384xf32>
      %48 = vector.extract_strided_slice %45 {offsets = [0, 0], sizes = [8, 128], strides = [1, 1]} : vector<8x384xf32> to vector<8x128xf32>
      %49 = vector.extract_strided_slice %47 {offsets = [0, 0], sizes = [8, 128], strides = [1, 1]} : vector<8x384xf32> to vector<8x128xf32>
      %50 = arith.addf %48, %49 : vector<8x128xf32>
      %cst_19 = arith.constant 0.000000e+00 : f32
      %51 = vector.broadcast %cst_19 : f32 to vector<8x128xf32>
      %52 = arith.subf %51, %50 : vector<8x128xf32>
      %53 = math.exp %52 : vector<8x128xf32>
      %cst_20 = arith.constant 1.000000e+00 : f32
      %54 = vector.broadcast %cst_20 : f32 to vector<8x128xf32>
      %55 = arith.addf %54, %53 : vector<8x128xf32>
      %56 = tpu.reciprocal %55 {approx = true} : vector<8x128xf32> -> vector<8x128xf32>
      %57 = vector.extract_strided_slice %45 {offsets = [0, 128], sizes = [8, 128], strides = [1, 1]} : vector<8x384xf32> to vector<8x128xf32>
      %58 = vector.extract_strided_slice %47 {offsets = [0, 128], sizes = [8, 128], strides = [1, 1]} : vector<8x384xf32> to vector<8x128xf32>
      %59 = arith.addf %57, %58 : vector<8x128xf32>
      %cst_21 = arith.constant 0.000000e+00 : f32
      %60 = vector.broadcast %cst_21 : f32 to vector<8x128xf32>
      %61 = arith.subf %60, %59 : vector<8x128xf32>
      %62 = math.exp %61 : vector<8x128xf32>
      %cst_22 = arith.constant 1.000000e+00 : f32
      %63 = vector.broadcast %cst_22 : f32 to vector<8x128xf32>
      %64 = arith.addf %63, %62 : vector<8x128xf32>
      %65 = tpu.reciprocal %64 {approx = true} : vector<8x128xf32> -> vector<8x128xf32>
      %66 = vector.extract_strided_slice %45 {offsets = [0, 256], sizes = [8, 128], strides = [1, 1]} : vector<8x384xf32> to vector<8x128xf32>
      %67 = vector.extract_strided_slice %47 {offsets = [0, 256], sizes = [8, 128], strides = [1, 1]} : vector<8x384xf32> to vector<8x128xf32>
      %68 = vector.broadcast %3 : vector<1x128xf32> to vector<8x128xf32>
      %69 = arith.addf %67, %68 : vector<8x128xf32>
      %70 = arith.mulf %56, %69 : vector<8x128xf32>
      %71 = arith.addf %66, %70 : vector<8x128xf32>
      %72 = math.tanh %71 : vector<8x128xf32>
      %cst_23 = arith.constant 1.000000e+00 : f32
      %73 = vector.broadcast %cst_23 : f32 to vector<8x128xf32>
      %74 = arith.subf %73, %65 : vector<8x128xf32>
      %75 = arith.mulf %74, %72 : vector<8x128xf32>
      %76 = arith.mulf %65, %arg9 : vector<8x128xf32>
      %77 = arith.addf %75, %76 : vector<8x128xf32>
      %78 = arith.index_cast %arg7 : i32 to index
      %c0_24 = arith.constant 0 : index
      %c0_25 = arith.constant 0 : index
      %79 = vector.load %arg6[%78, %c0_24, %c0_25] : memref<8x8x256xf32, #tpu.memory_space<vmem>>, vector<1x8x128xf32>
      %80 = vector.shape_cast %79 : vector<1x8x128xf32> to vector<8x128xf32>
      %81 = vector.shape_cast %42 : vector<8x128xf32> to vector<1x8x128xf32>
      tpu.vector_store %arg6[%78, %c0_24, %c0_25], %81 {strides = array<i32>} : memref<8x8x256xf32, #tpu.memory_space<vmem>>, vector<1x8x128xf32>,
      %82 = arith.index_cast %7 : i32 to index
      %c0_26 = arith.constant 0 : index
      %c128 = arith.constant 128 : index
      %83 = vector.load %arg6[%82, %c0_26, %c128] : memref<8x8x256xf32, #tpu.memory_space<vmem>>, vector<1x8x128xf32>
      %84 = vector.shape_cast %83 : vector<1x8x128xf32> to vector<8x128xf32>
      %85 = vector.shape_cast %77 : vector<8x128xf32> to vector<1x8x128xf32>
      tpu.vector_store %arg6[%82, %c0_26, %c128], %85 {strides = array<i32>} : memref<8x8x256xf32, #tpu.memory_space<vmem>>, vector<1x8x128xf32>,
      scf.yield %42, %77 : vector<8x128xf32>, vector<8x128xf32>
    }
    %c8_i32_7 = arith.constant 8 : i32
    return
  }
}

module attributes {stable_mosaic.version = 11 : i64} {
  func.func @_fc_kernel(%arg0: i32, %arg1: memref<256x256xbf16, #tpu.memory_space<vmem>>, %arg2: memref<64x256xbf16, #tpu.memory_space<vmem>>, %arg3: memref<64x1xf32, #tpu.memory_space<vmem>>, %arg4: memref<16x64xbf16, #tpu.memory_space<vmem>>, %arg5: memref<16x1xf32, #tpu.memory_space<vmem>>, %arg6: memref<8x16xbf16, #tpu.memory_space<vmem>>, %arg7: memref<8x1xf32, #tpu.memory_space<vmem>>, %arg8: memref<8x256xf32, #tpu.memory_space<vmem>>) attributes {dimension_semantics = [#tpu.dimension_semantics<parallel>], iteration_bounds = array<i64: 1>, scalar_prefetch = 0 : i64, scratch_operands = 0 : i64, tpu.core_type = #tpu.core_type<tc>, window_params = [{transform_indices = @transform_0, window_bounds = array<i64: 256, 256>}, {pipeline_mode = #tpu.pipeline_mode<synchronous>, transform_indices = @transform_1, window_bounds = array<i64: 64, 256>}, {pipeline_mode = #tpu.pipeline_mode<synchronous>, transform_indices = @transform_2, window_bounds = array<i64: 64, 1>}, {pipeline_mode = #tpu.pipeline_mode<synchronous>, transform_indices = @transform_3, window_bounds = array<i64: 16, 64>}, {pipeline_mode = #tpu.pipeline_mode<synchronous>, transform_indices = @transform_4, window_bounds = array<i64: 16, 1>}, {pipeline_mode = #tpu.pipeline_mode<synchronous>, transform_indices = @transform_5, window_bounds = array<i64: 8, 16>}, {pipeline_mode = #tpu.pipeline_mode<synchronous>, transform_indices = @transform_6, window_bounds = array<i64: 8, 1>}, {transform_indices = @transform_7, window_bounds = array<i64: 8, 256>}]} {
    %c0 = arith.constant 0 : index
    %c0_0 = arith.constant 0 : index
    %0 = vector.load %arg2[%c0, %c0_0] : memref<64x256xbf16, #tpu.memory_space<vmem>>, vector<64x256xbf16>
    %c0_1 = arith.constant 0 : index
    %c0_2 = arith.constant 0 : index
    %1 = vector.load %arg1[%c0_1, %c0_2] : memref<256x256xbf16, #tpu.memory_space<vmem>>, vector<256x256xbf16>
    %cst = arith.constant dense<0.000000e+00> : vector<64x256xf32>
    %2 = tpu.matmul %0, %1, %cst {dimension_numbers = #tpu.dot_dimension_numbers<[1], [0], [0], [1], [0, 0, 1, 1], [], []>} : vector<64x256xbf16>, vector<256x256xbf16>, vector<64x256xf32> -> vector<64x256xf32>
    %c0_3 = arith.constant 0 : index
    %c0_4 = arith.constant 0 : index
    %3 = vector.load %arg3[%c0_3, %c0_4] : memref<64x1xf32, #tpu.memory_space<vmem>>, vector<64x1xf32>
    %4 = vector.broadcast %3 : vector<64x1xf32> to vector<64x256xf32>
    %5 = arith.addf %2, %4 : vector<64x256xf32>
    %cst_5 = arith.constant 5.000000e-01 : f32
    %6 = vector.broadcast %cst_5 : f32 to vector<64x256xf32>
    %7 = arith.mulf %6, %5 : vector<64x256xf32>
    %cst_6 = arith.constant 4.471500e-02 : f32
    %8 = vector.broadcast %cst_6 : f32 to vector<64x256xf32>
    %9 = arith.mulf %8, %5 : vector<64x256xf32>
    %10 = arith.mulf %9, %5 : vector<64x256xf32>
    %11 = arith.mulf %10, %5 : vector<64x256xf32>
    %12 = arith.addf %5, %11 : vector<64x256xf32>
    %cst_7 = arith.constant 0.797884583 : f32
    %13 = vector.broadcast %cst_7 : f32 to vector<64x256xf32>
    %14 = arith.mulf %13, %12 : vector<64x256xf32>
    %15 = math.tanh %14 : vector<64x256xf32>
    %cst_8 = arith.constant 1.000000e+00 : f32
    %16 = vector.broadcast %cst_8 : f32 to vector<64x256xf32>
    %17 = arith.addf %16, %15 : vector<64x256xf32>
    %18 = arith.mulf %7, %17 : vector<64x256xf32>
    %c0_9 = arith.constant 0 : index
    %c0_10 = arith.constant 0 : index
    %19 = vector.load %arg4[%c0_9, %c0_10] : memref<16x64xbf16, #tpu.memory_space<vmem>>, vector<16x64xbf16>
    %20 = arith.truncf %18 : vector<64x256xf32> to vector<64x256xbf16>
    %cst_11 = arith.constant dense<0.000000e+00> : vector<16x256xf32>
    %21 = tpu.matmul %19, %20, %cst_11 {dimension_numbers = #tpu.dot_dimension_numbers<[1], [0], [0], [1], [0, 0, 1, 1], [], []>} : vector<16x64xbf16>, vector<64x256xbf16>, vector<16x256xf32> -> vector<16x256xf32>
    %c0_12 = arith.constant 0 : index
    %c0_13 = arith.constant 0 : index
    %22 = vector.load %arg5[%c0_12, %c0_13] : memref<16x1xf32, #tpu.memory_space<vmem>>, vector<16x1xf32>
    %23 = vector.broadcast %22 : vector<16x1xf32> to vector<16x256xf32>
    %24 = arith.addf %21, %23 : vector<16x256xf32>
    %cst_14 = arith.constant 5.000000e-01 : f32
    %25 = vector.broadcast %cst_14 : f32 to vector<16x256xf32>
    %26 = arith.mulf %25, %24 : vector<16x256xf32>
    %cst_15 = arith.constant 4.471500e-02 : f32
    %27 = vector.broadcast %cst_15 : f32 to vector<16x256xf32>
    %28 = arith.mulf %27, %24 : vector<16x256xf32>
    %29 = arith.mulf %28, %24 : vector<16x256xf32>
    %30 = arith.mulf %29, %24 : vector<16x256xf32>
    %31 = arith.addf %24, %30 : vector<16x256xf32>
    %cst_16 = arith.constant 0.797884583 : f32
    %32 = vector.broadcast %cst_16 : f32 to vector<16x256xf32>
    %33 = arith.mulf %32, %31 : vector<16x256xf32>
    %34 = math.tanh %33 : vector<16x256xf32>
    %cst_17 = arith.constant 1.000000e+00 : f32
    %35 = vector.broadcast %cst_17 : f32 to vector<16x256xf32>
    %36 = arith.addf %35, %34 : vector<16x256xf32>
    %37 = arith.mulf %26, %36 : vector<16x256xf32>
    %c0_18 = arith.constant 0 : index
    %c0_19 = arith.constant 0 : index
    %38 = vector.load %arg6[%c0_18, %c0_19] : memref<8x16xbf16, #tpu.memory_space<vmem>>, vector<8x16xbf16>
    %39 = arith.truncf %37 : vector<16x256xf32> to vector<16x256xbf16>
    %cst_20 = arith.constant dense<0.000000e+00> : vector<8x256xf32>
    %40 = tpu.matmul %38, %39, %cst_20 {dimension_numbers = #tpu.dot_dimension_numbers<[1], [0], [0], [1], [0, 0, 1, 1], [], []>} : vector<8x16xbf16>, vector<16x256xbf16>, vector<8x256xf32> -> vector<8x256xf32>
    %c0_21 = arith.constant 0 : index
    %c0_22 = arith.constant 0 : index
    %41 = vector.load %arg7[%c0_21, %c0_22] : memref<8x1xf32, #tpu.memory_space<vmem>>, vector<8x1xf32>
    %42 = vector.broadcast %41 : vector<8x1xf32> to vector<8x256xf32>
    %43 = arith.addf %40, %42 : vector<8x256xf32>
    %cst_23 = arith.constant 0.000000e+00 : f32
    %44 = vector.broadcast %cst_23 : f32 to vector<8x256xf32>
    %45 = arith.subf %44, %43 : vector<8x256xf32>
    %46 = math.exp %45 : vector<8x256xf32>
    %cst_24 = arith.constant 1.000000e+00 : f32
    %47 = vector.broadcast %cst_24 : f32 to vector<8x256xf32>
    %48 = arith.addf %47, %46 : vector<8x256xf32>
    %cst_25 = arith.constant 1.000000e+00 : f32
    %49 = vector.broadcast %cst_25 : f32 to vector<8x256xf32>
    %50 = arith.divf %49, %48 : vector<8x256xf32>
    %c0_26 = arith.constant 0 : index
    %c0_27 = arith.constant 0 : index
    %51 = vector.load %arg8[%c0_26, %c0_27] : memref<8x256xf32, #tpu.memory_space<vmem>>, vector<8x256xf32>
    tpu.vector_store %arg8[%c0_26, %c0_27], %50 {strides = array<i32>} : memref<8x256xf32, #tpu.memory_space<vmem>>, vector<8x256xf32>,
    return
  }
  func.func @transform_0(%arg0: i32) -> (i32, i32) {
    %c0_i32 = arith.constant 0 : i32
    %c0_i32_0 = arith.constant 0 : i32
    return %c0_i32, %arg0 : i32, i32
  }
  func.func @transform_1(%arg0: i32) -> (i32, i32) {
    %c0_i32 = arith.constant 0 : i32
    %c0_i32_0 = arith.constant 0 : i32
    %c0_i32_1 = arith.constant 0 : i32
    return %c0_i32, %c0_i32_0 : i32, i32
  }
  func.func @transform_2(%arg0: i32) -> (i32, i32) {
    %c0_i32 = arith.constant 0 : i32
    %c0_i32_0 = arith.constant 0 : i32
    %c0_i32_1 = arith.constant 0 : i32
    return %c0_i32, %c0_i32_0 : i32, i32
  }
  func.func @transform_3(%arg0: i32) -> (i32, i32) {
    %c0_i32 = arith.constant 0 : i32
    %c0_i32_0 = arith.constant 0 : i32
    %c0_i32_1 = arith.constant 0 : i32
    return %c0_i32, %c0_i32_0 : i32, i32
  }
  func.func @transform_4(%arg0: i32) -> (i32, i32) {
    %c0_i32 = arith.constant 0 : i32
    %c0_i32_0 = arith.constant 0 : i32
    %c0_i32_1 = arith.constant 0 : i32
    return %c0_i32, %c0_i32_0 : i32, i32
  }
  func.func @transform_5(%arg0: i32) -> (i32, i32) {
    %c0_i32 = arith.constant 0 : i32
    %c0_i32_0 = arith.constant 0 : i32
    %c0_i32_1 = arith.constant 0 : i32
    return %c0_i32, %c0_i32_0 : i32, i32
  }
  func.func @transform_6(%arg0: i32) -> (i32, i32) {
    %c0_i32 = arith.constant 0 : i32
    %c0_i32_0 = arith.constant 0 : i32
    %c0_i32_1 = arith.constant 0 : i32
    return %c0_i32, %c0_i32_0 : i32, i32
  }
  func.func @transform_7(%arg0: i32) -> (i32, i32) {
    %c0_i32 = arith.constant 0 : i32
    %c0_i32_0 = arith.constant 0 : i32
    return %c0_i32, %arg0 : i32, i32
  }
}

</mosaic_0001>

<llo_original>
// kernel: gru_fc_forward.6
$region0: #{gru_fc_forward.6}
  #allocation0 [shape = 'u32[]', space=smem, size = 0x4, offset = 0x4, fixed_abs, tag = 'smem constant byte address 0x4 - core index']
  #allocation1 [shape = 'u32[144,128]{1,0:T(1,128)}', space=vmem, size = 0x12000, scoped, tag = 'internal scratch']
  %s0 = inlined_call_operand.hbm [shape: f32[8,8,384], index: 0, kind: input, shape index: {}]
  %s1 = inlined_call_operand.hbm [shape: f32[8,8,384], index: 1, kind: input, shape index: {}]
  %s2 = inlined_call_operand.hbm [shape: bf16[128,384], index: 2, kind: input, shape index: {}]
  %s3 = inlined_call_operand.hbm [shape: bf16[128,384], index: 3, kind: input, shape index: {}]
  %s4 = inlined_call_operand.hbm [shape: f32[1,128], index: 4, kind: input, shape index: {}]
  %s5 = inlined_call_operand.hbm [shape: f32[1,128], index: 5, kind: input, shape index: {}]
  %s6 = inlined_call_operand.hbm [shape: f32[8,8,256], index: 6, kind: output, shape index: {}]
  %s7 = sld [smem:[#allocation0]]
  $region65: #{gru_fc_forward.6} parent=0
    _
  %s9 = ssub.s32 1, %s7
  %s10 = scalar_select 0, %s9, %s7
  $region1: #{gru_fc_forward.6} parent=0
    #allocation2 [shape = 'u8[98304]{0}', space=vmem, size = 0x18000, scoped, tag = 'input window, operand 0, single buffered']
    #allocation3 [shape = 's32[1]{0}', space=sflag, size = 0x4, scoped, tag = 'scoped memory for gru_fc_forward.6']
    #allocation4 [shape = 's32[1]{0}', space=sflag, size = 0x4, scoped, tag = 'scoped memory for gru_fc_forward.6']
    #allocation5 [shape = 'u8[98304]{0}', space=vmem, size = 0x18000, scoped, tag = 'input window, operand 1, single buffered']
    #allocation6 [shape = 's32[1]{0}', space=sflag, size = 0x4, scoped, tag = 'scoped memory for gru_fc_forward.6']
    #allocation7 [shape = 'u8[98304]{0}', space=vmem, size = 0x18000, scoped, tag = 'input window, operand 2, single buffered']
    #allocation8 [shape = 'u8[98304]{0}', space=vmem, size = 0x18000, scoped, tag = 'input window, operand 3, single buffered']
    #allocation9 [shape = 's32[1]{0}', space=sflag, size = 0x4, scoped, tag = 'scoped memory for gru_fc_forward.6']
    #allocation10 [shape = 'u8[512]{0}', space=vmem, size = 0x400, scoped, tag = 'input window, operand 4, single buffered']
    #allocation11 [shape = 'u8[512]{0}', space=vmem, size = 0x400, scoped, tag = 'input window, operand 5, single buffered']
    #allocation12 [shape = 's32[1]{0}', space=sflag, size = 0x4, scoped, tag = 'scoped memory for gru_fc_forward.6']
    #allocation13 [shape = 'u8[65536]{0}', space=vmem, size = 0x10000, scoped, tag = 'output window, operand 0, single buffered']
    %11 = vsyncpa [#allocation3], 0
    %12 = vsyncpa [#allocation6], 0
    %13 = vsyncpa [#allocation9], 0
    %14 = vsyncpa [#allocation12], 0
    %15 = vsyncpa [#allocation4], 0
    // Predicated region
    $region2: #{gru_fc_forward.6} parent=1 // pred_check
      _
    $region3: #{gru_fc_forward.6} parent=1 // pred_check_branch
      %17 = sbr.rel (0) target = $region5
    $region4: #{gru_fc_forward.6} parent=1 // pred_region
      %s19 = ssub.s32 3072, 3072
      %20 = vsyncadd [#allocation3], %s19
      %s21 = sshll.u32 [#allocation2], 4
      %s22 = int_to_ptr.vmem [resolvable:$true] %s21
      %27 = dma.hbm_to_vmem [thread:$0]  %s0, 3072, %s22, [#allocation3], 384, 384, 24
    $region5: #{gru_fc_forward.6} parent=1 // pred_fallthru
      _
    // Predicated region
    $region6: #{gru_fc_forward.6} parent=1 // pred_check
      _
    $region7: #{gru_fc_forward.6} parent=1 // pred_check_branch
      %29 = sbr.rel (0) target = $region9
    $region8: #{gru_fc_forward.6} parent=1 // pred_region
      %s31 = ssub.s32 3072, 3072
      %32 = vsyncadd [#allocation6], %s31
      %s33 = sshll.u32 [#allocation5], 4
      %s34 = int_to_ptr.vmem [resolvable:$true] %s33
      %39 = dma.hbm_to_vmem [thread:$0]  %s1, 3072, %s34, [#allocation6], 384, 384, 24
    $region9: #{gru_fc_forward.6} parent=1 // pred_fallthru
      _
    // Predicated region
    $region10: #{gru_fc_forward.6} parent=1 // pred_check
      _
    $region11: #{gru_fc_forward.6} parent=1 // pred_check_branch
      %41 = sbr.rel (0) target = $region13
    $region12: #{gru_fc_forward.6} parent=1 // pred_region
      %s43 = ssub.s32 3072, 3072
      %44 = vsyncadd [#allocation6], %s43
      %s45 = sshll.u32 [#allocation7], 4
      %s46 = int_to_ptr.vmem [resolvable:$true] %s45
      %51 = dma.hbm_to_vmem [thread:$0]  %s2, 3072, %s46, [#allocation6], 192, 192, 12
    $region13: #{gru_fc_forward.6} parent=1 // pred_fallthru
      _
    // Predicated region
    $region14: #{gru_fc_forward.6} parent=1 // pred_check
      _
    $region15: #{gru_fc_forward.6} parent=1 // pred_check_branch
      %53 = sbr.rel (0) target = $region17
    $region16: #{gru_fc_forward.6} parent=1 // pred_region
      %s55 = ssub.s32 3072, 3072
      %56 = vsyncadd [#allocation9], %s55
      %s57 = sshll.u32 [#allocation8], 4
      %s58 = int_to_ptr.vmem [resolvable:$true] %s57
      %63 = dma.hbm_to_vmem [thread:$0]  %s3, 3072, %s58, [#allocation9], 192, 192, 12
    $region17: #{gru_fc_forward.6} parent=1 // pred_fallthru
      _
    // Predicated region
    $region18: #{gru_fc_forward.6} parent=1 // pred_check
      _
    $region19: #{gru_fc_forward.6} parent=1 // pred_check_branch
      %65 = sbr.rel (0) target = $region21
    $region20: #{gru_fc_forward.6} parent=1 // pred_region
      %s67 = ssub.s32 16, 16
      %68 = vsyncadd [#allocation9], %s67
      %s70 = sshll.u32 [#allocation10], 4
      %s71 = int_to_ptr.vmem [resolvable:$true] %s70
      %73 = dma.hbm_to_vmem [thread:$0]  %s4, 16, %s71, [#allocation9]
    $region21: #{gru_fc_forward.6} parent=1 // pred_fallthru
      _
    // Predicated region
    $region22: #{gru_fc_forward.6} parent=1 // pred_check
      _
    $region23: #{gru_fc_forward.6} parent=1 // pred_check_branch
      %75 = sbr.rel (0) target = $region25
    $region24: #{gru_fc_forward.6} parent=1 // pred_region
      %s77 = ssub.s32 16, 16
      %78 = vsyncadd [#allocation12], %s77
      %s80 = sshll.u32 [#allocation11], 4
      %s81 = int_to_ptr.vmem [resolvable:$true] %s80
      %83 = dma.hbm_to_vmem [thread:$0]  %s5, 16, %s81, [#allocation12]
    $region25: #{gru_fc_forward.6} parent=1 // pred_fallthru
      _
    // Predicated region
    $region26: #{gru_fc_forward.6} parent=1 // pred_check
      _
    $region27: #{gru_fc_forward.6} parent=1 // pred_check_branch
      %85 = sbr.rel (0) target = $region29
    $region28: #{gru_fc_forward.6} parent=1 // pred_region
      %86 = dma.done [#allocation3], 3072
    $region29: #{gru_fc_forward.6} parent=1 // pred_fallthru
      _
    // Predicated region
    $region30: #{gru_fc_forward.6} parent=1 // pred_check
      _
    $region31: #{gru_fc_forward.6} parent=1 // pred_check_branch
      %88 = sbr.rel (0) target = $region33
    $region32: #{gru_fc_forward.6} parent=1 // pred_region
      %89 = dma.done [#allocation6], 3072
    $region33: #{gru_fc_forward.6} parent=1 // pred_fallthru
      _
    // Predicated region
    $region34: #{gru_fc_forward.6} parent=1 // pred_check
      _
    $region35: #{gru_fc_forward.6} parent=1 // pred_check_branch
      %91 = sbr.rel (0) target = $region37
    $region36: #{gru_fc_forward.6} parent=1 // pred_region
      %92 = dma.done [#allocation6], 3072
    $region37: #{gru_fc_forward.6} parent=1 // pred_fallthru
      _
    // Predicated region
    $region38: #{gru_fc_forward.6} parent=1 // pred_check
      _
    $region39: #{gru_fc_forward.6} parent=1 // pred_check_branch
      %94 = sbr.rel (0) target = $region41
    $region40: #{gru_fc_forward.6} parent=1 // pred_region
      %95 = dma.done [#allocation9], 3072
    $region41: #{gru_fc_forward.6} parent=1 // pred_fallthru
      _
    // Predicated region
    $region42: #{gru_fc_forward.6} parent=1 // pred_check
      _
    $region43: #{gru_fc_forward.6} parent=1 // pred_check_branch
      %97 = sbr.rel (0) target = $region45
    $region44: #{gru_fc_forward.6} parent=1 // pred_region
      %98 = dma.done [#allocation9], 16
    $region45: #{gru_fc_forward.6} parent=1 // pred_fallthru
      _
    // Predicated region
    $region46: #{gru_fc_forward.6} parent=1 // pred_check
      _
    $region47: #{gru_fc_forward.6} parent=1 // pred_check_branch
      %100 = sbr.rel (0) target = $region49
    $region48: #{gru_fc_forward.6} parent=1 // pred_region
      %101 = dma.done [#allocation12], 16
    $region49: #{gru_fc_forward.6} parent=1 // pred_fallthru
      _
    %v103 = vld [vmem:[#allocation7] sm:$0xff]
    %v104 = vld [vmem:[#allocation7 + $0x8] sm:$0xf]
    %v105 = vld [vmem:[#allocation7 + $0xc] sm:$0xff]
    %v106 = vld [vmem:[#allocation7 + $0x14] sm:$0xf]
    %v107 = vld [vmem:[#allocation7 + $0x18] sm:$0xff]
    %v108 = vld [vmem:[#allocation7 + $0x20] sm:$0xf]
    %v109 = vld [vmem:[#allocation7 + $0x24] sm:$0xff]
    %v110 = vld [vmem:[#allocation7 + $0x2c] sm:$0xf]
    %v111 = vld [vmem:[#allocation7 + $0x30] sm:$0xff]
    %v112 = vld [vmem:[#allocation7 + $0x38] sm:$0xf]
    %v113 = vld [vmem:[#allocation7 + $0x3c] sm:$0xff]
    %v114 = vld [vmem:[#allocation7 + $0x44] sm:$0xf]
    %v115 = vld [vmem:[#allocation7 + $0x48] sm:$0xff]
    %v116 = vld [vmem:[#allocation7 + $0x50] sm:$0xf]
    %v117 = vld [vmem:[#allocation7 + $0x54] sm:$0xff]
    %v118 = vld [vmem:[#allocation7 + $0x5c] sm:$0xf]
    %v119 = vld [vmem:[#allocation7 + $0x60] sm:$0xff]
    %v120 = vld [vmem:[#allocation7 + $0x68] sm:$0xf]
    %v121 = vld [vmem:[#allocation7 + $0x6c] sm:$0xff]
    %v122 = vld [vmem:[#allocation7 + $0x74] sm:$0xf]
    %v123 = vld [vmem:[#allocation7 + $0x78] sm:$0xff]
    %v124 = vld [vmem:[#allocation7 + $0x80] sm:$0xf]
    %v125 = vld [vmem:[#allocation7 + $0x84] sm:$0xff]
    %v126 = vld [vmem:[#allocation7 + $0x8c] sm:$0xf]
    %v127 = vld [vmem:[#allocation7 + $0x90] sm:$0xff]
    %v128 = vld [vmem:[#allocation7 + $0x98] sm:$0xf]
    %v129 = vld [vmem:[#allocation7 + $0x9c] sm:$0xff]
    %v130 = vld [vmem:[#allocation7 + $0xa4] sm:$0xf]
    %v131 = vld [vmem:[#allocation7 + $0xa8] sm:$0xff]
    %v132 = vld [vmem:[#allocation7 + $0xb0] sm:$0xf]
    %v133 = vld [vmem:[#allocation7 + $0xb4] sm:$0xff]
    %v134 = vld [vmem:[#allocation7 + $0xbc] sm:$0xf]
    %v135 = vld [vmem:[#allocation8] sm:$0xff]
    %v136 = vld [vmem:[#allocation8 + $0x8] sm:$0xf]
    %v137 = vld [vmem:[#allocation8 + $0xc] sm:$0xff]
    %v138 = vld [vmem:[#allocation8 + $0x14] sm:$0xf]
    %v139 = vld [vmem:[#allocation8 + $0x18] sm:$0xff]
    %v140 = vld [vmem:[#allocation8 + $0x20] sm:$0xf]
    %v141 = vld [vmem:[#allocation8 + $0x24] sm:$0xff]
    %v142 = vld [vmem:[#allocation8 + $0x2c] sm:$0xf]
    %v143 = vld [vmem:[#allocation8 + $0x30] sm:$0xff]
    %v144 = vld [vmem:[#allocation8 + $0x38] sm:$0xf]
    %v145 = vld [vmem:[#allocation8 + $0x3c] sm:$0xff]
    %v146 = vld [vmem:[#allocation8 + $0x44] sm:$0xf]
    %v147 = vld [vmem:[#allocation8 + $0x48] sm:$0xff]
    %v148 = vld [vmem:[#allocation8 + $0x50] sm:$0xf]
    %v149 = vld [vmem:[#allocation8 + $0x54] sm:$0xff]
    %v150 = vld [vmem:[#allocation8 + $0x5c] sm:$0xf]
    %v151 = vld [vmem:[#allocation8 + $0x60] sm:$0xff]
    %v152 = vld [vmem:[#allocation8 + $0x68] sm:$0xf]
    %v153 = vld [vmem:[#allocation8 + $0x6c] sm:$0xff]
    %v154 = vld [vmem:[#allocation8 + $0x74] sm:$0xf]
    %v155 = vld [vmem:[#allocation8 + $0x78] sm:$0xff]
    %v156 = vld [vmem:[#allocation8 + $0x80] sm:$0xf]
    %v157 = vld [vmem:[#allocation8 + $0x84] sm:$0xff]
    %v158 = vld [vmem:[#allocation8 + $0x8c] sm:$0xf]
    %v159 = vld [vmem:[#allocation8 + $0x90] sm:$0xff]
    %v160 = vld [vmem:[#allocation8 + $0x98] sm:$0xf]
    %v161 = vld [vmem:[#allocation8 + $0x9c] sm:$0xff]
    %v162 = vld [vmem:[#allocation8 + $0xa4] sm:$0xf]
    %v163 = vld [vmem:[#allocation8 + $0xa8] sm:$0xff]
    %v164 = vld [vmem:[#allocation8 + $0xb0] sm:$0xf]
    %v165 = vld [vmem:[#allocation8 + $0xb4] sm:$0xff]
    %v166 = vld [vmem:[#allocation8 + $0xbc] sm:$0xf]
    %v167 = vld [vmem:[#allocation10] sm:$0x1]
    %v168 = vld [vmem:[#allocation11] sm:$0x1]
    loop: start=0, step=1, limit=8
    $region50: #{gru_fc_forward.6} parent=1 // loop_pre_header
      _
    $region51: #{gru_fc_forward.6} parent=1 // loop_header
      %s170 = sphi 0, %s174
      %p171 = scmp.ge.s32.totalorder %s170, 8
      %v175 = vphi 0.0, %v419
      %v176 = vphi 0.0, %v661
    $region52: #{gru_fc_forward.6} parent=1 // loop_header_branch
      %173 = sbr.rel (%p171) target = $region56
    $region53: #{gru_fc_forward.6} parent=1 // loop_body
      %s177 = ssub.s32 7, %s170
      %s178 = smul.u32 %s170, 3
      %s179 = smul.addr %s178, 8
      %s180 = scalar_lea.vmem [#allocation2], %s179
      %v181 = vld [vmem:[%s180] sm:$0xff]
      %v182 = vld [vmem:[%s180 + $0x8] sm:$0xff]
      %v183 = vld [vmem:[%s180 + $0x10] sm:$0xff]
      %v184 = vpack.c.bf16 %v175, %v175
      %v217 = vunpack.c.l.b16 %v103
      %v218 = vunpack.c.h.b16 %v103
      %v219 = vunpack.c.l.b16 %v104
      %v220 = vunpack.c.l.b16 %v105
      %v221 = vunpack.c.h.b16 %v105
      %v222 = vunpack.c.l.b16 %v106
      %v223 = vunpack.c.l.b16 %v107
      %v224 = vunpack.c.h.b16 %v107
      %v225 = vunpack.c.l.b16 %v108
      %v226 = vunpack.c.l.b16 %v109
      %v227 = vunpack.c.h.b16 %v109
      %v228 = vunpack.c.l.b16 %v110
      %v229 = vunpack.c.l.b16 %v111
      %v230 = vunpack.c.h.b16 %v111
      %v231 = vunpack.c.l.b16 %v112
      %v232 = vunpack.c.l.b16 %v113
      %v233 = vunpack.c.h.b16 %v113
      %v234 = vunpack.c.l.b16 %v114
      %v235 = vunpack.c.l.b16 %v115
      %v236 = vunpack.c.h.b16 %v115
      %v237 = vunpack.c.l.b16 %v116
      %v238 = vunpack.c.l.b16 %v117
      %v239 = vunpack.c.h.b16 %v117
      %v240 = vunpack.c.l.b16 %v118
      %v241 = vunpack.c.l.b16 %v119
      %v242 = vunpack.c.h.b16 %v119
      %v243 = vunpack.c.l.b16 %v120
      %v244 = vunpack.c.l.b16 %v121
      %v245 = vunpack.c.h.b16 %v121
      %v246 = vunpack.c.l.b16 %v122
      %v247 = vunpack.c.l.b16 %v123
      %v248 = vunpack.c.h.b16 %v123
      %v249 = vunpack.c.l.b16 %v124
      %v250 = vunpack.c.l.b16 %v125
      %v251 = vunpack.c.h.b16 %v125
      %v252 = vunpack.c.l.b16 %v126
      %v253 = vunpack.c.l.b16 %v127
      %v254 = vunpack.c.h.b16 %v127
      %v255 = vunpack.c.l.b16 %v128
      %v256 = vunpack.c.l.b16 %v129
      %v257 = vunpack.c.h.b16 %v129
      %v258 = vunpack.c.l.b16 %v130
      %v259 = vunpack.c.l.b16 %v131
      %v260 = vunpack.c.h.b16 %v131
      %v261 = vunpack.c.l.b16 %v132
      %v262 = vunpack.c.l.b16 %v133
      %v263 = vunpack.c.h.b16 %v133
      %v264 = vunpack.c.l.b16 %v134
      %v265 = vpack.c.b16 %v220, %v217
      %v266 = vpack.c.b16 %v221, %v218
      %v267 = vpack.c.b16 %v222, %v219
      %v268 = vpack.c.b16 %v226, %v223
      %v269 = vpack.c.b16 %v227, %v224
      %v270 = vpack.c.b16 %v228, %v225
      %v271 = vpack.c.b16 %v232, %v229
      %v272 = vpack.c.b16 %v233, %v230
      %v273 = vpack.c.b16 %v234, %v231
      %v274 = vpack.c.b16 %v238, %v235
      %v275 = vpack.c.b16 %v239, %v236
      %v276 = vpack.c.b16 %v240, %v237
      %v277 = vpack.c.b16 %v244, %v241
      %v278 = vpack.c.b16 %v245, %v242
      %v279 = vpack.c.b16 %v246, %v243
      %v280 = vpack.c.b16 %v250, %v247
      %v281 = vpack.c.b16 %v251, %v248
      %v282 = vpack.c.b16 %v252, %v249
      %v283 = vpack.c.b16 %v256, %v253
      %v284 = vpack.c.b16 %v257, %v254
      %v285 = vpack.c.b16 %v258, %v255
      %v286 = vpack.c.b16 %v262, %v259
      %v287 = vpack.c.b16 %v263, %v260
      %v288 = vpack.c.b16 %v264, %v261
      %313 = vmatprep.subr.bf16.mxu0 %v266
      %314 = vmatpush1.bf16.msra.mxu0 %v265
      %315 = vmatprep.subr.bf16.mxu0 %v269
      %316 = vmatpush1.bf16.msra.mxu0 %v268
      %317 = vmatprep.subr.bf16.mxu0 %v272
      %318 = vmatpush1.bf16.msra.mxu0 %v271
      %319 = vmatprep.subr.bf16.mxu0 %v275
      %320 = vmatpush1.bf16.msra.mxu0 %v274
      %321 = vmatprep.subr.bf16.mxu0 %v278
      %322 = vmatpush1.bf16.msra.mxu0 %v277
      %323 = vmatprep.subr.bf16.mxu0 %v281
      %324 = vmatpush1.bf16.msra.mxu0 %v280
      %325 = vmatprep.subr.bf16.mxu0 %v284
      %326 = vmatpush1.bf16.msra.mxu0 %v283
      %327 = vmatprep.subr.bf16.mxu0 %v287
      %328 = vmatpush1.bf16.msra.mxu0 %v286
      %329 = vmatprep.subr.bf16.mxu0 0
      %330 = vmatpush1.bf16.msra.mxu0 0
      %331 = vmatprep.subr.bf16.mxu0 0
      %332 = vmatpush1.bf16.msra.mxu0 0
      %333 = vmatprep.subr.bf16.mxu0 0
      %334 = vmatpush1.bf16.msra.mxu0 0
      %335 = vmatprep.subr.bf16.mxu0 0
      %336 = vmatpush1.bf16.msra.mxu0 0
      %337 = vmatprep.subr.bf16.mxu0 0
      %338 = vmatpush1.bf16.msra.mxu0 0
      %339 = vmatprep.subr.bf16.mxu0 0
      %340 = vmatpush1.bf16.msra.mxu0 0
      %341 = vmatprep.subr.bf16.mxu0 0
      %342 = vmatpush1.bf16.msra.mxu0 0
      %343 = vmatprep.subr.bf16.mxu0 0
      %344 = vmatpush1.bf16.msra.mxu0 0
      %345 = vmatprep.mubr.bf16.mxu0 0
      %346 = vmatmul.mubr.bf16.gmra.mrb[0].mxu0 %v184
      %v347 = vpop.f32.mrb[0].mxu0
      %v348 = vadd.f32 0.0, %v347
      %v349 = vpop.f32.mrb[0].mxu0
      %v350 = vadd.f32 0.0, %v349
      %v351 = vpop.f32.mrb[0].mxu0
      %v352 = vpop.f32.mrb[0].mxu0
      %353 = vdwg.mxu0
      %354 = vmatprep.subr.bf16.mxu0 0
      %355 = vmatpush1.bf16.msra.mxu0 %v267
      %356 = vmatprep.subr.bf16.mxu0 0
      %357 = vmatpush1.bf16.msra.mxu0 %v270
      %358 = vmatprep.subr.bf16.mxu0 0
      %359 = vmatpush1.bf16.msra.mxu0 %v273
      %360 = vmatprep.subr.bf16.mxu0 0
      %361 = vmatpush1.bf16.msra.mxu0 %v276
      %362 = vmatprep.subr.bf16.mxu0 0
      %363 = vmatpush1.bf16.msra.mxu0 %v279
      %364 = vmatprep.subr.bf16.mxu0 0
      %365 = vmatpush1.bf16.msra.mxu0 %v282
      %366 = vmatprep.subr.bf16.mxu0 0
      %367 = vmatpush1.bf16.msra.mxu0 %v285
      %368 = vmatprep.subr.bf16.mxu0 0
      %369 = vmatpush1.bf16.msra.mxu0 %v288
      %370 = vmatprep.subr.bf16.mxu0 0
      %371 = vmatpush1.bf16.msra.mxu0 0
      %372 = vmatprep.subr.bf16.mxu0 0
      %373 = vmatpush1.bf16.msra.mxu0 0
      %374 = vmatprep.subr.bf16.mxu0 0
      %375 = vmatpush1.bf16.msra.mxu0 0
      %376 = vmatprep.subr.bf16.mxu0 0
      %377 = vmatpush1.bf16.msra.mxu0 0
      %378 = vmatprep.subr.bf16.mxu0 0
      %379 = vmatpush1.bf16.msra.mxu0 0
      %380 = vmatprep.subr.bf16.mxu0 0
      %381 = vmatpush1.bf16.msra.mxu0 0
      %382 = vmatprep.subr.bf16.mxu0 0
      %383 = vmatpush1.bf16.msra.mxu0 0
      %384 = vmatprep.subr.bf16.mxu0 0
      %385 = vmatpush1.bf16.msra.mxu0 0
      %386 = vmatprep.mubr.bf16.mxu0 0
      %387 = vmatmul.mubr.bf16.gmra.mrb[0].mxu0 %v184
      %v388 = vpop.f32.mrb[0].mxu0
      %v389 = vadd.f32 0.0, %v388
      %v390 = vpop.f32.mrb[0].mxu0
      %v391 = vpop.f32.mrb[0].mxu0
      %v392 = vpop.f32.mrb[0].mxu0
      %393 = vdwg.mxu0
      %v394 = vadd.f32 %v181, %v348
      %v395 = vsub.f32 0.0, %v394
      %v396 = vmul.f32 %v395, 1.442695
      %v397 = vpow.pop %v396
      %v398 = vadd.f32 %v397, 1.0
      %v399 = vrcp.pop %v398
      %v400 = vadd.f32 %v182, %v350
      %v401 = vsub.f32 0.0, %v400
      %v402 = vmul.f32 %v401, 1.442695
      %v403 = vpow.pop %v402
      %v404 = vadd.f32 %v403, 1.0
      %v405 = vrcp.pop %v404
      %v407 = vlaneseq
      %v408 = vshrl.u32 %v407, 7
      %v409 = vsub.s32 0, %v408
      %v410 = vrot.slane %v167, %v409
      %v412 = vadd.f32 %v389, %v410
      %v413 = vmul.f32 %v399, %v412
      %v414 = vadd.f32 %v183, %v413
      %v415 = vtanh.pop %v414
      %v416 = vsub.f32 1.0, %v405
      %v417 = vmul.f32 %v416, %v415
      %v418 = vmul.f32 %v405, %v175
      %v419 = vadd.f32 %v417, %v418
      %s420 = smul.u32 %s177, 3
      %s421 = smul.addr %s420, 8
      %s422 = scalar_lea.vmem [#allocation5], %s421
      %v423 = vld [vmem:[%s422] sm:$0xff]
      %v424 = vld [vmem:[%s422 + $0x8] sm:$0xff]
      %v425 = vld [vmem:[%s422 + $0x10] sm:$0xff]
      %v426 = vpack.c.bf16 %v176, %v176
      %v459 = vunpack.c.l.b16 %v135
      %v460 = vunpack.c.h.b16 %v135
      %v461 = vunpack.c.l.b16 %v136
      %v462 = vunpack.c.l.b16 %v137
      %v463 = vunpack.c.h.b16 %v137
      %v464 = vunpack.c.l.b16 %v138
      %v465 = vunpack.c.l.b16 %v139
      %v466 = vunpack.c.h.b16 %v139
      %v467 = vunpack.c.l.b16 %v140
      %v468 = vunpack.c.l.b16 %v141
      %v469 = vunpack.c.h.b16 %v141
      %v470 = vunpack.c.l.b16 %v142
      %v471 = vunpack.c.l.b16 %v143
      %v472 = vunpack.c.h.b16 %v143
      %v473 = vunpack.c.l.b16 %v144
      %v474 = vunpack.c.l.b16 %v145
      %v475 = vunpack.c.h.b16 %v145
      %v476 = vunpack.c.l.b16 %v146
      %v477 = vunpack.c.l.b16 %v147
      %v478 = vunpack.c.h.b16 %v147
      %v479 = vunpack.c.l.b16 %v148
      %v480 = vunpack.c.l.b16 %v149
      %v481 = vunpack.c.h.b16 %v149
      %v482 = vunpack.c.l.b16 %v150
      %v483 = vunpack.c.l.b16 %v151
      %v484 = vunpack.c.h.b16 %v151
      %v485 = vunpack.c.l.b16 %v152
      %v486 = vunpack.c.l.b16 %v153
      %v487 = vunpack.c.h.b16 %v153
      %v488 = vunpack.c.l.b16 %v154
      %v489 = vunpack.c.l.b16 %v155
      %v490 = vunpack.c.h.b16 %v155
      %v491 = vunpack.c.l.b16 %v156
      %v492 = vunpack.c.l.b16 %v157
      %v493 = vunpack.c.h.b16 %v157
      %v494 = vunpack.c.l.b16 %v158
      %v495 = vunpack.c.l.b16 %v159
      %v496 = vunpack.c.h.b16 %v159
      %v497 = vunpack.c.l.b16 %v160
      %v498 = vunpack.c.l.b16 %v161
      %v499 = vunpack.c.h.b16 %v161
      %v500 = vunpack.c.l.b16 %v162
      %v501 = vunpack.c.l.b16 %v163
      %v502 = vunpack.c.h.b16 %v163
      %v503 = vunpack.c.l.b16 %v164
      %v504 = vunpack.c.l.b16 %v165
      %v505 = vunpack.c.h.b16 %v165
      %v506 = vunpack.c.l.b16 %v166
      %v507 = vpack.c.b16 %v462, %v459
      %v508 = vpack.c.b16 %v463, %v460
      %v509 = vpack.c.b16 %v464, %v461
      %v510 = vpack.c.b16 %v468, %v465
      %v511 = vpack.c.b16 %v469, %v466
      %v512 = vpack.c.b16 %v470, %v467
      %v513 = vpack.c.b16 %v474, %v471
      %v514 = vpack.c.b16 %v475, %v472
      %v515 = vpack.c.b16 %v476, %v473
      %v516 = vpack.c.b16 %v480, %v477
      %v517 = vpack.c.b16 %v481, %v478
      %v518 = vpack.c.b16 %v482, %v479
      %v519 = vpack.c.b16 %v486, %v483
      %v520 = vpack.c.b16 %v487, %v484
      %v521 = vpack.c.b16 %v488, %v485
      %v522 = vpack.c.b16 %v492, %v489
      %v523 = vpack.c.b16 %v493, %v490
      %v524 = vpack.c.b16 %v494, %v491
      %v525 = vpack.c.b16 %v498, %v495
      %v526 = vpack.c.b16 %v499, %v496
      %v527 = vpack.c.b16 %v500, %v497
      %v528 = vpack.c.b16 %v504, %v501
      %v529 = vpack.c.b16 %v505, %v502
      %v530 = vpack.c.b16 %v506, %v503
      %555 = vmatprep.subr.bf16.mxu0 %v508
      %556 = vmatpush1.bf16.msra.mxu0 %v507
      %557 = vmatprep.subr.bf16.mxu0 %v511
      %558 = vmatpush1.bf16.msra.mxu0 %v510
      %559 = vmatprep.subr.bf16.mxu0 %v514
      %560 = vmatpush1.bf16.msra.mxu0 %v513
      %561 = vmatprep.subr.bf16.mxu0 %v517
      %562 = vmatpush1.bf16.msra.mxu0 %v516
      %563 = vmatprep.subr.bf16.mxu0 %v520
      %564 = vmatpush1.bf16.msra.mxu0 %v519
      %565 = vmatprep.subr.bf16.mxu0 %v523
      %566 = vmatpush1.bf16.msra.mxu0 %v522
      %567 = vmatprep.subr.bf16.mxu0 %v526
      %568 = vmatpush1.bf16.msra.mxu0 %v525
      %569 = vmatprep.subr.bf16.mxu0 %v529
      %570 = vmatpush1.bf16.msra.mxu0 %v528
      %571 = vmatprep.subr.bf16.mxu0 0
      %572 = vmatpush1.bf16.msra.mxu0 0
      %573 = vmatprep.subr.bf16.mxu0 0
      %574 = vmatpush1.bf16.msra.mxu0 0
      %575 = vmatprep.subr.bf16.mxu0 0
      %576 = vmatpush1.bf16.msra.mxu0 0
      %577 = vmatprep.subr.bf16.mxu0 0
      %578 = vmatpush1.bf16.msra.mxu0 0
      %579 = vmatprep.subr.bf16.mxu0 0
      %580 = vmatpush1.bf16.msra.mxu0 0
      %581 = vmatprep.subr.bf16.mxu0 0
      %582 = vmatpush1.bf16.msra.mxu0 0
      %583 = vmatprep.subr.bf16.mxu0 0
      %584 = vmatpush1.bf16.msra.mxu0 0
      %585 = vmatprep.subr.bf16.mxu0 0
      %586 = vmatpush1.bf16.msra.mxu0 0
      %587 = vmatprep.mubr.bf16.mxu0 0
      %588 = vmatmul.mubr.bf16.gmra.mrb[0].mxu0 %v426
      %v589 = vpop.f32.mrb[0].mxu0
      %v590 = vadd.f32 0.0, %v589
      %v591 = vpop.f32.mrb[0].mxu0
      %v592 = vadd.f32 0.0, %v591
      %v593 = vpop.f32.mrb[0].mxu0
      %v594 = vpop.f32.mrb[0].mxu0
      %595 = vdwg.mxu0
      %596 = vmatprep.subr.bf16.mxu0 0
      %597 = vmatpush1.bf16.msra.mxu0 %v509
      %598 = vmatprep.subr.bf16.mxu0 0
      %599 = vmatpush1.bf16.msra.mxu0 %v512
      %600 = vmatprep.subr.bf16.mxu0 0
      %601 = vmatpush1.bf16.msra.mxu0 %v515
      %602 = vmatprep.subr.bf16.mxu0 0
      %603 = vmatpush1.bf16.msra.mxu0 %v518
      %604 = vmatprep.subr.bf16.mxu0 0
      %605 = vmatpush1.bf16.msra.mxu0 %v521
      %606 = vmatprep.subr.bf16.mxu0 0
      %607 = vmatpush1.bf16.msra.mxu0 %v524
      %608 = vmatprep.subr.bf16.mxu0 0
      %609 = vmatpush1.bf16.msra.mxu0 %v527
      %610 = vmatprep.subr.bf16.mxu0 0
      %611 = vmatpush1.bf16.msra.mxu0 %v530
      %612 = vmatprep.subr.bf16.mxu0 0
      %613 = vmatpush1.bf16.msra.mxu0 0
      %614 = vmatprep.subr.bf16.mxu0 0
      %615 = vmatpush1.bf16.msra.mxu0 0
      %616 = vmatprep.subr.bf16.mxu0 0
      %617 = vmatpush1.bf16.msra.mxu0 0
      %618 = vmatprep.subr.bf16.mxu0 0
      %619 = vmatpush1.bf16.msra.mxu0 0
      %620 = vmatprep.subr.bf16.mxu0 0
      %621 = vmatpush1.bf16.msra.mxu0 0
      %622 = vmatprep.subr.bf16.mxu0 0
      %623 = vmatpush1.bf16.msra.mxu0 0
      %624 = vmatprep.subr.bf16.mxu0 0
      %625 = vmatpush1.bf16.msra.mxu0 0
      %626 = vmatprep.subr.bf16.mxu0 0
      %627 = vmatpush1.bf16.msra.mxu0 0
      %628 = vmatprep.mubr.bf16.mxu0 0
      %629 = vmatmul.mubr.bf16.gmra.mrb[0].mxu0 %v426
      %v630 = vpop.f32.mrb[0].mxu0
      %v631 = vadd.f32 0.0, %v630
      %v632 = vpop.f32.mrb[0].mxu0
      %v633 = vpop.f32.mrb[0].mxu0
      %v634 = vpop.f32.mrb[0].mxu0
      %635 = vdwg.mxu0
      %v636 = vadd.f32 %v423, %v590
      %v637 = vsub.f32 0.0, %v636
      %v638 = vmul.f32 %v637, 1.442695
      %v639 = vpow.pop %v638
      %v640 = vadd.f32 %v639, 1.0
      %v641 = vrcp.pop %v640
      %v642 = vadd.f32 %v424, %v592
      %v643 = vsub.f32 0.0, %v642
      %v644 = vmul.f32 %v643, 1.442695
      %v645 = vpow.pop %v644
      %v646 = vadd.f32 %v645, 1.0
      %v647 = vrcp.pop %v646
      %v649 = vlaneseq
      %v650 = vshrl.u32 %v649, 7
      %v651 = vsub.s32 0, %v650
      %v652 = vrot.slane %v168, %v651
      %v654 = vadd.f32 %v631, %v652
      %v655 = vmul.f32 %v641, %v654
      %v656 = vadd.f32 %v425, %v655
      %v657 = vtanh.pop %v656
      %v658 = vsub.f32 1.0, %v647
      %v659 = vmul.f32 %v658, %v657
      %v660 = vmul.f32 %v647, %v176
      %v661 = vadd.f32 %v659, %v660
      %s662 = smul.u32 %s170, 2
      %s663 = smul.addr %s662, 8
      %s664 = scalar_lea.vmem [#allocation13], %s663
      %665 = vst [vmem:[%s664] sm:$0xff] %v419
      %s666 = smul.u32 %s177, 2
      %s667 = smul.addr %s666, 8
      %s668 = scalar_lea.vmem [#allocation13], %s667
      %669 = vst [vmem:[%s668 + $0x8] sm:$0xff] %v661
    $region54: #{gru_fc_forward.6} parent=1 // loop_footer
      %s174 = sadd.s32 1, %s170
    $region55: #{gru_fc_forward.6} parent=1 // loop_footer_branch
      %169 = sbr.rel target = $region51
    $region56: #{gru_fc_forward.6} parent=1 // loop_exit
      _
    // Predicated region
    $region57: #{gru_fc_forward.6} parent=1 // pred_check
      _
    $region58: #{gru_fc_forward.6} parent=1 // pred_check_branch
      %671 = sbr.rel (0) target = $region60
    $region59: #{gru_fc_forward.6} parent=1 // pred_region
      %s673 = ssub.s32 2048, 2048
      %674 = vsyncadd [#allocation4], %s673
      %s675 = sshll.u32 [#allocation13], 4
      %s676 = int_to_ptr.vmem [resolvable:$true] %s675
      %681 = dma.vmem_to_hbm [thread:$0]  %s676, 2048, %s6, [#allocation4], 256, 256, 16
    $region60: #{gru_fc_forward.6} parent=1 // pred_fallthru
      _
    // Predicated region
    $region61: #{gru_fc_forward.6} parent=1 // pred_check
      _
    $region62: #{gru_fc_forward.6} parent=1 // pred_check_branch
      %683 = sbr.rel (0) target = $region64
    $region63: #{gru_fc_forward.6} parent=1 // pred_region
      %684 = dma.done [#allocation4], 2048
    $region64: #{gru_fc_forward.6} parent=1 // pred_fallthru
      _
    %685 = vsyncpa [#allocation3], 1
    %686 = vsyncpa [#allocation6], 1
    %687 = vsyncpa [#allocation9], 1
    %688 = vsyncpa [#allocation12], 1
    %689 = vsyncpa [#allocation4], 1

// kernel: gru_fc_forward.5
$region0: #{gru_fc_forward.5}
  #allocation0 [shape = 'u32[]', space=smem, size = 0x4, offset = 0x4, fixed_abs, tag = 'smem constant byte address 0x4 - core index']
  #allocation1 [shape = 'u32[144,128]{1,0:T(1,128)}', space=vmem, size = 0x12000, scoped, tag = 'internal scratch']
  %s0 = inlined_call_operand.vmem [shape: bf16[256,16], index: 0, kind: input, shape index: {}]
  %s1 = inlined_call_operand.vmem [shape: bf16[16,768], index: 1, kind: input, shape index: {}]
  %s2 = inlined_call_operand.vmem [shape: f32[1,768], index: 2, kind: input, shape index: {}]
  %s3 = inlined_call_operand.vmem [shape: f32[256,384], index: 3, kind: output, shape index: {0}]
  %s4 = inlined_call_operand.vmem [shape: f32[256,384], index: 4, kind: output, shape index: {1}]
  %5 = xla_tuple %s3, %s4
  %s6 = sld [smem:[#allocation0]]
  $region30: #{gru_fc_forward.5} parent=0
    _
  %s8 = ssub.s32 1, %s6
  %s9 = scalar_select 0, %s8, %s6
  // Predicated region
  $region2: #{gru_fc_forward.5} parent=0 // pred_check
    _
  $region3: #{gru_fc_forward.5} parent=0 // pred_check_branch
    %11 = sbr.rel (0) target = $region5
  $region4: #{gru_fc_forward.5} parent=0 // pred_region
    _
  $region5: #{gru_fc_forward.5} parent=0 // pred_fallthru
    _
  // Predicated region
  $region6: #{gru_fc_forward.5} parent=0 // pred_check
    _
  $region7: #{gru_fc_forward.5} parent=0 // pred_check_branch
    %13 = sbr.rel (0) target = $region9
  $region8: #{gru_fc_forward.5} parent=0 // pred_region
    _
  $region9: #{gru_fc_forward.5} parent=0 // pred_fallthru
    _
  // Predicated region
  $region10: #{gru_fc_forward.5} parent=0 // pred_check
    _
  $region11: #{gru_fc_forward.5} parent=0 // pred_check_branch
    %15 = sbr.rel (0) target = $region13
  $region12: #{gru_fc_forward.5} parent=0 // pred_region
    _
  $region13: #{gru_fc_forward.5} parent=0 // pred_fallthru
    _
  %v17 = vld [vmem:[%s0] sm:$0xf]
  %v18 = vld [vmem:[%s0 + $0x4] sm:$0xf]
  %v19 = vld [vmem:[%s0 + $0x8] sm:$0xf]
  %v20 = vld [vmem:[%s0 + $0xc] sm:$0xf]
  %v21 = vld [vmem:[%s0 + $0x10] sm:$0xf]
  %v22 = vld [vmem:[%s0 + $0x14] sm:$0xf]
  %v23 = vld [vmem:[%s0 + $0x18] sm:$0xf]
  %v24 = vld [vmem:[%s0 + $0x1c] sm:$0xf]
  %v25 = vld [vmem:[%s0 + $0x20] sm:$0xf]
  %v26 = vld [vmem:[%s0 + $0x24] sm:$0xf]
  %v27 = vld [vmem:[%s0 + $0x28] sm:$0xf]
  %v28 = vld [vmem:[%s0 + $0x2c] sm:$0xf]
  %v29 = vld [vmem:[%s0 + $0x30] sm:$0xf]
  %v30 = vld [vmem:[%s0 + $0x34] sm:$0xf]
  %v31 = vld [vmem:[%s0 + $0x38] sm:$0xf]
  %v32 = vld [vmem:[%s0 + $0x3c] sm:$0xf]
  %v33 = vld [vmem:[%s0 + $0x40] sm:$0xf]
  %v34 = vld [vmem:[%s0 + $0x44] sm:$0xf]
  %v35 = vld [vmem:[%s0 + $0x48] sm:$0xf]
  %v36 = vld [vmem:[%s0 + $0x4c] sm:$0xf]
  %v37 = vld [vmem:[%s0 + $0x50] sm:$0xf]
  %v38 = vld [vmem:[%s0 + $0x54] sm:$0xf]
  %v39 = vld [vmem:[%s0 + $0x58] sm:$0xf]
  %v40 = vld [vmem:[%s0 + $0x5c] sm:$0xf]
  %v41 = vld [vmem:[%s0 + $0x60] sm:$0xf]
  %v42 = vld [vmem:[%s0 + $0x64] sm:$0xf]
  %v43 = vld [vmem:[%s0 + $0x68] sm:$0xf]
  %v44 = vld [vmem:[%s0 + $0x6c] sm:$0xf]
  %v45 = vld [vmem:[%s0 + $0x70] sm:$0xf]
  %v46 = vld [vmem:[%s0 + $0x74] sm:$0xf]
  %v47 = vld [vmem:[%s0 + $0x78] sm:$0xf]
  %v48 = vld [vmem:[%s0 + $0x7c] sm:$0xf]
  %v49 = vld [vmem:[%s1] sm:$0xff]
  %v50 = vld [vmem:[%s1 + $0x8] sm:$0xff]
  %v51 = vld [vmem:[%s1 + $0x10] sm:$0xff]
  %v52 = vld [vmem:[%s1 + $0x18] sm:$0xff]
  %v53 = vld [vmem:[%s1 + $0x20] sm:$0xff]
  %v54 = vld [vmem:[%s1 + $0x28] sm:$0xff]
  %v55 = vld [vmem:[%s2] sm:$0x3f]
  %v57 = vlaneseq
  %v58 = vshrl.u32 %v57, 7
  %v59 = vsub.s32 0, %v58
  %v60 = vrot.slane %v55, %v59
  %v61 = vlaneseq
  %v62 = vshrl.u32 %v61, 7
  %v63 = vsub.s32 1, %v62
  %v64 = vrot.slane %v55, %v63
  %v65 = vlaneseq
  %v66 = vshrl.u32 %v65, 7
  %v67 = vsub.s32 2, %v66
  %v68 = vrot.slane %v55, %v67
  %v69 = vlaneseq
  %v70 = vshrl.u32 %v69, 7
  %v71 = vsub.s32 3, %v70
  %v72 = vrot.slane %v55, %v71
  %v73 = vlaneseq
  %v74 = vshrl.u32 %v73, 7
  %v75 = vsub.s32 4, %v74
  %v76 = vrot.slane %v55, %v75
  %v77 = vlaneseq
  %v78 = vshrl.u32 %v77, 7
  %v79 = vsub.s32 5, %v78
  %v80 = vrot.slane %v55, %v79
  %v119 = vunpack.c.l.b16 %v17
  %v120 = vunpack.c.l.b16 %v18
  %v121 = vunpack.c.l.b16 %v19
  %v122 = vunpack.c.l.b16 %v20
  %v123 = vunpack.c.l.b16 %v21
  %v124 = vunpack.c.l.b16 %v22
  %v125 = vunpack.c.l.b16 %v23
  %v126 = vunpack.c.l.b16 %v24
  %v127 = vunpack.c.l.b16 %v25
  %v128 = vunpack.c.l.b16 %v26
  %v129 = vunpack.c.l.b16 %v27
  %v130 = vunpack.c.l.b16 %v28
  %v131 = vunpack.c.l.b16 %v29
  %v132 = vunpack.c.l.b16 %v30
  %v133 = vunpack.c.l.b16 %v31
  %v134 = vunpack.c.l.b16 %v32
  %v135 = vunpack.c.l.b16 %v33
  %v136 = vunpack.c.l.b16 %v34
  %v137 = vunpack.c.l.b16 %v35
  %v138 = vunpack.c.l.b16 %v36
  %v139 = vunpack.c.l.b16 %v37
  %v140 = vunpack.c.l.b16 %v38
  %v141 = vunpack.c.l.b16 %v39
  %v142 = vunpack.c.l.b16 %v40
  %v143 = vunpack.c.l.b16 %v41
  %v144 = vunpack.c.l.b16 %v42
  %v145 = vunpack.c.l.b16 %v43
  %v146 = vunpack.c.l.b16 %v44
  %v147 = vunpack.c.l.b16 %v45
  %v148 = vunpack.c.l.b16 %v46
  %v149 = vunpack.c.l.b16 %v47
  %v150 = vunpack.c.l.b16 %v48
  %v151 = vpack.c.b16 %v120, %v119
  %v152 = vpack.c.b16 %v122, %v121
  %v153 = vpack.c.b16 %v124, %v123
  %v154 = vpack.c.b16 %v126, %v125
  %v155 = vpack.c.b16 %v128, %v127
  %v156 = vpack.c.b16 %v130, %v129
  %v157 = vpack.c.b16 %v132, %v131
  %v158 = vpack.c.b16 %v134, %v133
  %v159 = vpack.c.b16 %v136, %v135
  %v160 = vpack.c.b16 %v138, %v137
  %v161 = vpack.c.b16 %v140, %v139
  %v162 = vpack.c.b16 %v142, %v141
  %v163 = vpack.c.b16 %v144, %v143
  %v164 = vpack.c.b16 %v146, %v145
  %v165 = vpack.c.b16 %v148, %v147
  %v166 = vpack.c.b16 %v150, %v149
  %v173 = vunpack.c.l.b16 %v49
  %v174 = vunpack.c.h.b16 %v49
  %v175 = vunpack.c.l.b16 %v50
  %v176 = vunpack.c.h.b16 %v50
  %v177 = vunpack.c.l.b16 %v51
  %v178 = vunpack.c.h.b16 %v51
  %v179 = vunpack.c.l.b16 %v52
  %v180 = vunpack.c.h.b16 %v52
  %v181 = vunpack.c.l.b16 %v53
  %v182 = vunpack.c.h.b16 %v53
  %v183 = vunpack.c.l.b16 %v54
  %v184 = vunpack.c.h.b16 %v54
  %v185 = vpack.c.b16 %v179, %v173
  %v186 = vpack.c.b16 %v180, %v174
  %v187 = vpack.c.b16 %v181, %v175
  %v188 = vpack.c.b16 %v182, %v176
  %v189 = vpack.c.b16 %v183, %v177
  %v190 = vpack.c.b16 %v184, %v178
  %vm197 = vcmask 130048
  %v199 = vsel %vm197, %v151, 0
  %v202 = vsel %vm197, %v152, 0
  %v205 = vsel %vm197, %v153, 0
  %v208 = vsel %vm197, %v154, 0
  %v211 = vsel %vm197, %v155, 0
  %v214 = vsel %vm197, %v156, 0
  %v217 = vsel %vm197, %v157, 0
  %v220 = vsel %vm197, %v158, 0
  %v223 = vsel %vm197, %v159, 0
  %v226 = vsel %vm197, %v160, 0
  %v229 = vsel %vm197, %v161, 0
  %v232 = vsel %vm197, %v162, 0
  %v235 = vsel %vm197, %v163, 0
  %v238 = vsel %vm197, %v164, 0
  %v241 = vsel %vm197, %v165, 0
  %v244 = vsel %vm197, %v166, 0
  %246 = vmatprep.subr.bf16.mxu0 %v186
  %247 = vmatpush1.bf16.msra.mxu0 %v185
  %248 = vmatprep.subr.bf16.mxu0 0
  %249 = vmatpush1.bf16.msra.mxu0 0
  %250 = vmatprep.subr.bf16.mxu0 0
  %251 = vmatpush1.bf16.msra.mxu0 0
  %252 = vmatprep.subr.bf16.mxu0 0
  %253 = vmatpush1.bf16.msra.mxu0 0
  %254 = vmatprep.subr.bf16.mxu0 0
  %255 = vmatpush1.bf16.msra.mxu0 0
  %256 = vmatprep.subr.bf16.mxu0 0
  %257 = vmatpush1.bf16.msra.mxu0 0
  %258 = vmatprep.subr.bf16.mxu0 0
  %259 = vmatpush1.bf16.msra.mxu0 0
  %260 = vmatprep.subr.bf16.mxu0 0
  %261 = vmatpush1.bf16.msra.mxu0 0
  %262 = vmatprep.subr.bf16.mxu0 0
  %263 = vmatpush1.bf16.msra.mxu0 0
  %264 = vmatprep.subr.bf16.mxu0 0
  %265 = vmatpush1.bf16.msra.mxu0 0
  %266 = vmatprep.subr.bf16.mxu0 0
  %267 = vmatpush1.bf16.msra.mxu0 0
  %268 = vmatprep.subr.bf16.mxu0 0
  %269 = vmatpush1.bf16.msra.mxu0 0
  %270 = vmatprep.subr.bf16.mxu0 0
  %271 = vmatpush1.bf16.msra.mxu0 0
  %272 = vmatprep.subr.bf16.mxu0 0
  %273 = vmatpush1.bf16.msra.mxu0 0
  %274 = vmatprep.subr.bf16.mxu0 0
  %275 = vmatpush1.bf16.msra.mxu0 0
  %276 = vmatprep.subr.bf16.mxu0 0
  %277 = vmatpush1.bf16.msra.mxu0 0
  %278 = vmatprep.mubr.bf16.mxu0 0
  %279 = vmatmul.mubr.bf16.gmra.mrb[0].mxu0 %v199
  %v280 = vpop.f32.mrb[0].mxu0
  %v281 = vadd.f32 %v60, %v280
  %v282 = vpop.f32.mrb[0].mxu0
  %v283 = vadd.f32 %v64, %v282
  %v284 = vpop.f32.mrb[0].mxu0
  %v285 = vadd.f32 %v60, %v284
  %v286 = vpop.f32.mrb[0].mxu0
  %v287 = vadd.f32 %v64, %v286
  %288 = vmatprep.mubr.bf16.mxu0 0
  %289 = vmatmul.mubr.bf16.gmra.mrb[0].mxu0 %v202
  %v290 = vpop.f32.mrb[0].mxu0
  %v291 = vadd.f32 %v60, %v290
  %v292 = vpop.f32.mrb[0].mxu0
  %v293 = vadd.f32 %v64, %v292
  %v294 = vpop.f32.mrb[0].mxu0
  %v295 = vadd.f32 %v60, %v294
  %v296 = vpop.f32.mrb[0].mxu0
  %v297 = vadd.f32 %v64, %v296
  %298 = vmatprep.mubr.bf16.mxu0 0
  %299 = vmatmul.mubr.bf16.gmra.mrb[0].mxu0 %v205
  %v300 = vpop.f32.mrb[0].mxu0
  %v301 = vadd.f32 %v60, %v300
  %v302 = vpop.f32.mrb[0].mxu0
  %v303 = vadd.f32 %v64, %v302
  %v304 = vpop.f32.mrb[0].mxu0
  %v305 = vadd.f32 %v60, %v304
  %v306 = vpop.f32.mrb[0].mxu0
  %v307 = vadd.f32 %v64, %v306
  %308 = vmatprep.mubr.bf16.mxu0 0
  %309 = vmatmul.mubr.bf16.gmra.mrb[0].mxu0 %v208
  %v310 = vpop.f32.mrb[0].mxu0
  %v311 = vadd.f32 %v60, %v310
  %v312 = vpop.f32.mrb[0].mxu0
  %v313 = vadd.f32 %v64, %v312
  %v314 = vpop.f32.mrb[0].mxu0
  %v315 = vadd.f32 %v60, %v314
  %v316 = vpop.f32.mrb[0].mxu0
  %v317 = vadd.f32 %v64, %v316
  %318 = vmatprep.mubr.bf16.mxu0 0
  %319 = vmatmul.mubr.bf16.gmra.mrb[0].mxu0 %v211
  %v320 = vpop.f32.mrb[0].mxu0
  %v321 = vadd.f32 %v60, %v320
  %v322 = vpop.f32.mrb[0].mxu0
  %v323 = vadd.f32 %v64, %v322
  %v324 = vpop.f32.mrb[0].mxu0
  %v325 = vadd.f32 %v60, %v324
  %v326 = vpop.f32.mrb[0].mxu0
  %v327 = vadd.f32 %v64, %v326
  %328 = vmatprep.mubr.bf16.mxu0 0
  %329 = vmatmul.mubr.bf16.gmra.mrb[0].mxu0 %v214
  %v330 = vpop.f32.mrb[0].mxu0
  %v331 = vadd.f32 %v60, %v330
  %v332 = vpop.f32.mrb[0].mxu0
  %v333 = vadd.f32 %v64, %v332
  %v334 = vpop.f32.mrb[0].mxu0
  %v335 = vadd.f32 %v60, %v334
  %v336 = vpop.f32.mrb[0].mxu0
  %v337 = vadd.f32 %v64, %v336
  %338 = vmatprep.mubr.bf16.mxu0 0
  %339 = vmatmul.mubr.bf16.gmra.mrb[0].mxu0 %v217
  %v340 = vpop.f32.mrb[0].mxu0
  %v341 = vadd.f32 %v60, %v340
  %v342 = vpop.f32.mrb[0].mxu0
  %v343 = vadd.f32 %v64, %v342
  %v344 = vpop.f32.mrb[0].mxu0
  %v345 = vadd.f32 %v60, %v344
  %v346 = vpop.f32.mrb[0].mxu0
  %v347 = vadd.f32 %v64, %v346
  %348 = vmatprep.mubr.bf16.mxu0 0
  %349 = vmatmul.mubr.bf16.gmra.mrb[0].mxu0 %v220
  %v350 = vpop.f32.mrb[0].mxu0
  %v351 = vadd.f32 %v60, %v350
  %v352 = vpop.f32.mrb[0].mxu0
  %v353 = vadd.f32 %v64, %v352
  %v354 = vpop.f32.mrb[0].mxu0
  %v355 = vadd.f32 %v60, %v354
  %v356 = vpop.f32.mrb[0].mxu0
  %v357 = vadd.f32 %v64, %v356
  %358 = vmatprep.mubr.bf16.mxu0 0
  %359 = vmatmul.mubr.bf16.gmra.mrb[0].mxu0 %v223
  %v360 = vpop.f32.mrb[0].mxu0
  %v361 = vadd.f32 %v60, %v360
  %v362 = vpop.f32.mrb[0].mxu0
  %v363 = vadd.f32 %v64, %v362
  %v364 = vpop.f32.mrb[0].mxu0
  %v365 = vadd.f32 %v60, %v364
  %v366 = vpop.f32.mrb[0].mxu0
  %v367 = vadd.f32 %v64, %v366
  %368 = vmatprep.mubr.bf16.mxu0 0
  %369 = vmatmul.mubr.bf16.gmra.mrb[0].mxu0 %v226
  %v370 = vpop.f32.mrb[0].mxu0
  %v371 = vadd.f32 %v60, %v370
  %v372 = vpop.f32.mrb[0].mxu0
  %v373 = vadd.f32 %v64, %v372
  %v374 = vpop.f32.mrb[0].mxu0
  %v375 = vadd.f32 %v60, %v374
  %v376 = vpop.f32.mrb[0].mxu0
  %v377 = vadd.f32 %v64, %v376
  %378 = vmatprep.mubr.bf16.mxu0 0
  %379 = vmatmul.mubr.bf16.gmra.mrb[0].mxu0 %v229
  %v380 = vpop.f32.mrb[0].mxu0
  %v381 = vadd.f32 %v60, %v380
  %v382 = vpop.f32.mrb[0].mxu0
  %v383 = vadd.f32 %v64, %v382
  %v384 = vpop.f32.mrb[0].mxu0
  %v385 = vadd.f32 %v60, %v384
  %v386 = vpop.f32.mrb[0].mxu0
  %v387 = vadd.f32 %v64, %v386
  %388 = vmatprep.mubr.bf16.mxu0 0
  %389 = vmatmul.mubr.bf16.gmra.mrb[0].mxu0 %v232
  %v390 = vpop.f32.mrb[0].mxu0
  %v391 = vadd.f32 %v60, %v390
  %v392 = vpop.f32.mrb[0].mxu0
  %v393 = vadd.f32 %v64, %v392
  %v394 = vpop.f32.mrb[0].mxu0
  %v395 = vadd.f32 %v60, %v394
  %v396 = vpop.f32.mrb[0].mxu0
  %v397 = vadd.f32 %v64, %v396
  %398 = vmatprep.mubr.bf16.mxu0 0
  %399 = vmatmul.mubr.bf16.gmra.mrb[0].mxu0 %v235
  %v400 = vpop.f32.mrb[0].mxu0
  %v401 = vadd.f32 %v60, %v400
  %v402 = vpop.f32.mrb[0].mxu0
  %v403 = vadd.f32 %v64, %v402
  %v404 = vpop.f32.mrb[0].mxu0
  %v405 = vadd.f32 %v60, %v404
  %v406 = vpop.f32.mrb[0].mxu0
  %v407 = vadd.f32 %v64, %v406
  %408 = vmatprep.mubr.bf16.mxu0 0
  %409 = vmatmul.mubr.bf16.gmra.mrb[0].mxu0 %v238
  %v410 = vpop.f32.mrb[0].mxu0
  %v411 = vadd.f32 %v60, %v410
  %v412 = vpop.f32.mrb[0].mxu0
  %v413 = vadd.f32 %v64, %v412
  %v414 = vpop.f32.mrb[0].mxu0
  %v415 = vadd.f32 %v60, %v414
  %v416 = vpop.f32.mrb[0].mxu0
  %v417 = vadd.f32 %v64, %v416
  %418 = vmatprep.mubr.bf16.mxu0 0
  %419 = vmatmul.mubr.bf16.gmra.mrb[0].mxu0 %v241
  %v420 = vpop.f32.mrb[0].mxu0
  %v421 = vadd.f32 %v60, %v420
  %v422 = vpop.f32.mrb[0].mxu0
  %v423 = vadd.f32 %v64, %v422
  %v424 = vpop.f32.mrb[0].mxu0
  %v425 = vadd.f32 %v60, %v424
  %v426 = vpop.f32.mrb[0].mxu0
  %v427 = vadd.f32 %v64, %v426
  %428 = vmatprep.mubr.bf16.mxu0 0
  %429 = vmatmul.mubr.bf16.gmra.mrb[0].mxu0 %v244
  %v430 = vpop.f32.mrb[0].mxu0
  %v431 = vadd.f32 %v60, %v430
  %v432 = vpop.f32.mrb[0].mxu0
  %v433 = vadd.f32 %v64, %v432
  %v434 = vpop.f32.mrb[0].mxu0
  %v435 = vadd.f32 %v60, %v434
  %v436 = vpop.f32.mrb[0].mxu0
  %v437 = vadd.f32 %v64, %v436
  %438 = vdwg.mxu0
  %439 = vmatprep.subr.bf16.mxu0 %v188
  %440 = vmatpush1.bf16.msra.mxu0 %v187
  %441 = vmatprep.subr.bf16.mxu0 0
  %442 = vmatpush1.bf16.msra.mxu0 0
  %443 = vmatprep.subr.bf16.mxu0 0
  %444 = vmatpush1.bf16.msra.mxu0 0
  %445 = vmatprep.subr.bf16.mxu0 0
  %446 = vmatpush1.bf16.msra.mxu0 0
  %447 = vmatprep.subr.bf16.mxu0 0
  %448 = vmatpush1.bf16.msra.mxu0 0
  %449 = vmatprep.subr.bf16.mxu0 0
  %450 = vmatpush1.bf16.msra.mxu0 0
  %451 = vmatprep.subr.bf16.mxu0 0
  %452 = vmatpush1.bf16.msra.mxu0 0
  %453 = vmatprep.subr.bf16.mxu0 0
  %454 = vmatpush1.bf16.msra.mxu0 0
  %455 = vmatprep.subr.bf16.mxu0 0
  %456 = vmatpush1.bf16.msra.mxu0 0
  %457 = vmatprep.subr.bf16.mxu0 0
  %458 = vmatpush1.bf16.msra.mxu0 0
  %459 = vmatprep.subr.bf16.mxu0 0
  %460 = vmatpush1.bf16.msra.mxu0 0
  %461 = vmatprep.subr.bf16.mxu0 0
  %462 = vmatpush1.bf16.msra.mxu0 0
  %463 = vmatprep.subr.bf16.mxu0 0
  %464 = vmatpush1.bf16.msra.mxu0 0
  %465 = vmatprep.subr.bf16.mxu0 0
  %466 = vmatpush1.bf16.msra.mxu0 0
  %467 = vmatprep.subr.bf16.mxu0 0
  %468 = vmatpush1.bf16.msra.mxu0 0
  %469 = vmatprep.subr.bf16.mxu0 0
  %470 = vmatpush1.bf16.msra.mxu0 0
  %471 = vmatprep.mubr.bf16.mxu0 0
  %472 = vmatmul.mubr.bf16.gmra.mrb[0].mxu0 %v199
  %v473 = vpop.f32.mrb[0].mxu0
  %v474 = vadd.f32 %v68, %v473
  %v475 = vpop.f32.mrb[0].mxu0
  %v476 = vadd.f32 %v72, %v475
  %v477 = vpop.f32.mrb[0].mxu0
  %v478 = vadd.f32 %v68, %v477
  %v479 = vpop.f32.mrb[0].mxu0
  %v480 = vadd.f32 %v72, %v479
  %481 = vmatprep.mubr.bf16.mxu0 0
  %482 = vmatmul.mubr.bf16.gmra.mrb[0].mxu0 %v202
  %v483 = vpop.f32.mrb[0].mxu0
  %v484 = vadd.f32 %v68, %v483
  %v485 = vpop.f32.mrb[0].mxu0
  %v486 = vadd.f32 %v72, %v485
  %v487 = vpop.f32.mrb[0].mxu0
  %v488 = vadd.f32 %v68, %v487
  %v489 = vpop.f32.mrb[0].mxu0
  %v490 = vadd.f32 %v72, %v489
  %491 = vmatprep.mubr.bf16.mxu0 0
  %492 = vmatmul.mubr.bf16.gmra.mrb[0].mxu0 %v205
  %v493 = vpop.f32.mrb[0].mxu0
  %v494 = vadd.f32 %v68, %v493
  %v495 = vpop.f32.mrb[0].mxu0
  %v496 = vadd.f32 %v72, %v495
  %v497 = vpop.f32.mrb[0].mxu0
  %v498 = vadd.f32 %v68, %v497
  %v499 = vpop.f32.mrb[0].mxu0
  %v500 = vadd.f32 %v72, %v499
  %501 = vmatprep.mubr.bf16.mxu0 0
  %502 = vmatmul.mubr.bf16.gmra.mrb[0].mxu0 %v208
  %v503 = vpop.f32.mrb[0].mxu0
  %v504 = vadd.f32 %v68, %v503
  %v505 = vpop.f32.mrb[0].mxu0
  %v506 = vadd.f32 %v72, %v505
  %v507 = vpop.f32.mrb[0].mxu0
  %v508 = vadd.f32 %v68, %v507
  %v509 = vpop.f32.mrb[0].mxu0
  %v510 = vadd.f32 %v72, %v509
  %511 = vmatprep.mubr.bf16.mxu0 0
  %512 = vmatmul.mubr.bf16.gmra.mrb[0].mxu0 %v211
  %v513 = vpop.f32.mrb[0].mxu0
  %v514 = vadd.f32 %v68, %v513
  %v515 = vpop.f32.mrb[0].mxu0
  %v516 = vadd.f32 %v72, %v515
  %v517 = vpop.f32.mrb[0].mxu0
  %v518 = vadd.f32 %v68, %v517
  %v519 = vpop.f32.mrb[0].mxu0
  %v520 = vadd.f32 %v72, %v519
  %521 = vmatprep.mubr.bf16.mxu0 0
  %522 = vmatmul.mubr.bf16.gmra.mrb[0].mxu0 %v214
  %v523 = vpop.f32.mrb[0].mxu0
  %v524 = vadd.f32 %v68, %v523
  %v525 = vpop.f32.mrb[0].mxu0
  %v526 = vadd.f32 %v72, %v525
  %v527 = vpop.f32.mrb[0].mxu0
  %v528 = vadd.f32 %v68, %v527
  %v529 = vpop.f32.mrb[0].mxu0
  %v530 = vadd.f32 %v72, %v529
  %531 = vmatprep.mubr.bf16.mxu0 0
  %532 = vmatmul.mubr.bf16.gmra.mrb[0].mxu0 %v217
  %v533 = vpop.f32.mrb[0].mxu0
  %v534 = vadd.f32 %v68, %v533
  %v535 = vpop.f32.mrb[0].mxu0
  %v536 = vadd.f32 %v72, %v535
  %v537 = vpop.f32.mrb[0].mxu0
  %v538 = vadd.f32 %v68, %v537
  %v539 = vpop.f32.mrb[0].mxu0
  %v540 = vadd.f32 %v72, %v539
  %541 = vmatprep.mubr.bf16.mxu0 0
  %542 = vmatmul.mubr.bf16.gmra.mrb[0].mxu0 %v220
  %v543 = vpop.f32.mrb[0].mxu0
  %v544 = vadd.f32 %v68, %v543
  %v545 = vpop.f32.mrb[0].mxu0
  %v546 = vadd.f32 %v72, %v545
  %v547 = vpop.f32.mrb[0].mxu0
  %v548 = vadd.f32 %v68, %v547
  %v549 = vpop.f32.mrb[0].mxu0
  %v550 = vadd.f32 %v72, %v549
  %551 = vmatprep.mubr.bf16.mxu0 0
  %552 = vmatmul.mubr.bf16.gmra.mrb[0].mxu0 %v223
  %v553 = vpop.f32.mrb[0].mxu0
  %v554 = vadd.f32 %v68, %v553
  %v555 = vpop.f32.mrb[0].mxu0
  %v556 = vadd.f32 %v72, %v555
  %v557 = vpop.f32.mrb[0].mxu0
  %v558 = vadd.f32 %v68, %v557
  %v559 = vpop.f32.mrb[0].mxu0
  %v560 = vadd.f32 %v72, %v559
  %561 = vmatprep.mubr.bf16.mxu0 0
  %562 = vmatmul.mubr.bf16.gmra.mrb[0].mxu0 %v226
  %v563 = vpop.f32.mrb[0].mxu0
  %v564 = vadd.f32 %v68, %v563
  %v565 = vpop.f32.mrb[0].mxu0
  %v566 = vadd.f32 %v72, %v565
  %v567 = vpop.f32.mrb[0].mxu0
  %v568 = vadd.f32 %v68, %v567
  %v569 = vpop.f32.mrb[0].mxu0
  %v570 = vadd.f32 %v72, %v569
  %571 = vmatprep.mubr.bf16.mxu0 0
  %572 = vmatmul.mubr.bf16.gmra.mrb[0].mxu0 %v229
  %v573 = vpop.f32.mrb[0].mxu0
  %v574 = vadd.f32 %v68, %v573
  %v575 = vpop.f32.mrb[0].mxu0
  %v576 = vadd.f32 %v72, %v575
  %v577 = vpop.f32.mrb[0].mxu0
  %v578 = vadd.f32 %v68, %v577
  %v579 = vpop.f32.mrb[0].mxu0
  %v580 = vadd.f32 %v72, %v579
  %581 = vmatprep.mubr.bf16.mxu0 0
  %582 = vmatmul.mubr.bf16.gmra.mrb[0].mxu0 %v232
  %v583 = vpop.f32.mrb[0].mxu0
  %v584 = vadd.f32 %v68, %v583
  %v585 = vpop.f32.mrb[0].mxu0
  %v586 = vadd.f32 %v72, %v585
  %v587 = vpop.f32.mrb[0].mxu0
  %v588 = vadd.f32 %v68, %v587
  %v589 = vpop.f32.mrb[0].mxu0
  %v590 = vadd.f32 %v72, %v589
  %591 = vmatprep.mubr.bf16.mxu0 0
  %592 = vmatmul.mubr.bf16.gmra.mrb[0].mxu0 %v235
  %v593 = vpop.f32.mrb[0].mxu0
  %v594 = vadd.f32 %v68, %v593
  %v595 = vpop.f32.mrb[0].mxu0
  %v596 = vadd.f32 %v72, %v595
  %v597 = vpop.f32.mrb[0].mxu0
  %v598 = vadd.f32 %v68, %v597
  %v599 = vpop.f32.mrb[0].mxu0
  %v600 = vadd.f32 %v72, %v599
  %601 = vmatprep.mubr.bf16.mxu0 0
  %602 = vmatmul.mubr.bf16.gmra.mrb[0].mxu0 %v238
  %v603 = vpop.f32.mrb[0].mxu0
  %v604 = vadd.f32 %v68, %v603
  %v605 = vpop.f32.mrb[0].mxu0
  %v606 = vadd.f32 %v72, %v605
  %v607 = vpop.f32.mrb[0].mxu0
  %v608 = vadd.f32 %v68, %v607
  %v609 = vpop.f32.mrb[0].mxu0
  %v610 = vadd.f32 %v72, %v609
  %611 = vmatprep.mubr.bf16.mxu0 0
  %612 = vmatmul.mubr.bf16.gmra.mrb[0].mxu0 %v241
  %v613 = vpop.f32.mrb[0].mxu0
  %v614 = vadd.f32 %v68, %v613
  %v615 = vpop.f32.mrb[0].mxu0
  %v616 = vadd.f32 %v72, %v615
  %v617 = vpop.f32.mrb[0].mxu0
  %v618 = vadd.f32 %v68, %v617
  %v619 = vpop.f32.mrb[0].mxu0
  %v620 = vadd.f32 %v72, %v619
  %621 = vmatprep.mubr.bf16.mxu0 0
  %622 = vmatmul.mubr.bf16.gmra.mrb[0].mxu0 %v244
  %v623 = vpop.f32.mrb[0].mxu0
  %v624 = vadd.f32 %v68, %v623
  %v625 = vpop.f32.mrb[0].mxu0
  %v626 = vadd.f32 %v72, %v625
  %v627 = vpop.f32.mrb[0].mxu0
  %v628 = vadd.f32 %v68, %v627
  %v629 = vpop.f32.mrb[0].mxu0
  %v630 = vadd.f32 %v72, %v629
  %631 = vdwg.mxu0
  %632 = vmatprep.subr.bf16.mxu0 %v190
  %633 = vmatpush1.bf16.msra.mxu0 %v189
  %634 = vmatprep.subr.bf16.mxu0 0
  %635 = vmatpush1.bf16.msra.mxu0 0
  %636 = vmatprep.subr.bf16.mxu0 0
  %637 = vmatpush1.bf16.msra.mxu0 0
  %638 = vmatprep.subr.bf16.mxu0 0
  %639 = vmatpush1.bf16.msra.mxu0 0
  %640 = vmatprep.subr.bf16.mxu0 0
  %641 = vmatpush1.bf16.msra.mxu0 0
  %642 = vmatprep.subr.bf16.mxu0 0
  %643 = vmatpush1.bf16.msra.mxu0 0
  %644 = vmatprep.subr.bf16.mxu0 0
  %645 = vmatpush1.bf16.msra.mxu0 0
  %646 = vmatprep.subr.bf16.mxu0 0
  %647 = vmatpush1.bf16.msra.mxu0 0
  %648 = vmatprep.subr.bf16.mxu0 0
  %649 = vmatpush1.bf16.msra.mxu0 0
  %650 = vmatprep.subr.bf16.mxu0 0
  %651 = vmatpush1.bf16.msra.mxu0 0
  %652 = vmatprep.subr.bf16.mxu0 0
  %653 = vmatpush1.bf16.msra.mxu0 0
  %654 = vmatprep.subr.bf16.mxu0 0
  %655 = vmatpush1.bf16.msra.mxu0 0
  %656 = vmatprep.subr.bf16.mxu0 0
  %657 = vmatpush1.bf16.msra.mxu0 0
  %658 = vmatprep.subr.bf16.mxu0 0
  %659 = vmatpush1.bf16.msra.mxu0 0
  %660 = vmatprep.subr.bf16.mxu0 0
  %661 = vmatpush1.bf16.msra.mxu0 0
  %662 = vmatprep.subr.bf16.mxu0 0
  %663 = vmatpush1.bf16.msra.mxu0 0
  %664 = vmatprep.mubr.bf16.mxu0 0
  %665 = vmatmul.mubr.bf16.gmra.mrb[0].mxu0 %v199
  %v666 = vpop.f32.mrb[0].mxu0
  %v667 = vadd.f32 %v76, %v666
  %v668 = vpop.f32.mrb[0].mxu0
  %v669 = vadd.f32 %v80, %v668
  %v670 = vpop.f32.mrb[0].mxu0
  %v671 = vadd.f32 %v76, %v670
  %v672 = vpop.f32.mrb[0].mxu0
  %v673 = vadd.f32 %v80, %v672
  %674 = vmatprep.mubr.bf16.mxu0 0
  %675 = vmatmul.mubr.bf16.gmra.mrb[0].mxu0 %v202
  %v676 = vpop.f32.mrb[0].mxu0
  %v677 = vadd.f32 %v76, %v676
  %v678 = vpop.f32.mrb[0].mxu0
  %v679 = vadd.f32 %v80, %v678
  %v680 = vpop.f32.mrb[0].mxu0
  %v681 = vadd.f32 %v76, %v680
  %v682 = vpop.f32.mrb[0].mxu0
  %v683 = vadd.f32 %v80, %v682
  %684 = vmatprep.mubr.bf16.mxu0 0
  %685 = vmatmul.mubr.bf16.gmra.mrb[0].mxu0 %v205
  %v686 = vpop.f32.mrb[0].mxu0
  %v687 = vadd.f32 %v76, %v686
  %v688 = vpop.f32.mrb[0].mxu0
  %v689 = vadd.f32 %v80, %v688
  %v690 = vpop.f32.mrb[0].mxu0
  %v691 = vadd.f32 %v76, %v690
  %v692 = vpop.f32.mrb[0].mxu0
  %v693 = vadd.f32 %v80, %v692
  %694 = vmatprep.mubr.bf16.mxu0 0
  %695 = vmatmul.mubr.bf16.gmra.mrb[0].mxu0 %v208
  %v696 = vpop.f32.mrb[0].mxu0
  %v697 = vadd.f32 %v76, %v696
  %v698 = vpop.f32.mrb[0].mxu0
  %v699 = vadd.f32 %v80, %v698
  %v700 = vpop.f32.mrb[0].mxu0
  %v701 = vadd.f32 %v76, %v700
  %v702 = vpop.f32.mrb[0].mxu0
  %v703 = vadd.f32 %v80, %v702
  %704 = vmatprep.mubr.bf16.mxu0 0
  %705 = vmatmul.mubr.bf16.gmra.mrb[0].mxu0 %v211
  %v706 = vpop.f32.mrb[0].mxu0
  %v707 = vadd.f32 %v76, %v706
  %v708 = vpop.f32.mrb[0].mxu0
  %v709 = vadd.f32 %v80, %v708
  %v710 = vpop.f32.mrb[0].mxu0
  %v711 = vadd.f32 %v76, %v710
  %v712 = vpop.f32.mrb[0].mxu0
  %v713 = vadd.f32 %v80, %v712
  %714 = vmatprep.mubr.bf16.mxu0 0
  %715 = vmatmul.mubr.bf16.gmra.mrb[0].mxu0 %v214
  %v716 = vpop.f32.mrb[0].mxu0
  %v717 = vadd.f32 %v76, %v716
  %v718 = vpop.f32.mrb[0].mxu0
  %v719 = vadd.f32 %v80, %v718
  %v720 = vpop.f32.mrb[0].mxu0
  %v721 = vadd.f32 %v76, %v720
  %v722 = vpop.f32.mrb[0].mxu0
  %v723 = vadd.f32 %v80, %v722
  %724 = vmatprep.mubr.bf16.mxu0 0
  %725 = vmatmul.mubr.bf16.gmra.mrb[0].mxu0 %v217
  %v726 = vpop.f32.mrb[0].mxu0
  %v727 = vadd.f32 %v76, %v726
  %v728 = vpop.f32.mrb[0].mxu0
  %v729 = vadd.f32 %v80, %v728
  %v730 = vpop.f32.mrb[0].mxu0
  %v731 = vadd.f32 %v76, %v730
  %v732 = vpop.f32.mrb[0].mxu0
  %v733 = vadd.f32 %v80, %v732
  %734 = vmatprep.mubr.bf16.mxu0 0
  %735 = vmatmul.mubr.bf16.gmra.mrb[0].mxu0 %v220
  %v736 = vpop.f32.mrb[0].mxu0
  %v737 = vadd.f32 %v76, %v736
  %v738 = vpop.f32.mrb[0].mxu0
  %v739 = vadd.f32 %v80, %v738
  %v740 = vpop.f32.mrb[0].mxu0
  %v741 = vadd.f32 %v76, %v740
  %v742 = vpop.f32.mrb[0].mxu0
  %v743 = vadd.f32 %v80, %v742
  %744 = vmatprep.mubr.bf16.mxu0 0
  %745 = vmatmul.mubr.bf16.gmra.mrb[0].mxu0 %v223
  %v746 = vpop.f32.mrb[0].mxu0
  %v747 = vadd.f32 %v76, %v746
  %v748 = vpop.f32.mrb[0].mxu0
  %v749 = vadd.f32 %v80, %v748
  %v750 = vpop.f32.mrb[0].mxu0
  %v751 = vadd.f32 %v76, %v750
  %v752 = vpop.f32.mrb[0].mxu0
  %v753 = vadd.f32 %v80, %v752
  %754 = vmatprep.mubr.bf16.mxu0 0
  %755 = vmatmul.mubr.bf16.gmra.mrb[0].mxu0 %v226
  %v756 = vpop.f32.mrb[0].mxu0
  %v757 = vadd.f32 %v76, %v756
  %v758 = vpop.f32.mrb[0].mxu0
  %v759 = vadd.f32 %v80, %v758
  %v760 = vpop.f32.mrb[0].mxu0
  %v761 = vadd.f32 %v76, %v760
  %v762 = vpop.f32.mrb[0].mxu0
  %v763 = vadd.f32 %v80, %v762
  %764 = vmatprep.mubr.bf16.mxu0 0
  %765 = vmatmul.mubr.bf16.gmra.mrb[0].mxu0 %v229
  %v766 = vpop.f32.mrb[0].mxu0
  %v767 = vadd.f32 %v76, %v766
  %v768 = vpop.f32.mrb[0].mxu0
  %v769 = vadd.f32 %v80, %v768
  %v770 = vpop.f32.mrb[0].mxu0
  %v771 = vadd.f32 %v76, %v770
  %v772 = vpop.f32.mrb[0].mxu0
  %v773 = vadd.f32 %v80, %v772
  %774 = vmatprep.mubr.bf16.mxu0 0
  %775 = vmatmul.mubr.bf16.gmra.mrb[0].mxu0 %v232
  %v776 = vpop.f32.mrb[0].mxu0
  %v777 = vadd.f32 %v76, %v776
  %v778 = vpop.f32.mrb[0].mxu0
  %v779 = vadd.f32 %v80, %v778
  %v780 = vpop.f32.mrb[0].mxu0
  %v781 = vadd.f32 %v76, %v780
  %v782 = vpop.f32.mrb[0].mxu0
  %v783 = vadd.f32 %v80, %v782
  %784 = vmatprep.mubr.bf16.mxu0 0
  %785 = vmatmul.mubr.bf16.gmra.mrb[0].mxu0 %v235
  %v786 = vpop.f32.mrb[0].mxu0
  %v787 = vadd.f32 %v76, %v786
  %v788 = vpop.f32.mrb[0].mxu0
  %v789 = vadd.f32 %v80, %v788
  %v790 = vpop.f32.mrb[0].mxu0
  %v791 = vadd.f32 %v76, %v790
  %v792 = vpop.f32.mrb[0].mxu0
  %v793 = vadd.f32 %v80, %v792
  %794 = vmatprep.mubr.bf16.mxu0 0
  %795 = vmatmul.mubr.bf16.gmra.mrb[0].mxu0 %v238
  %v796 = vpop.f32.mrb[0].mxu0
  %v797 = vadd.f32 %v76, %v796
  %v798 = vpop.f32.mrb[0].mxu0
  %v799 = vadd.f32 %v80, %v798
  %v800 = vpop.f32.mrb[0].mxu0
  %v801 = vadd.f32 %v76, %v800
  %v802 = vpop.f32.mrb[0].mxu0
  %v803 = vadd.f32 %v80, %v802
  %804 = vmatprep.mubr.bf16.mxu0 0
  %805 = vmatmul.mubr.bf16.gmra.mrb[0].mxu0 %v241
  %v806 = vpop.f32.mrb[0].mxu0
  %v807 = vadd.f32 %v76, %v806
  %v808 = vpop.f32.mrb[0].mxu0
  %v809 = vadd.f32 %v80, %v808
  %v810 = vpop.f32.mrb[0].mxu0
  %v811 = vadd.f32 %v76, %v810
  %v812 = vpop.f32.mrb[0].mxu0
  %v813 = vadd.f32 %v80, %v812
  %814 = vmatprep.mubr.bf16.mxu0 0
  %815 = vmatmul.mubr.bf16.gmra.mrb[0].mxu0 %v244
  %v816 = vpop.f32.mrb[0].mxu0
  %v817 = vadd.f32 %v76, %v816
  %v818 = vpop.f32.mrb[0].mxu0
  %v819 = vadd.f32 %v80, %v818
  %v820 = vpop.f32.mrb[0].mxu0
  %v821 = vadd.f32 %v76, %v820
  %v822 = vpop.f32.mrb[0].mxu0
  %v823 = vadd.f32 %v80, %v822
  %824 = vdwg.mxu0
  %825 = vst [vmem:[%s3] sm:$0xff] %v281
  %826 = vst [vmem:[%s3 + $0x8] sm:$0xff] %v283
  %827 = vst [vmem:[%s3 + $0x10] sm:$0xff] %v474
  %828 = vst [vmem:[%s3 + $0x18] sm:$0xff] %v285
  %829 = vst [vmem:[%s3 + $0x20] sm:$0xff] %v287
  %830 = vst [vmem:[%s3 + $0x28] sm:$0xff] %v478
  %831 = vst [vmem:[%s3 + $0x30] sm:$0xff] %v291
  %832 = vst [vmem:[%s3 + $0x38] sm:$0xff] %v293
  %833 = vst [vmem:[%s3 + $0x40] sm:$0xff] %v484
  %834 = vst [vmem:[%s3 + $0x48] sm:$0xff] %v295
  %835 = vst [vmem:[%s3 + $0x50] sm:$0xff] %v297
  %836 = vst [vmem:[%s3 + $0x58] sm:$0xff] %v488
  %837 = vst [vmem:[%s3 + $0x60] sm:$0xff] %v301
  %838 = vst [vmem:[%s3 + $0x68] sm:$0xff] %v303
  %839 = vst [vmem:[%s3 + $0x70] sm:$0xff] %v494
  %840 = vst [vmem:[%s3 + $0x78] sm:$0xff] %v305
  %841 = vst [vmem:[%s3 + $0x80] sm:$0xff] %v307
  %842 = vst [vmem:[%s3 + $0x88] sm:$0xff] %v498
  %843 = vst [vmem:[%s3 + $0x90] sm:$0xff] %v311
  %844 = vst [vmem:[%s3 + $0x98] sm:$0xff] %v313
  %845 = vst [vmem:[%s3 + $0xa0] sm:$0xff] %v504
  %846 = vst [vmem:[%s3 + $0xa8] sm:$0xff] %v315
  %847 = vst [vmem:[%s3 + $0xb0] sm:$0xff] %v317
  %848 = vst [vmem:[%s3 + $0xb8] sm:$0xff] %v508
  %849 = vst [vmem:[%s3 + $0xc0] sm:$0xff] %v321
  %850 = vst [vmem:[%s3 + $0xc8] sm:$0xff] %v323
  %851 = vst [vmem:[%s3 + $0xd0] sm:$0xff] %v514
  %852 = vst [vmem:[%s3 + $0xd8] sm:$0xff] %v325
  %853 = vst [vmem:[%s3 + $0xe0] sm:$0xff] %v327
  %854 = vst [vmem:[%s3 + $0xe8] sm:$0xff] %v518
  %855 = vst [vmem:[%s3 + $0xf0] sm:$0xff] %v331
  %856 = vst [vmem:[%s3 + $0xf8] sm:$0xff] %v333
  %857 = vst [vmem:[%s3 + $0x100] sm:$0xff] %v524
  %858 = vst [vmem:[%s3 + $0x108] sm:$0xff] %v335
  %859 = vst [vmem:[%s3 + $0x110] sm:$0xff] %v337
  %860 = vst [vmem:[%s3 + $0x118] sm:$0xff] %v528
  %861 = vst [vmem:[%s3 + $0x120] sm:$0xff] %v341
  %862 = vst [vmem:[%s3 + $0x128] sm:$0xff] %v343
  %863 = vst [vmem:[%s3 + $0x130] sm:$0xff] %v534
  %864 = vst [vmem:[%s3 + $0x138] sm:$0xff] %v345
  %865 = vst [vmem:[%s3 + $0x140] sm:$0xff] %v347
  %866 = vst [vmem:[%s3 + $0x148] sm:$0xff] %v538
  %867 = vst [vmem:[%s3 + $0x150] sm:$0xff] %v351
  %868 = vst [vmem:[%s3 + $0x158] sm:$0xff] %v353
  %869 = vst [vmem:[%s3 + $0x160] sm:$0xff] %v544
  %870 = vst [vmem:[%s3 + $0x168] sm:$0xff] %v355
  %871 = vst [vmem:[%s3 + $0x170] sm:$0xff] %v357
  %872 = vst [vmem:[%s3 + $0x178] sm:$0xff] %v548
  %873 = vst [vmem:[%s3 + $0x180] sm:$0xff] %v361
  %874 = vst [vmem:[%s3 + $0x188] sm:$0xff] %v363
  %875 = vst [vmem:[%s3 + $0x190] sm:$0xff] %v554
  %876 = vst [vmem:[%s3 + $0x198] sm:$0xff] %v365
  %877 = vst [vmem:[%s3 + $0x1a0] sm:$0xff] %v367
  %878 = vst [vmem:[%s3 + $0x1a8] sm:$0xff] %v558
  %879 = vst [vmem:[%s3 + $0x1b0] sm:$0xff] %v371
  %880 = vst [vmem:[%s3 + $0x1b8] sm:$0xff] %v373
  %881 = vst [vmem:[%s3 + $0x1c0] sm:$0xff] %v564
  %882 = vst [vmem:[%s3 + $0x1c8] sm:$0xff] %v375
  %883 = vst [vmem:[%s3 + $0x1d0] sm:$0xff] %v377
  %884 = vst [vmem:[%s3 + $0x1d8] sm:$0xff] %v568
  %885 = vst [vmem:[%s3 + $0x1e0] sm:$0xff] %v381
  %886 = vst [vmem:[%s3 + $0x1e8] sm:$0xff] %v383
  %887 = vst [vmem:[%s3 + $0x1f0] sm:$0xff] %v574
  %888 = vst [vmem:[%s3 + $0x1f8] sm:$0xff] %v385
  %889 = vst [vmem:[%s3 + $0x200] sm:$0xff] %v387
  %890 = vst [vmem:[%s3 + $0x208] sm:$0xff] %v578
  %891 = vst [vmem:[%s3 + $0x210] sm:$0xff] %v391
  %892 = vst [vmem:[%s3 + $0x218] sm:$0xff] %v393
  %893 = vst [vmem:[%s3 + $0x220] sm:$0xff] %v584
  %894 = vst [vmem:[%s3 + $0x228] sm:$0xff] %v395
  %895 = vst [vmem:[%s3 + $0x230] sm:$0xff] %v397
  %896 = vst [vmem:[%s3 + $0x238] sm:$0xff] %v588
  %897 = vst [vmem:[%s3 + $0x240] sm:$0xff] %v401
  %898 = vst [vmem:[%s3 + $0x248] sm:$0xff] %v403
  %899 = vst [vmem:[%s3 + $0x250] sm:$0xff] %v594
  %900 = vst [vmem:[%s3 + $0x258] sm:$0xff] %v405
  %901 = vst [vmem:[%s3 + $0x260] sm:$0xff] %v407
  %902 = vst [vmem:[%s3 + $0x268] sm:$0xff] %v598
  %903 = vst [vmem:[%s3 + $0x270] sm:$0xff] %v411
  %904 = vst [vmem:[%s3 + $0x278] sm:$0xff] %v413
  %905 = vst [vmem:[%s3 + $0x280] sm:$0xff] %v604
  %906 = vst [vmem:[%s3 + $0x288] sm:$0xff] %v415
  %907 = vst [vmem:[%s3 + $0x290] sm:$0xff] %v417
  %908 = vst [vmem:[%s3 + $0x298] sm:$0xff] %v608
  %909 = vst [vmem:[%s3 + $0x2a0] sm:$0xff] %v421
  %910 = vst [vmem:[%s3 + $0x2a8] sm:$0xff] %v423
  %911 = vst [vmem:[%s3 + $0x2b0] sm:$0xff] %v614
  %912 = vst [vmem:[%s3 + $0x2b8] sm:$0xff] %v425
  %913 = vst [vmem:[%s3 + $0x2c0] sm:$0xff] %v427
  %914 = vst [vmem:[%s3 + $0x2c8] sm:$0xff] %v618
  %915 = vst [vmem:[%s3 + $0x2d0] sm:$0xff] %v431
  %916 = vst [vmem:[%s3 + $0x2d8] sm:$0xff] %v433
  %917 = vst [vmem:[%s3 + $0x2e0] sm:$0xff] %v624
  %918 = vst [vmem:[%s3 + $0x2e8] sm:$0xff] %v435
  %919 = vst [vmem:[%s3 + $0x2f0] sm:$0xff] %v437
  %920 = vst [vmem:[%s3 + $0x2f8] sm:$0xff] %v628
  %921 = vst [vmem:[%s4] sm:$0xff] %v476
  %922 = vst [vmem:[%s4 + $0x8] sm:$0xff] %v667
  %923 = vst [vmem:[%s4 + $0x10] sm:$0xff] %v669
  %924 = vst [vmem:[%s4 + $0x18] sm:$0xff] %v480
  %925 = vst [vmem:[%s4 + $0x20] sm:$0xff] %v671
  %926 = vst [vmem:[%s4 + $0x28] sm:$0xff] %v673
  %927 = vst [vmem:[%s4 + $0x30] sm:$0xff] %v486
  %928 = vst [vmem:[%s4 + $0x38] sm:$0xff] %v677
  %929 = vst [vmem:[%s4 + $0x40] sm:$0xff] %v679
  %930 = vst [vmem:[%s4 + $0x48] sm:$0xff] %v490
  %931 = vst [vmem:[%s4 + $0x50] sm:$0xff] %v681
  %932 = vst [vmem:[%s4 + $0x58] sm:$0xff] %v683
  %933 = vst [vmem:[%s4 + $0x60] sm:$0xff] %v496
  %934 = vst [vmem:[%s4 + $0x68] sm:$0xff] %v687
  %935 = vst [vmem:[%s4 + $0x70] sm:$0xff] %v689
  %936 = vst [vmem:[%s4 + $0x78] sm:$0xff] %v500
  %937 = vst [vmem:[%s4 + $0x80] sm:$0xff] %v691
  %938 = vst [vmem:[%s4 + $0x88] sm:$0xff] %v693
  %939 = vst [vmem:[%s4 + $0x90] sm:$0xff] %v506
  %940 = vst [vmem:[%s4 + $0x98] sm:$0xff] %v697
  %941 = vst [vmem:[%s4 + $0xa0] sm:$0xff] %v699
  %942 = vst [vmem:[%s4 + $0xa8] sm:$0xff] %v510
  %943 = vst [vmem:[%s4 + $0xb0] sm:$0xff] %v701
  %944 = vst [vmem:[%s4 + $0xb8] sm:$0xff] %v703
  %945 = vst [vmem:[%s4 + $0xc0] sm:$0xff] %v516
  %946 = vst [vmem:[%s4 + $0xc8] sm:$0xff] %v707
  %947 = vst [vmem:[%s4 + $0xd0] sm:$0xff] %v709
  %948 = vst [vmem:[%s4 + $0xd8] sm:$0xff] %v520
  %949 = vst [vmem:[%s4 + $0xe0] sm:$0xff] %v711
  %950 = vst [vmem:[%s4 + $0xe8] sm:$0xff] %v713
  %951 = vst [vmem:[%s4 + $0xf0] sm:$0xff] %v526
  %952 = vst [vmem:[%s4 + $0xf8] sm:$0xff] %v717
  %953 = vst [vmem:[%s4 + $0x100] sm:$0xff] %v719
  %954 = vst [vmem:[%s4 + $0x108] sm:$0xff] %v530
  %955 = vst [vmem:[%s4 + $0x110] sm:$0xff] %v721
  %956 = vst [vmem:[%s4 + $0x118] sm:$0xff] %v723
  %957 = vst [vmem:[%s4 + $0x120] sm:$0xff] %v536
  %958 = vst [vmem:[%s4 + $0x128] sm:$0xff] %v727
  %959 = vst [vmem:[%s4 + $0x130] sm:$0xff] %v729
  %960 = vst [vmem:[%s4 + $0x138] sm:$0xff] %v540
  %961 = vst [vmem:[%s4 + $0x140] sm:$0xff] %v731
  %962 = vst [vmem:[%s4 + $0x148] sm:$0xff] %v733
  %963 = vst [vmem:[%s4 + $0x150] sm:$0xff] %v546
  %964 = vst [vmem:[%s4 + $0x158] sm:$0xff] %v737
  %965 = vst [vmem:[%s4 + $0x160] sm:$0xff] %v739
  %966 = vst [vmem:[%s4 + $0x168] sm:$0xff] %v550
  %967 = vst [vmem:[%s4 + $0x170] sm:$0xff] %v741
  %968 = vst [vmem:[%s4 + $0x178] sm:$0xff] %v743
  %969 = vst [vmem:[%s4 + $0x180] sm:$0xff] %v556
  %970 = vst [vmem:[%s4 + $0x188] sm:$0xff] %v747
  %971 = vst [vmem:[%s4 + $0x190] sm:$0xff] %v749
  %972 = vst [vmem:[%s4 + $0x198] sm:$0xff] %v560
  %973 = vst [vmem:[%s4 + $0x1a0] sm:$0xff] %v751
  %974 = vst [vmem:[%s4 + $0x1a8] sm:$0xff] %v753
  %975 = vst [vmem:[%s4 + $0x1b0] sm:$0xff] %v566
  %976 = vst [vmem:[%s4 + $0x1b8] sm:$0xff] %v757
  %977 = vst [vmem:[%s4 + $0x1c0] sm:$0xff] %v759
  %978 = vst [vmem:[%s4 + $0x1c8] sm:$0xff] %v570
  %979 = vst [vmem:[%s4 + $0x1d0] sm:$0xff] %v761
  %980 = vst [vmem:[%s4 + $0x1d8] sm:$0xff] %v763
  %981 = vst [vmem:[%s4 + $0x1e0] sm:$0xff] %v576
  %982 = vst [vmem:[%s4 + $0x1e8] sm:$0xff] %v767
  %983 = vst [vmem:[%s4 + $0x1f0] sm:$0xff] %v769
  %984 = vst [vmem:[%s4 + $0x1f8] sm:$0xff] %v580
  %985 = vst [vmem:[%s4 + $0x200] sm:$0xff] %v771
  %986 = vst [vmem:[%s4 + $0x208] sm:$0xff] %v773
  %987 = vst [vmem:[%s4 + $0x210] sm:$0xff] %v586
  %988 = vst [vmem:[%s4 + $0x218] sm:$0xff] %v777
  %989 = vst [vmem:[%s4 + $0x220] sm:$0xff] %v779
  %990 = vst [vmem:[%s4 + $0x228] sm:$0xff] %v590
  %991 = vst [vmem:[%s4 + $0x230] sm:$0xff] %v781
  %992 = vst [vmem:[%s4 + $0x238] sm:$0xff] %v783
  %993 = vst [vmem:[%s4 + $0x240] sm:$0xff] %v596
  %994 = vst [vmem:[%s4 + $0x248] sm:$0xff] %v787
  %995 = vst [vmem:[%s4 + $0x250] sm:$0xff] %v789
  %996 = vst [vmem:[%s4 + $0x258] sm:$0xff] %v600
  %997 = vst [vmem:[%s4 + $0x260] sm:$0xff] %v791
  %998 = vst [vmem:[%s4 + $0x268] sm:$0xff] %v793
  %999 = vst [vmem:[%s4 + $0x270] sm:$0xff] %v606
  %1000 = vst [vmem:[%s4 + $0x278] sm:$0xff] %v797
  %1001 = vst [vmem:[%s4 + $0x280] sm:$0xff] %v799
  %1002 = vst [vmem:[%s4 + $0x288] sm:$0xff] %v610
  %1003 = vst [vmem:[%s4 + $0x290] sm:$0xff] %v801
  %1004 = vst [vmem:[%s4 + $0x298] sm:$0xff] %v803
  %1005 = vst [vmem:[%s4 + $0x2a0] sm:$0xff] %v616
  %1006 = vst [vmem:[%s4 + $0x2a8] sm:$0xff] %v807
  %1007 = vst [vmem:[%s4 + $0x2b0] sm:$0xff] %v809
  %1008 = vst [vmem:[%s4 + $0x2b8] sm:$0xff] %v620
  %1009 = vst [vmem:[%s4 + $0x2c0] sm:$0xff] %v811
  %1010 = vst [vmem:[%s4 + $0x2c8] sm:$0xff] %v813
  %1011 = vst [vmem:[%s4 + $0x2d0] sm:$0xff] %v626
  %1012 = vst [vmem:[%s4 + $0x2d8] sm:$0xff] %v817
  %1013 = vst [vmem:[%s4 + $0x2e0] sm:$0xff] %v819
  %1014 = vst [vmem:[%s4 + $0x2e8] sm:$0xff] %v630
  %1015 = vst [vmem:[%s4 + $0x2f0] sm:$0xff] %v821
  %1016 = vst [vmem:[%s4 + $0x2f8] sm:$0xff] %v823
  // Predicated region
  $region14: #{gru_fc_forward.5} parent=0 // pred_check
    _
  $region15: #{gru_fc_forward.5} parent=0 // pred_check_branch
    %1018 = sbr.rel (0) target = $region17
  $region16: #{gru_fc_forward.5} parent=0 // pred_region
    _
  $region17: #{gru_fc_forward.5} parent=0 // pred_fallthru
    _
  // Predicated region
  $region18: #{gru_fc_forward.5} parent=0 // pred_check
    _
  $region19: #{gru_fc_forward.5} parent=0 // pred_check_branch
    %1020 = sbr.rel (0) target = $region21
  $region20: #{gru_fc_forward.5} parent=0 // pred_region
    _
  $region21: #{gru_fc_forward.5} parent=0 // pred_fallthru
    _
  // Predicated region
  $region22: #{gru_fc_forward.5} parent=0 // pred_check
    _
  $region23: #{gru_fc_forward.5} parent=0 // pred_check_branch
    %1022 = sbr.rel (0) target = $region25
  $region24: #{gru_fc_forward.5} parent=0 // pred_region
    _
  $region25: #{gru_fc_forward.5} parent=0 // pred_fallthru
    _
  // Predicated region
  $region26: #{gru_fc_forward.5} parent=0 // pred_check
    _
  $region27: #{gru_fc_forward.5} parent=0 // pred_check_branch
    %1024 = sbr.rel (0) target = $region29
  $region28: #{gru_fc_forward.5} parent=0 // pred_region
    _
  $region29: #{gru_fc_forward.5} parent=0 // pred_fallthru
    _

// kernel: gru_fc_forward.7
$region0: #{gru_fc_forward.7}
  #allocation0 [shape = 'u32[]', space=smem, size = 0x4, offset = 0x4, fixed_abs, tag = 'smem constant byte address 0x4 - core index']
  #allocation1 [shape = 'u32[144,128]{1,0:T(1,128)}', space=vmem, size = 0x12000, scoped, tag = 'internal scratch']
  %s0 = inlined_call_operand.vmem [shape: bf16[256,256], index: 0, kind: input, shape index: {}]
  %s1 = inlined_call_operand.hbm [shape: bf16[256,768], index: 1, kind: input, shape index: {}]
  %s2 = inlined_call_operand.vmem [shape: f32[1,768], index: 2, kind: input, shape index: {}]
  %s3 = inlined_call_operand.vmem [shape: f32[256,384], index: 3, kind: output, shape index: {0}]
  %s4 = inlined_call_operand.vmem [shape: f32[256,384], index: 4, kind: output, shape index: {1}]
  %5 = xla_tuple %s3, %s4
  %s6 = sld [smem:[#allocation0]]
  $region34: #{gru_fc_forward.7} parent=0
    _
  %s8 = ssub.s32 1, %s6
  %s9 = scalar_select 0, %s8, %s6
  $region1: #{gru_fc_forward.7} parent=0
    #allocation2 [shape = 'u8[393216]{0}', space=vmem, size = 0x60000, scoped, tag = 'input window, operand 1, single buffered']
    #allocation3 [shape = 's32[1]{0}', space=sflag, size = 0x4, scoped, tag = 'scoped memory for gru_fc_forward.7']
    %10 = vsyncpa [#allocation3], 0
    // Predicated region
    $region2: #{gru_fc_forward.7} parent=1 // pred_check
      _
    $region3: #{gru_fc_forward.7} parent=1 // pred_check_branch
      %12 = sbr.rel (0) target = $region5
    $region4: #{gru_fc_forward.7} parent=1 // pred_region
      _
    $region5: #{gru_fc_forward.7} parent=1 // pred_fallthru
      _
    // Predicated region
    $region6: #{gru_fc_forward.7} parent=1 // pred_check
      _
    $region7: #{gru_fc_forward.7} parent=1 // pred_check_branch
      %14 = sbr.rel (0) target = $region9
    $region8: #{gru_fc_forward.7} parent=1 // pred_region
      %s16 = ssub.s32 12288, 12288
      %17 = vsyncadd [#allocation3], %s16
      %s18 = sshll.u32 [#allocation2], 4
      %s19 = int_to_ptr.vmem [resolvable:$true] %s18
      %24 = dma.hbm_to_vmem [thread:$0]  %s1, 12288, %s19, [#allocation3], 384, 384, 24
    $region9: #{gru_fc_forward.7} parent=1 // pred_fallthru
      _
    // Predicated region
    $region10: #{gru_fc_forward.7} parent=1 // pred_check
      _
    $region11: #{gru_fc_forward.7} parent=1 // pred_check_branch
      %26 = sbr.rel (0) target = $region13
    $region12: #{gru_fc_forward.7} parent=1 // pred_region
      _
    $region13: #{gru_fc_forward.7} parent=1 // pred_fallthru
      _
    // Predicated region
    $region14: #{gru_fc_forward.7} parent=1 // pred_check
      _
    $region15: #{gru_fc_forward.7} parent=1 // pred_check_branch
      %28 = sbr.rel (0) target = $region17
    $region16: #{gru_fc_forward.7} parent=1 // pred_region
      %29 = dma.done [#allocation3], 12288
    $region17: #{gru_fc_forward.7} parent=1 // pred_fallthru
      _
    %v30 = vld [vmem:[%s0] sm:$0xff]
    %v31 = vld [vmem:[%s0 + $0x8] sm:$0xff]
    %v32 = vld [vmem:[%s0 + $0x10] sm:$0xff]
    %v33 = vld [vmem:[%s0 + $0x18] sm:$0xff]
    %v34 = vld [vmem:[%s0 + $0x20] sm:$0xff]
    %v35 = vld [vmem:[%s0 + $0x28] sm:$0xff]
    %v36 = vld [vmem:[%s0 + $0x30] sm:$0xff]
    %v37 = vld [vmem:[%s0 + $0x38] sm:$0xff]
    %v38 = vld [vmem:[%s0 + $0x40] sm:$0xff]
    %v39 = vld [vmem:[%s0 + $0x48] sm:$0xff]
    %v40 = vld [vmem:[%s0 + $0x50] sm:$0xff]
    %v41 = vld [vmem:[%s0 + $0x58] sm:$0xff]
    %v42 = vld [vmem:[%s0 + $0x60] sm:$0xff]
    %v43 = vld [vmem:[%s0 + $0x68] sm:$0xff]
    %v44 = vld [vmem:[%s0 + $0x70] sm:$0xff]
    %v45 = vld [vmem:[%s0 + $0x78] sm:$0xff]
    %v46 = vld [vmem:[%s0 + $0x80] sm:$0xff]
    %v47 = vld [vmem:[%s0 + $0x88] sm:$0xff]
    %v48 = vld [vmem:[%s0 + $0x90] sm:$0xff]
    %v49 = vld [vmem:[%s0 + $0x98] sm:$0xff]
    %v50 = vld [vmem:[%s0 + $0xa0] sm:$0xff]
    %v51 = vld [vmem:[%s0 + $0xa8] sm:$0xff]
    %v52 = vld [vmem:[%s0 + $0xb0] sm:$0xff]
    %v53 = vld [vmem:[%s0 + $0xb8] sm:$0xff]
    %v54 = vld [vmem:[%s0 + $0xc0] sm:$0xff]
    %v55 = vld [vmem:[%s0 + $0xc8] sm:$0xff]
    %v56 = vld [vmem:[%s0 + $0xd0] sm:$0xff]
    %v57 = vld [vmem:[%s0 + $0xd8] sm:$0xff]
    %v58 = vld [vmem:[%s0 + $0xe0] sm:$0xff]
    %v59 = vld [vmem:[%s0 + $0xe8] sm:$0xff]
    %v60 = vld [vmem:[%s0 + $0xf0] sm:$0xff]
    %v61 = vld [vmem:[%s0 + $0xf8] sm:$0xff]
    %v62 = vld [vmem:[#allocation2] sm:$0xff]
    %v63 = vld [vmem:[#allocation2 + $0x8] sm:$0xff]
    %v64 = vld [vmem:[#allocation2 + $0x10] sm:$0xff]
    %v65 = vld [vmem:[#allocation2 + $0x18] sm:$0xff]
    %v66 = vld [vmem:[#allocation2 + $0x20] sm:$0xff]
    %v67 = vld [vmem:[#allocation2 + $0x28] sm:$0xff]
    %v68 = vld [vmem:[#allocation2 + $0x30] sm:$0xff]
    %v69 = vld [vmem:[#allocation2 + $0x38] sm:$0xff]
    %v70 = vld [vmem:[#allocation2 + $0x40] sm:$0xff]
    %v71 = vld [vmem:[#allocation2 + $0x48] sm:$0xff]
    %v72 = vld [vmem:[#allocation2 + $0x50] sm:$0xff]
    %v73 = vld [vmem:[#allocation2 + $0x58] sm:$0xff]
    %v74 = vld [vmem:[#allocation2 + $0x60] sm:$0xff]
    %v75 = vld [vmem:[#allocation2 + $0x68] sm:$0xff]
    %v76 = vld [vmem:[#allocation2 + $0x70] sm:$0xff]
    %v77 = vld [vmem:[#allocation2 + $0x78] sm:$0xff]
    %v78 = vld [vmem:[#allocation2 + $0x80] sm:$0xff]
    %v79 = vld [vmem:[#allocation2 + $0x88] sm:$0xff]
    %v80 = vld [vmem:[#allocation2 + $0x90] sm:$0xff]
    %v81 = vld [vmem:[#allocation2 + $0x98] sm:$0xff]
    %v82 = vld [vmem:[#allocation2 + $0xa0] sm:$0xff]
    %v83 = vld [vmem:[#allocation2 + $0xa8] sm:$0xff]
    %v84 = vld [vmem:[#allocation2 + $0xb0] sm:$0xff]
    %v85 = vld [vmem:[#allocation2 + $0xb8] sm:$0xff]
    %v86 = vld [vmem:[#allocation2 + $0xc0] sm:$0xff]
    %v87 = vld [vmem:[#allocation2 + $0xc8] sm:$0xff]
    %v88 = vld [vmem:[#allocation2 + $0xd0] sm:$0xff]
    %v89 = vld [vmem:[#allocation2 + $0xd8] sm:$0xff]
    %v90 = vld [vmem:[#allocation2 + $0xe0] sm:$0xff]
    %v91 = vld [vmem:[#allocation2 + $0xe8] sm:$0xff]
    %v92 = vld [vmem:[#allocation2 + $0xf0] sm:$0xff]
    %v93 = vld [vmem:[#allocation2 + $0xf8] sm:$0xff]
    %v94 = vld [vmem:[#allocation2 + $0x100] sm:$0xff]
    %v95 = vld [vmem:[#allocation2 + $0x108] sm:$0xff]
    %v96 = vld [vmem:[#allocation2 + $0x110] sm:$0xff]
    %v97 = vld [vmem:[#allocation2 + $0x118] sm:$0xff]
    %v98 = vld [vmem:[#allocation2 + $0x120] sm:$0xff]
    %v99 = vld [vmem:[#allocation2 + $0x128] sm:$0xff]
    %v100 = vld [vmem:[#allocation2 + $0x130] sm:$0xff]
    %v101 = vld [vmem:[#allocation2 + $0x138] sm:$0xff]
    %v102 = vld [vmem:[#allocation2 + $0x140] sm:$0xff]
    %v103 = vld [vmem:[#allocation2 + $0x148] sm:$0xff]
    %v104 = vld [vmem:[#allocation2 + $0x150] sm:$0xff]
    %v105 = vld [vmem:[#allocation2 + $0x158] sm:$0xff]
    %v106 = vld [vmem:[#allocation2 + $0x160] sm:$0xff]
    %v107 = vld [vmem:[#allocation2 + $0x168] sm:$0xff]
    %v108 = vld [vmem:[#allocation2 + $0x170] sm:$0xff]
    %v109 = vld [vmem:[#allocation2 + $0x178] sm:$0xff]
    %v110 = vld [vmem:[#allocation2 + $0x180] sm:$0xff]
    %v111 = vld [vmem:[#allocation2 + $0x188] sm:$0xff]
    %v112 = vld [vmem:[#allocation2 + $0x190] sm:$0xff]
    %v113 = vld [vmem:[#allocation2 + $0x198] sm:$0xff]
    %v114 = vld [vmem:[#allocation2 + $0x1a0] sm:$0xff]
    %v115 = vld [vmem:[#allocation2 + $0x1a8] sm:$0xff]
    %v116 = vld [vmem:[#allocation2 + $0x1b0] sm:$0xff]
    %v117 = vld [vmem:[#allocation2 + $0x1b8] sm:$0xff]
    %v118 = vld [vmem:[#allocation2 + $0x1c0] sm:$0xff]
    %v119 = vld [vmem:[#allocation2 + $0x1c8] sm:$0xff]
    %v120 = vld [vmem:[#allocation2 + $0x1d0] sm:$0xff]
    %v121 = vld [vmem:[#allocation2 + $0x1d8] sm:$0xff]
    %v122 = vld [vmem:[#allocation2 + $0x1e0] sm:$0xff]
    %v123 = vld [vmem:[#allocation2 + $0x1e8] sm:$0xff]
    %v124 = vld [vmem:[#allocation2 + $0x1f0] sm:$0xff]
    %v125 = vld [vmem:[#allocation2 + $0x1f8] sm:$0xff]
    %v126 = vld [vmem:[#allocation2 + $0x200] sm:$0xff]
    %v127 = vld [vmem:[#allocation2 + $0x208] sm:$0xff]
    %v128 = vld [vmem:[#allocation2 + $0x210] sm:$0xff]
    %v129 = vld [vmem:[#allocation2 + $0x218] sm:$0xff]
    %v130 = vld [vmem:[#allocation2 + $0x220] sm:$0xff]
    %v131 = vld [vmem:[#allocation2 + $0x228] sm:$0xff]
    %v132 = vld [vmem:[#allocation2 + $0x230] sm:$0xff]
    %v133 = vld [vmem:[#allocation2 + $0x238] sm:$0xff]
    %v134 = vld [vmem:[#allocation2 + $0x240] sm:$0xff]
    %v135 = vld [vmem:[#allocation2 + $0x248] sm:$0xff]
    %v136 = vld [vmem:[#allocation2 + $0x250] sm:$0xff]
    %v137 = vld [vmem:[#allocation2 + $0x258] sm:$0xff]
    %v138 = vld [vmem:[#allocation2 + $0x260] sm:$0xff]
    %v139 = vld [vmem:[#allocation2 + $0x268] sm:$0xff]
    %v140 = vld [vmem:[#allocation2 + $0x270] sm:$0xff]
    %v141 = vld [vmem:[#allocation2 + $0x278] sm:$0xff]
    %v142 = vld [vmem:[#allocation2 + $0x280] sm:$0xff]
    %v143 = vld [vmem:[#allocation2 + $0x288] sm:$0xff]
    %v144 = vld [vmem:[#allocation2 + $0x290] sm:$0xff]
    %v145 = vld [vmem:[#allocation2 + $0x298] sm:$0xff]
    %v146 = vld [vmem:[#allocation2 + $0x2a0] sm:$0xff]
    %v147 = vld [vmem:[#allocation2 + $0x2a8] sm:$0xff]
    %v148 = vld [vmem:[#allocation2 + $0x2b0] sm:$0xff]
    %v149 = vld [vmem:[#allocation2 + $0x2b8] sm:$0xff]
    %v150 = vld [vmem:[#allocation2 + $0x2c0] sm:$0xff]
    %v151 = vld [vmem:[#allocation2 + $0x2c8] sm:$0xff]
    %v152 = vld [vmem:[#allocation2 + $0x2d0] sm:$0xff]
    %v153 = vld [vmem:[#allocation2 + $0x2d8] sm:$0xff]
    %v154 = vld [vmem:[#allocation2 + $0x2e0] sm:$0xff]
    %v155 = vld [vmem:[#allocation2 + $0x2e8] sm:$0xff]
    %v156 = vld [vmem:[#allocation2 + $0x2f0] sm:$0xff]
    %v157 = vld [vmem:[#allocation2 + $0x2f8] sm:$0xff]
    %v158 = vld [vmem:[%s2] sm:$0x3f]
    %v160 = vlaneseq
    %v161 = vshrl.u32 %v160, 7
    %v162 = vsub.s32 0, %v161
    %v163 = vrot.slane %v158, %v162
    %v164 = vlaneseq
    %v165 = vshrl.u32 %v164, 7
    %v166 = vsub.s32 1, %v165
    %v167 = vrot.slane %v158, %v166
    %v168 = vlaneseq
    %v169 = vshrl.u32 %v168, 7
    %v170 = vsub.s32 2, %v169
    %v171 = vrot.slane %v158, %v170
    %v172 = vlaneseq
    %v173 = vshrl.u32 %v172, 7
    %v174 = vsub.s32 3, %v173
    %v175 = vrot.slane %v158, %v174
    %v176 = vlaneseq
    %v177 = vshrl.u32 %v176, 7
    %v178 = vsub.s32 4, %v177
    %v179 = vrot.slane %v158, %v178
    %v180 = vlaneseq
    %v181 = vshrl.u32 %v180, 7
    %v182 = vsub.s32 5, %v181
    %v183 = vrot.slane %v158, %v182
    %v222 = vunpack.c.l.b16 %v30
    %v223 = vunpack.c.h.b16 %v30
    %v224 = vunpack.c.l.b16 %v31
    %v225 = vunpack.c.h.b16 %v31
    %v226 = vunpack.c.l.b16 %v32
    %v227 = vunpack.c.h.b16 %v32
    %v228 = vunpack.c.l.b16 %v33
    %v229 = vunpack.c.h.b16 %v33
    %v230 = vunpack.c.l.b16 %v34
    %v231 = vunpack.c.h.b16 %v34
    %v232 = vunpack.c.l.b16 %v35
    %v233 = vunpack.c.h.b16 %v35
    %v234 = vunpack.c.l.b16 %v36
    %v235 = vunpack.c.h.b16 %v36
    %v236 = vunpack.c.l.b16 %v37
    %v237 = vunpack.c.h.b16 %v37
    %v238 = vunpack.c.l.b16 %v38
    %v239 = vunpack.c.h.b16 %v38
    %v240 = vunpack.c.l.b16 %v39
    %v241 = vunpack.c.h.b16 %v39
    %v242 = vunpack.c.l.b16 %v40
    %v243 = vunpack.c.h.b16 %v40
    %v244 = vunpack.c.l.b16 %v41
    %v245 = vunpack.c.h.b16 %v41
    %v246 = vunpack.c.l.b16 %v42
    %v247 = vunpack.c.h.b16 %v42
    %v248 = vunpack.c.l.b16 %v43
    %v249 = vunpack.c.h.b16 %v43
    %v250 = vunpack.c.l.b16 %v44
    %v251 = vunpack.c.h.b16 %v44
    %v252 = vunpack.c.l.b16 %v45
    %v253 = vunpack.c.h.b16 %v45
    %v254 = vunpack.c.l.b16 %v46
    %v255 = vunpack.c.h.b16 %v46
    %v256 = vunpack.c.l.b16 %v47
    %v257 = vunpack.c.h.b16 %v47
    %v258 = vunpack.c.l.b16 %v48
    %v259 = vunpack.c.h.b16 %v48
    %v260 = vunpack.c.l.b16 %v49
    %v261 = vunpack.c.h.b16 %v49
    %v262 = vunpack.c.l.b16 %v50
    %v263 = vunpack.c.h.b16 %v50
    %v264 = vunpack.c.l.b16 %v51
    %v265 = vunpack.c.h.b16 %v51
    %v266 = vunpack.c.l.b16 %v52
    %v267 = vunpack.c.h.b16 %v52
    %v268 = vunpack.c.l.b16 %v53
    %v269 = vunpack.c.h.b16 %v53
    %v270 = vunpack.c.l.b16 %v54
    %v271 = vunpack.c.h.b16 %v54
    %v272 = vunpack.c.l.b16 %v55
    %v273 = vunpack.c.h.b16 %v55
    %v274 = vunpack.c.l.b16 %v56
    %v275 = vunpack.c.h.b16 %v56
    %v276 = vunpack.c.l.b16 %v57
    %v277 = vunpack.c.h.b16 %v57
    %v278 = vunpack.c.l.b16 %v58
    %v279 = vunpack.c.h.b16 %v58
    %v280 = vunpack.c.l.b16 %v59
    %v281 = vunpack.c.h.b16 %v59
    %v282 = vunpack.c.l.b16 %v60
    %v283 = vunpack.c.h.b16 %v60
    %v284 = vunpack.c.l.b16 %v61
    %v285 = vunpack.c.h.b16 %v61
    %v286 = vpack.c.b16 %v224, %v222
    %v287 = vpack.c.b16 %v225, %v223
    %v288 = vpack.c.b16 %v228, %v226
    %v289 = vpack.c.b16 %v229, %v227
    %v290 = vpack.c.b16 %v232, %v230
    %v291 = vpack.c.b16 %v233, %v231
    %v292 = vpack.c.b16 %v236, %v234
    %v293 = vpack.c.b16 %v237, %v235
    %v294 = vpack.c.b16 %v240, %v238
    %v295 = vpack.c.b16 %v241, %v239
    %v296 = vpack.c.b16 %v244, %v242
    %v297 = vpack.c.b16 %v245, %v243
    %v298 = vpack.c.b16 %v248, %v246
    %v299 = vpack.c.b16 %v249, %v247
    %v300 = vpack.c.b16 %v252, %v250
    %v301 = vpack.c.b16 %v253, %v251
    %v302 = vpack.c.b16 %v256, %v254
    %v303 = vpack.c.b16 %v257, %v255
    %v304 = vpack.c.b16 %v260, %v258
    %v305 = vpack.c.b16 %v261, %v259
    %v306 = vpack.c.b16 %v264, %v262
    %v307 = vpack.c.b16 %v265, %v263
    %v308 = vpack.c.b16 %v268, %v266
    %v309 = vpack.c.b16 %v269, %v267
    %v310 = vpack.c.b16 %v272, %v270
    %v311 = vpack.c.b16 %v273, %v271
    %v312 = vpack.c.b16 %v276, %v274
    %v313 = vpack.c.b16 %v277, %v275
    %v314 = vpack.c.b16 %v280, %v278
    %v315 = vpack.c.b16 %v281, %v279
    %v316 = vpack.c.b16 %v284, %v282
    %v317 = vpack.c.b16 %v285, %v283
    %v446 = vunpack.c.l.b16 %v62
    %v447 = vunpack.c.h.b16 %v62
    %v448 = vunpack.c.l.b16 %v63
    %v449 = vunpack.c.h.b16 %v63
    %v450 = vunpack.c.l.b16 %v64
    %v451 = vunpack.c.h.b16 %v64
    %v452 = vunpack.c.l.b16 %v65
    %v453 = vunpack.c.h.b16 %v65
    %v454 = vunpack.c.l.b16 %v66
    %v455 = vunpack.c.h.b16 %v66
    %v456 = vunpack.c.l.b16 %v67
    %v457 = vunpack.c.h.b16 %v67
    %v458 = vunpack.c.l.b16 %v68
    %v459 = vunpack.c.h.b16 %v68
    %v460 = vunpack.c.l.b16 %v69
    %v461 = vunpack.c.h.b16 %v69
    %v462 = vunpack.c.l.b16 %v70
    %v463 = vunpack.c.h.b16 %v70
    %v464 = vunpack.c.l.b16 %v71
    %v465 = vunpack.c.h.b16 %v71
    %v466 = vunpack.c.l.b16 %v72
    %v467 = vunpack.c.h.b16 %v72
    %v468 = vunpack.c.l.b16 %v73
    %v469 = vunpack.c.h.b16 %v73
    %v470 = vunpack.c.l.b16 %v74
    %v471 = vunpack.c.h.b16 %v74
    %v472 = vunpack.c.l.b16 %v75
    %v473 = vunpack.c.h.b16 %v75
    %v474 = vunpack.c.l.b16 %v76
    %v475 = vunpack.c.h.b16 %v76
    %v476 = vunpack.c.l.b16 %v77
    %v477 = vunpack.c.h.b16 %v77
    %v478 = vunpack.c.l.b16 %v78
    %v479 = vunpack.c.h.b16 %v78
    %v480 = vunpack.c.l.b16 %v79
    %v481 = vunpack.c.h.b16 %v79
    %v482 = vunpack.c.l.b16 %v80
    %v483 = vunpack.c.h.b16 %v80
    %v484 = vunpack.c.l.b16 %v81
    %v485 = vunpack.c.h.b16 %v81
    %v486 = vunpack.c.l.b16 %v82
    %v487 = vunpack.c.h.b16 %v82
    %v488 = vunpack.c.l.b16 %v83
    %v489 = vunpack.c.h.b16 %v83
    %v490 = vunpack.c.l.b16 %v84
    %v491 = vunpack.c.h.b16 %v84
    %v492 = vunpack.c.l.b16 %v85
    %v493 = vunpack.c.h.b16 %v85
    %v494 = vunpack.c.l.b16 %v86
    %v495 = vunpack.c.h.b16 %v86
    %v496 = vunpack.c.l.b16 %v87
    %v497 = vunpack.c.h.b16 %v87
    %v498 = vunpack.c.l.b16 %v88
    %v499 = vunpack.c.h.b16 %v88
    %v500 = vunpack.c.l.b16 %v89
    %v501 = vunpack.c.h.b16 %v89
    %v502 = vunpack.c.l.b16 %v90
    %v503 = vunpack.c.h.b16 %v90
    %v504 = vunpack.c.l.b16 %v91
    %v505 = vunpack.c.h.b16 %v91
    %v506 = vunpack.c.l.b16 %v92
    %v507 = vunpack.c.h.b16 %v92
    %v508 = vunpack.c.l.b16 %v93
    %v509 = vunpack.c.h.b16 %v93
    %v510 = vunpack.c.l.b16 %v94
    %v511 = vunpack.c.h.b16 %v94
    %v512 = vunpack.c.l.b16 %v95
    %v513 = vunpack.c.h.b16 %v95
    %v514 = vunpack.c.l.b16 %v96
    %v515 = vunpack.c.h.b16 %v96
    %v516 = vunpack.c.l.b16 %v97
    %v517 = vunpack.c.h.b16 %v97
    %v518 = vunpack.c.l.b16 %v98
    %v519 = vunpack.c.h.b16 %v98
    %v520 = vunpack.c.l.b16 %v99
    %v521 = vunpack.c.h.b16 %v99
    %v522 = vunpack.c.l.b16 %v100
    %v523 = vunpack.c.h.b16 %v100
    %v524 = vunpack.c.l.b16 %v101
    %v525 = vunpack.c.h.b16 %v101
    %v526 = vunpack.c.l.b16 %v102
    %v527 = vunpack.c.h.b16 %v102
    %v528 = vunpack.c.l.b16 %v103
    %v529 = vunpack.c.h.b16 %v103
    %v530 = vunpack.c.l.b16 %v104
    %v531 = vunpack.c.h.b16 %v104
    %v532 = vunpack.c.l.b16 %v105
    %v533 = vunpack.c.h.b16 %v105
    %v534 = vunpack.c.l.b16 %v106
    %v535 = vunpack.c.h.b16 %v106
    %v536 = vunpack.c.l.b16 %v107
    %v537 = vunpack.c.h.b16 %v107
    %v538 = vunpack.c.l.b16 %v108
    %v539 = vunpack.c.h.b16 %v108
    %v540 = vunpack.c.l.b16 %v109
    %v541 = vunpack.c.h.b16 %v109
    %v542 = vunpack.c.l.b16 %v110
    %v543 = vunpack.c.h.b16 %v110
    %v544 = vunpack.c.l.b16 %v111
    %v545 = vunpack.c.h.b16 %v111
    %v546 = vunpack.c.l.b16 %v112
    %v547 = vunpack.c.h.b16 %v112
    %v548 = vunpack.c.l.b16 %v113
    %v549 = vunpack.c.h.b16 %v113
    %v550 = vunpack.c.l.b16 %v114
    %v551 = vunpack.c.h.b16 %v114
    %v552 = vunpack.c.l.b16 %v115
    %v553 = vunpack.c.h.b16 %v115
    %v554 = vunpack.c.l.b16 %v116
    %v555 = vunpack.c.h.b16 %v116
    %v556 = vunpack.c.l.b16 %v117
    %v557 = vunpack.c.h.b16 %v117
    %v558 = vunpack.c.l.b16 %v118
    %v559 = vunpack.c.h.b16 %v118
    %v560 = vunpack.c.l.b16 %v119
    %v561 = vunpack.c.h.b16 %v119
    %v562 = vunpack.c.l.b16 %v120
    %v563 = vunpack.c.h.b16 %v120
    %v564 = vunpack.c.l.b16 %v121
    %v565 = vunpack.c.h.b16 %v121
    %v566 = vunpack.c.l.b16 %v122
    %v567 = vunpack.c.h.b16 %v122
    %v568 = vunpack.c.l.b16 %v123
    %v569 = vunpack.c.h.b16 %v123
    %v570 = vunpack.c.l.b16 %v124
    %v571 = vunpack.c.h.b16 %v124
    %v572 = vunpack.c.l.b16 %v125
    %v573 = vunpack.c.h.b16 %v125
    %v574 = vunpack.c.l.b16 %v126
    %v575 = vunpack.c.h.b16 %v126
    %v576 = vunpack.c.l.b16 %v127
    %v577 = vunpack.c.h.b16 %v127
    %v578 = vunpack.c.l.b16 %v128
    %v579 = vunpack.c.h.b16 %v128
    %v580 = vunpack.c.l.b16 %v129
    %v581 = vunpack.c.h.b16 %v129
    %v582 = vunpack.c.l.b16 %v130
    %v583 = vunpack.c.h.b16 %v130
    %v584 = vunpack.c.l.b16 %v131
    %v585 = vunpack.c.h.b16 %v131
    %v586 = vunpack.c.l.b16 %v132
    %v587 = vunpack.c.h.b16 %v132
    %v588 = vunpack.c.l.b16 %v133
    %v589 = vunpack.c.h.b16 %v133
    %v590 = vunpack.c.l.b16 %v134
    %v591 = vunpack.c.h.b16 %v134
    %v592 = vunpack.c.l.b16 %v135
    %v593 = vunpack.c.h.b16 %v135
    %v594 = vunpack.c.l.b16 %v136
    %v595 = vunpack.c.h.b16 %v136
    %v596 = vunpack.c.l.b16 %v137
    %v597 = vunpack.c.h.b16 %v137
    %v598 = vunpack.c.l.b16 %v138
    %v599 = vunpack.c.h.b16 %v138
    %v600 = vunpack.c.l.b16 %v139
    %v601 = vunpack.c.h.b16 %v139
    %v602 = vunpack.c.l.b16 %v140
    %v603 = vunpack.c.h.b16 %v140
    %v604 = vunpack.c.l.b16 %v141
    %v605 = vunpack.c.h.b16 %v141
    %v606 = vunpack.c.l.b16 %v142
    %v607 = vunpack.c.h.b16 %v142
    %v608 = vunpack.c.l.b16 %v143
    %v609 = vunpack.c.h.b16 %v143
    %v610 = vunpack.c.l.b16 %v144
    %v611 = vunpack.c.h.b16 %v144
    %v612 = vunpack.c.l.b16 %v145
    %v613 = vunpack.c.h.b16 %v145
    %v614 = vunpack.c.l.b16 %v146
    %v615 = vunpack.c.h.b16 %v146
    %v616 = vunpack.c.l.b16 %v147
    %v617 = vunpack.c.h.b16 %v147
    %v618 = vunpack.c.l.b16 %v148
    %v619 = vunpack.c.h.b16 %v148
    %v620 = vunpack.c.l.b16 %v149
    %v621 = vunpack.c.h.b16 %v149
    %v622 = vunpack.c.l.b16 %v150
    %v623 = vunpack.c.h.b16 %v150
    %v624 = vunpack.c.l.b16 %v151
    %v625 = vunpack.c.h.b16 %v151
    %v626 = vunpack.c.l.b16 %v152
    %v627 = vunpack.c.h.b16 %v152
    %v628 = vunpack.c.l.b16 %v153
    %v629 = vunpack.c.h.b16 %v153
    %v630 = vunpack.c.l.b16 %v154
    %v631 = vunpack.c.h.b16 %v154
    %v632 = vunpack.c.l.b16 %v155
    %v633 = vunpack.c.h.b16 %v155
    %v634 = vunpack.c.l.b16 %v156
    %v635 = vunpack.c.h.b16 %v156
    %v636 = vunpack.c.l.b16 %v157
    %v637 = vunpack.c.h.b16 %v157
    %v638 = vpack.c.b16 %v452, %v446
    %v639 = vpack.c.b16 %v453, %v447
    %v640 = vpack.c.b16 %v454, %v448
    %v641 = vpack.c.b16 %v455, %v449
    %v642 = vpack.c.b16 %v456, %v450
    %v643 = vpack.c.b16 %v457, %v451
    %v644 = vpack.c.b16 %v464, %v458
    %v645 = vpack.c.b16 %v465, %v459
    %v646 = vpack.c.b16 %v466, %v460
    %v647 = vpack.c.b16 %v467, %v461
    %v648 = vpack.c.b16 %v468, %v462
    %v649 = vpack.c.b16 %v469, %v463
    %v650 = vpack.c.b16 %v476, %v470
    %v651 = vpack.c.b16 %v477, %v471
    %v652 = vpack.c.b16 %v478, %v472
    %v653 = vpack.c.b16 %v479, %v473
    %v654 = vpack.c.b16 %v480, %v474
    %v655 = vpack.c.b16 %v481, %v475
    %v656 = vpack.c.b16 %v488, %v482
    %v657 = vpack.c.b16 %v489, %v483
    %v658 = vpack.c.b16 %v490, %v484
    %v659 = vpack.c.b16 %v491, %v485
    %v660 = vpack.c.b16 %v492, %v486
    %v661 = vpack.c.b16 %v493, %v487
    %v662 = vpack.c.b16 %v500, %v494
    %v663 = vpack.c.b16 %v501, %v495
    %v664 = vpack.c.b16 %v502, %v496
    %v665 = vpack.c.b16 %v503, %v497
    %v666 = vpack.c.b16 %v504, %v498
    %v667 = vpack.c.b16 %v505, %v499
    %v668 = vpack.c.b16 %v512, %v506
    %v669 = vpack.c.b16 %v513, %v507
    %v670 = vpack.c.b16 %v514, %v508
    %v671 = vpack.c.b16 %v515, %v509
    %v672 = vpack.c.b16 %v516, %v510
    %v673 = vpack.c.b16 %v517, %v511
    %v674 = vpack.c.b16 %v524, %v518
    %v675 = vpack.c.b16 %v525, %v519
    %v676 = vpack.c.b16 %v526, %v520
    %v677 = vpack.c.b16 %v527, %v521
    %v678 = vpack.c.b16 %v528, %v522
    %v679 = vpack.c.b16 %v529, %v523
    %v680 = vpack.c.b16 %v536, %v530
    %v681 = vpack.c.b16 %v537, %v531
    %v682 = vpack.c.b16 %v538, %v532
    %v683 = vpack.c.b16 %v539, %v533
    %v684 = vpack.c.b16 %v540, %v534
    %v685 = vpack.c.b16 %v541, %v535
    %v686 = vpack.c.b16 %v548, %v542
    %v687 = vpack.c.b16 %v549, %v543
    %v688 = vpack.c.b16 %v550, %v544
    %v689 = vpack.c.b16 %v551, %v545
    %v690 = vpack.c.b16 %v552, %v546
    %v691 = vpack.c.b16 %v553, %v547
    %v692 = vpack.c.b16 %v560, %v554
    %v693 = vpack.c.b16 %v561, %v555
    %v694 = vpack.c.b16 %v562, %v556
    %v695 = vpack.c.b16 %v563, %v557
    %v696 = vpack.c.b16 %v564, %v558
    %v697 = vpack.c.b16 %v565, %v559
    %v698 = vpack.c.b16 %v572, %v566
    %v699 = vpack.c.b16 %v573, %v567
    %v700 = vpack.c.b16 %v574, %v568
    %v701 = vpack.c.b16 %v575, %v569
    %v702 = vpack.c.b16 %v576, %v570
    %v703 = vpack.c.b16 %v577, %v571
    %v704 = vpack.c.b16 %v584, %v578
    %v705 = vpack.c.b16 %v585, %v579
    %v706 = vpack.c.b16 %v586, %v580
    %v707 = vpack.c.b16 %v587, %v581
    %v708 = vpack.c.b16 %v588, %v582
    %v709 = vpack.c.b16 %v589, %v583
    %v710 = vpack.c.b16 %v596, %v590
    %v711 = vpack.c.b16 %v597, %v591
    %v712 = vpack.c.b16 %v598, %v592
    %v713 = vpack.c.b16 %v599, %v593
    %v714 = vpack.c.b16 %v600, %v594
    %v715 = vpack.c.b16 %v601, %v595
    %v716 = vpack.c.b16 %v608, %v602
    %v717 = vpack.c.b16 %v609, %v603
    %v718 = vpack.c.b16 %v610, %v604
    %v719 = vpack.c.b16 %v611, %v605
    %v720 = vpack.c.b16 %v612, %v606
    %v721 = vpack.c.b16 %v613, %v607
    %v722 = vpack.c.b16 %v620, %v614
    %v723 = vpack.c.b16 %v621, %v615
    %v724 = vpack.c.b16 %v622, %v616
    %v725 = vpack.c.b16 %v623, %v617
    %v726 = vpack.c.b16 %v624, %v618
    %v727 = vpack.c.b16 %v625, %v619
    %v728 = vpack.c.b16 %v632, %v626
    %v729 = vpack.c.b16 %v633, %v627
    %v730 = vpack.c.b16 %v634, %v628
    %v731 = vpack.c.b16 %v635, %v629
    %v732 = vpack.c.b16 %v636, %v630
    %v733 = vpack.c.b16 %v637, %v631
    %830 = vmatprep.subr.bf16.mxu0 %v639
    %831 = vmatpush1.bf16.msra.mxu0 %v638
    %832 = vmatprep.subr.bf16.mxu0 %v645
    %833 = vmatpush1.bf16.msra.mxu0 %v644
    %834 = vmatprep.subr.bf16.mxu0 %v651
    %835 = vmatpush1.bf16.msra.mxu0 %v650
    %836 = vmatprep.subr.bf16.mxu0 %v657
    %837 = vmatpush1.bf16.msra.mxu0 %v656
    %838 = vmatprep.subr.bf16.mxu0 %v663
    %839 = vmatpush1.bf16.msra.mxu0 %v662
    %840 = vmatprep.subr.bf16.mxu0 %v669
    %841 = vmatpush1.bf16.msra.mxu0 %v668
    %842 = vmatprep.subr.bf16.mxu0 %v675
    %843 = vmatpush1.bf16.msra.mxu0 %v674
    %844 = vmatprep.subr.bf16.mxu0 %v681
    %845 = vmatpush1.bf16.msra.mxu0 %v680
    %846 = vmatprep.subr.bf16.mxu0 %v687
    %847 = vmatpush1.bf16.msra.mxu0 %v686
    %848 = vmatprep.subr.bf16.mxu0 %v693
    %849 = vmatpush1.bf16.msra.mxu0 %v692
    %850 = vmatprep.subr.bf16.mxu0 %v699
    %851 = vmatpush1.bf16.msra.mxu0 %v698
    %852 = vmatprep.subr.bf16.mxu0 %v705
    %853 = vmatpush1.bf16.msra.mxu0 %v704
    %854 = vmatprep.subr.bf16.mxu0 %v711
    %855 = vmatpush1.bf16.msra.mxu0 %v710
    %856 = vmatprep.subr.bf16.mxu0 %v717
    %857 = vmatpush1.bf16.msra.mxu0 %v716
    %858 = vmatprep.subr.bf16.mxu0 %v723
    %859 = vmatpush1.bf16.msra.mxu0 %v722
    %860 = vmatprep.subr.bf16.mxu0 %v729
    %861 = vmatpush1.bf16.msra.mxu0 %v728
    %862 = vmatprep.mubr.bf16.mxu0 %v287
    %863 = vmatmul.mubr.bf16.gmra.mrb[0].mxu0 %v286
    %v864 = vpop.f32.mrb[0].mxu0
    %v865 = vadd.f32 %v163, %v864
    %v866 = vpop.f32.mrb[0].mxu0
    %v867 = vadd.f32 %v167, %v866
    %v868 = vpop.f32.mrb[0].mxu0
    %v869 = vadd.f32 %v163, %v868
    %v870 = vpop.f32.mrb[0].mxu0
    %v871 = vadd.f32 %v167, %v870
    %872 = vmatprep.mubr.bf16.mxu0 %v289
    %873 = vmatmul.mubr.bf16.gmra.mrb[0].mxu0 %v288
    %v874 = vpop.f32.mrb[0].mxu0
    %v875 = vadd.f32 %v163, %v874
    %v876 = vpop.f32.mrb[0].mxu0
    %v877 = vadd.f32 %v167, %v876
    %v878 = vpop.f32.mrb[0].mxu0
    %v879 = vadd.f32 %v163, %v878
    %v880 = vpop.f32.mrb[0].mxu0
    %v881 = vadd.f32 %v167, %v880
    %882 = vmatprep.mubr.bf16.mxu0 %v291
    %883 = vmatmul.mubr.bf16.gmra.mrb[0].mxu0 %v290
    %v884 = vpop.f32.mrb[0].mxu0
    %v885 = vadd.f32 %v163, %v884
    %v886 = vpop.f32.mrb[0].mxu0
    %v887 = vadd.f32 %v167, %v886
    %v888 = vpop.f32.mrb[0].mxu0
    %v889 = vadd.f32 %v163, %v888
    %v890 = vpop.f32.mrb[0].mxu0
    %v891 = vadd.f32 %v167, %v890
    %892 = vmatprep.mubr.bf16.mxu0 %v293
    %893 = vmatmul.mubr.bf16.gmra.mrb[0].mxu0 %v292
    %v894 = vpop.f32.mrb[0].mxu0
    %v895 = vadd.f32 %v163, %v894
    %v896 = vpop.f32.mrb[0].mxu0
    %v897 = vadd.f32 %v167, %v896
    %v898 = vpop.f32.mrb[0].mxu0
    %v899 = vadd.f32 %v163, %v898
    %v900 = vpop.f32.mrb[0].mxu0
    %v901 = vadd.f32 %v167, %v900
    %902 = vmatprep.mubr.bf16.mxu0 %v295
    %903 = vmatmul.mubr.bf16.gmra.mrb[0].mxu0 %v294
    %v904 = vpop.f32.mrb[0].mxu0
    %v905 = vadd.f32 %v163, %v904
    %v906 = vpop.f32.mrb[0].mxu0
    %v907 = vadd.f32 %v167, %v906
    %v908 = vpop.f32.mrb[0].mxu0
    %v909 = vadd.f32 %v163, %v908
    %v910 = vpop.f32.mrb[0].mxu0
    %v911 = vadd.f32 %v167, %v910
    %912 = vmatprep.mubr.bf16.mxu0 %v297
    %913 = vmatmul.mubr.bf16.gmra.mrb[0].mxu0 %v296
    %v914 = vpop.f32.mrb[0].mxu0
    %v915 = vadd.f32 %v163, %v914
    %v916 = vpop.f32.mrb[0].mxu0
    %v917 = vadd.f32 %v167, %v916
    %v918 = vpop.f32.mrb[0].mxu0
    %v919 = vadd.f32 %v163, %v918
    %v920 = vpop.f32.mrb[0].mxu0
    %v921 = vadd.f32 %v167, %v920
    %922 = vmatprep.mubr.bf16.mxu0 %v299
    %923 = vmatmul.mubr.bf16.gmra.mrb[0].mxu0 %v298
    %v924 = vpop.f32.mrb[0].mxu0
    %v925 = vadd.f32 %v163, %v924
    %v926 = vpop.f32.mrb[0].mxu0
    %v927 = vadd.f32 %v167, %v926
    %v928 = vpop.f32.mrb[0].mxu0
    %v929 = vadd.f32 %v163, %v928
    %v930 = vpop.f32.mrb[0].mxu0
    %v931 = vadd.f32 %v167, %v930
    %932 = vmatprep.mubr.bf16.mxu0 %v301
    %933 = vmatmul.mubr.bf16.gmra.mrb[0].mxu0 %v300
    %v934 = vpop.f32.mrb[0].mxu0
    %v935 = vadd.f32 %v163, %v934
    %v936 = vpop.f32.mrb[0].mxu0
    %v937 = vadd.f32 %v167, %v936
    %v938 = vpop.f32.mrb[0].mxu0
    %v939 = vadd.f32 %v163, %v938
    %v940 = vpop.f32.mrb[0].mxu0
    %v941 = vadd.f32 %v167, %v940
    %942 = vmatprep.mubr.bf16.mxu0 %v303
    %943 = vmatmul.mubr.bf16.gmra.mrb[0].mxu0 %v302
    %v944 = vpop.f32.mrb[0].mxu0
    %v945 = vadd.f32 %v163, %v944
    %v946 = vpop.f32.mrb[0].mxu0
    %v947 = vadd.f32 %v167, %v946
    %v948 = vpop.f32.mrb[0].mxu0
    %v949 = vadd.f32 %v163, %v948
    %v950 = vpop.f32.mrb[0].mxu0
    %v951 = vadd.f32 %v167, %v950
    %952 = vmatprep.mubr.bf16.mxu0 %v305
    %953 = vmatmul.mubr.bf16.gmra.mrb[0].mxu0 %v304
    %v954 = vpop.f32.mrb[0].mxu0
    %v955 = vadd.f32 %v163, %v954
    %v956 = vpop.f32.mrb[0].mxu0
    %v957 = vadd.f32 %v167, %v956
    %v958 = vpop.f32.mrb[0].mxu0
    %v959 = vadd.f32 %v163, %v958
    %v960 = vpop.f32.mrb[0].mxu0
    %v961 = vadd.f32 %v167, %v960
    %962 = vmatprep.mubr.bf16.mxu0 %v307
    %963 = vmatmul.mubr.bf16.gmra.mrb[0].mxu0 %v306
    %v964 = vpop.f32.mrb[0].mxu0
    %v965 = vadd.f32 %v163, %v964
    %v966 = vpop.f32.mrb[0].mxu0
    %v967 = vadd.f32 %v167, %v966
    %v968 = vpop.f32.mrb[0].mxu0
    %v969 = vadd.f32 %v163, %v968
    %v970 = vpop.f32.mrb[0].mxu0
    %v971 = vadd.f32 %v167, %v970
    %972 = vmatprep.mubr.bf16.mxu0 %v309
    %973 = vmatmul.mubr.bf16.gmra.mrb[0].mxu0 %v308
    %v974 = vpop.f32.mrb[0].mxu0
    %v975 = vadd.f32 %v163, %v974
    %v976 = vpop.f32.mrb[0].mxu0
    %v977 = vadd.f32 %v167, %v976
    %v978 = vpop.f32.mrb[0].mxu0
    %v979 = vadd.f32 %v163, %v978
    %v980 = vpop.f32.mrb[0].mxu0
    %v981 = vadd.f32 %v167, %v980
    %982 = vmatprep.mubr.bf16.mxu0 %v311
    %983 = vmatmul.mubr.bf16.gmra.mrb[0].mxu0 %v310
    %v984 = vpop.f32.mrb[0].mxu0
    %v985 = vadd.f32 %v163, %v984
    %v986 = vpop.f32.mrb[0].mxu0
    %v987 = vadd.f32 %v167, %v986
    %v988 = vpop.f32.mrb[0].mxu0
    %v989 = vadd.f32 %v163, %v988
    %v990 = vpop.f32.mrb[0].mxu0
    %v991 = vadd.f32 %v167, %v990
    %992 = vmatprep.mubr.bf16.mxu0 %v313
    %993 = vmatmul.mubr.bf16.gmra.mrb[0].mxu0 %v312
    %v994 = vpop.f32.mrb[0].mxu0
    %v995 = vadd.f32 %v163, %v994
    %v996 = vpop.f32.mrb[0].mxu0
    %v997 = vadd.f32 %v167, %v996
    %v998 = vpop.f32.mrb[0].mxu0
    %v999 = vadd.f32 %v163, %v998
    %v1000 = vpop.f32.mrb[0].mxu0
    %v1001 = vadd.f32 %v167, %v1000
    %1002 = vmatprep.mubr.bf16.mxu0 %v315
    %1003 = vmatmul.mubr.bf16.gmra.mrb[0].mxu0 %v314
    %v1004 = vpop.f32.mrb[0].mxu0
    %v1005 = vadd.f32 %v163, %v1004
    %v1006 = vpop.f32.mrb[0].mxu0
    %v1007 = vadd.f32 %v167, %v1006
    %v1008 = vpop.f32.mrb[0].mxu0
    %v1009 = vadd.f32 %v163, %v1008
    %v1010 = vpop.f32.mrb[0].mxu0
    %v1011 = vadd.f32 %v167, %v1010
    %1012 = vmatprep.mubr.bf16.mxu0 %v317
    %1013 = vmatmul.mubr.bf16.gmra.mrb[0].mxu0 %v316
    %v1014 = vpop.f32.mrb[0].mxu0
    %v1015 = vadd.f32 %v163, %v1014
    %v1016 = vpop.f32.mrb[0].mxu0
    %v1017 = vadd.f32 %v167, %v1016
    %v1018 = vpop.f32.mrb[0].mxu0
    %v1019 = vadd.f32 %v163, %v1018
    %v1020 = vpop.f32.mrb[0].mxu0
    %v1021 = vadd.f32 %v167, %v1020
    %1022 = vdwg.mxu0
    %1023 = vmatprep.subr.bf16.mxu0 %v641
    %1024 = vmatpush1.bf16.msra.mxu0 %v640
    %1025 = vmatprep.subr.bf16.mxu0 %v647
    %1026 = vmatpush1.bf16.msra.mxu0 %v646
    %1027 = vmatprep.subr.bf16.mxu0 %v653
    %1028 = vmatpush1.bf16.msra.mxu0 %v652
    %1029 = vmatprep.subr.bf16.mxu0 %v659
    %1030 = vmatpush1.bf16.msra.mxu0 %v658
    %1031 = vmatprep.subr.bf16.mxu0 %v665
    %1032 = vmatpush1.bf16.msra.mxu0 %v664
    %1033 = vmatprep.subr.bf16.mxu0 %v671
    %1034 = vmatpush1.bf16.msra.mxu0 %v670
    %1035 = vmatprep.subr.bf16.mxu0 %v677
    %1036 = vmatpush1.bf16.msra.mxu0 %v676
    %1037 = vmatprep.subr.bf16.mxu0 %v683
    %1038 = vmatpush1.bf16.msra.mxu0 %v682
    %1039 = vmatprep.subr.bf16.mxu0 %v689
    %1040 = vmatpush1.bf16.msra.mxu0 %v688
    %1041 = vmatprep.subr.bf16.mxu0 %v695
    %1042 = vmatpush1.bf16.msra.mxu0 %v694
    %1043 = vmatprep.subr.bf16.mxu0 %v701
    %1044 = vmatpush1.bf16.msra.mxu0 %v700
    %1045 = vmatprep.subr.bf16.mxu0 %v707
    %1046 = vmatpush1.bf16.msra.mxu0 %v706
    %1047 = vmatprep.subr.bf16.mxu0 %v713
    %1048 = vmatpush1.bf16.msra.mxu0 %v712
    %1049 = vmatprep.subr.bf16.mxu0 %v719
    %1050 = vmatpush1.bf16.msra.mxu0 %v718
    %1051 = vmatprep.subr.bf16.mxu0 %v725
    %1052 = vmatpush1.bf16.msra.mxu0 %v724
    %1053 = vmatprep.subr.bf16.mxu0 %v731
    %1054 = vmatpush1.bf16.msra.mxu0 %v730
    %1055 = vmatprep.mubr.bf16.mxu0 %v287
    %1056 = vmatmul.mubr.bf16.gmra.mrb[0].mxu0 %v286
    %v1057 = vpop.f32.mrb[0].mxu0
    %v1058 = vadd.f32 %v171, %v1057
    %v1059 = vpop.f32.mrb[0].mxu0
    %v1060 = vadd.f32 %v175, %v1059
    %v1061 = vpop.f32.mrb[0].mxu0
    %v1062 = vadd.f32 %v171, %v1061
    %v1063 = vpop.f32.mrb[0].mxu0
    %v1064 = vadd.f32 %v175, %v1063
    %1065 = vmatprep.mubr.bf16.mxu0 %v289
    %1066 = vmatmul.mubr.bf16.gmra.mrb[0].mxu0 %v288
    %v1067 = vpop.f32.mrb[0].mxu0
    %v1068 = vadd.f32 %v171, %v1067
    %v1069 = vpop.f32.mrb[0].mxu0
    %v1070 = vadd.f32 %v175, %v1069
    %v1071 = vpop.f32.mrb[0].mxu0
    %v1072 = vadd.f32 %v171, %v1071
    %v1073 = vpop.f32.mrb[0].mxu0
    %v1074 = vadd.f32 %v175, %v1073
    %1075 = vmatprep.mubr.bf16.mxu0 %v291
    %1076 = vmatmul.mubr.bf16.gmra.mrb[0].mxu0 %v290
    %v1077 = vpop.f32.mrb[0].mxu0
    %v1078 = vadd.f32 %v171, %v1077
    %v1079 = vpop.f32.mrb[0].mxu0
    %v1080 = vadd.f32 %v175, %v1079
    %v1081 = vpop.f32.mrb[0].mxu0
    %v1082 = vadd.f32 %v171, %v1081
    %v1083 = vpop.f32.mrb[0].mxu0
    %v1084 = vadd.f32 %v175, %v1083
    %1085 = vmatprep.mubr.bf16.mxu0 %v293
    %1086 = vmatmul.mubr.bf16.gmra.mrb[0].mxu0 %v292
    %v1087 = vpop.f32.mrb[0].mxu0
    %v1088 = vadd.f32 %v171, %v1087
    %v1089 = vpop.f32.mrb[0].mxu0
    %v1090 = vadd.f32 %v175, %v1089
    %v1091 = vpop.f32.mrb[0].mxu0
    %v1092 = vadd.f32 %v171, %v1091
    %v1093 = vpop.f32.mrb[0].mxu0
    %v1094 = vadd.f32 %v175, %v1093
    %1095 = vmatprep.mubr.bf16.mxu0 %v295
    %1096 = vmatmul.mubr.bf16.gmra.mrb[0].mxu0 %v294
    %v1097 = vpop.f32.mrb[0].mxu0
    %v1098 = vadd.f32 %v171, %v1097
    %v1099 = vpop.f32.mrb[0].mxu0
    %v1100 = vadd.f32 %v175, %v1099
    %v1101 = vpop.f32.mrb[0].mxu0
    %v1102 = vadd.f32 %v171, %v1101
    %v1103 = vpop.f32.mrb[0].mxu0
    %v1104 = vadd.f32 %v175, %v1103
    %1105 = vmatprep.mubr.bf16.mxu0 %v297
    %1106 = vmatmul.mubr.bf16.gmra.mrb[0].mxu0 %v296
    %v1107 = vpop.f32.mrb[0].mxu0
    %v1108 = vadd.f32 %v171, %v1107
    %v1109 = vpop.f32.mrb[0].mxu0
    %v1110 = vadd.f32 %v175, %v1109
    %v1111 = vpop.f32.mrb[0].mxu0
    %v1112 = vadd.f32 %v171, %v1111
    %v1113 = vpop.f32.mrb[0].mxu0
    %v1114 = vadd.f32 %v175, %v1113
    %1115 = vmatprep.mubr.bf16.mxu0 %v299
    %1116 = vmatmul.mubr.bf16.gmra.mrb[0].mxu0 %v298
    %v1117 = vpop.f32.mrb[0].mxu0
    %v1118 = vadd.f32 %v171, %v1117
    %v1119 = vpop.f32.mrb[0].mxu0
    %v1120 = vadd.f32 %v175, %v1119
    %v1121 = vpop.f32.mrb[0].mxu0
    %v1122 = vadd.f32 %v171, %v1121
    %v1123 = vpop.f32.mrb[0].mxu0
    %v1124 = vadd.f32 %v175, %v1123
    %1125 = vmatprep.mubr.bf16.mxu0 %v301
    %1126 = vmatmul.mubr.bf16.gmra.mrb[0].mxu0 %v300
    %v1127 = vpop.f32.mrb[0].mxu0
    %v1128 = vadd.f32 %v171, %v1127
    %v1129 = vpop.f32.mrb[0].mxu0
    %v1130 = vadd.f32 %v175, %v1129
    %v1131 = vpop.f32.mrb[0].mxu0
    %v1132 = vadd.f32 %v171, %v1131
    %v1133 = vpop.f32.mrb[0].mxu0
    %v1134 = vadd.f32 %v175, %v1133
    %1135 = vmatprep.mubr.bf16.mxu0 %v303
    %1136 = vmatmul.mubr.bf16.gmra.mrb[0].mxu0 %v302
    %v1137 = vpop.f32.mrb[0].mxu0
    %v1138 = vadd.f32 %v171, %v1137
    %v1139 = vpop.f32.mrb[0].mxu0
    %v1140 = vadd.f32 %v175, %v1139
    %v1141 = vpop.f32.mrb[0].mxu0
    %v1142 = vadd.f32 %v171, %v1141
    %v1143 = vpop.f32.mrb[0].mxu0
    %v1144 = vadd.f32 %v175, %v1143
    %1145 = vmatprep.mubr.bf16.mxu0 %v305
    %1146 = vmatmul.mubr.bf16.gmra.mrb[0].mxu0 %v304
    %v1147 = vpop.f32.mrb[0].mxu0
    %v1148 = vadd.f32 %v171, %v1147
    %v1149 = vpop.f32.mrb[0].mxu0
    %v1150 = vadd.f32 %v175, %v1149
    %v1151 = vpop.f32.mrb[0].mxu0
    %v1152 = vadd.f32 %v171, %v1151
    %v1153 = vpop.f32.mrb[0].mxu0
    %v1154 = vadd.f32 %v175, %v1153
    %1155 = vmatprep.mubr.bf16.mxu0 %v307
    %1156 = vmatmul.mubr.bf16.gmra.mrb[0].mxu0 %v306
    %v1157 = vpop.f32.mrb[0].mxu0
    %v1158 = vadd.f32 %v171, %v1157
    %v1159 = vpop.f32.mrb[0].mxu0
    %v1160 = vadd.f32 %v175, %v1159
    %v1161 = vpop.f32.mrb[0].mxu0
    %v1162 = vadd.f32 %v171, %v1161
    %v1163 = vpop.f32.mrb[0].mxu0
    %v1164 = vadd.f32 %v175, %v1163
    %1165 = vmatprep.mubr.bf16.mxu0 %v309
    %1166 = vmatmul.mubr.bf16.gmra.mrb[0].mxu0 %v308
    %v1167 = vpop.f32.mrb[0].mxu0
    %v1168 = vadd.f32 %v171, %v1167
    %v1169 = vpop.f32.mrb[0].mxu0
    %v1170 = vadd.f32 %v175, %v1169
    %v1171 = vpop.f32.mrb[0].mxu0
    %v1172 = vadd.f32 %v171, %v1171
    %v1173 = vpop.f32.mrb[0].mxu0
    %v1174 = vadd.f32 %v175, %v1173
    %1175 = vmatprep.mubr.bf16.mxu0 %v311
    %1176 = vmatmul.mubr.bf16.gmra.mrb[0].mxu0 %v310
    %v1177 = vpop.f32.mrb[0].mxu0
    %v1178 = vadd.f32 %v171, %v1177
    %v1179 = vpop.f32.mrb[0].mxu0
    %v1180 = vadd.f32 %v175, %v1179
    %v1181 = vpop.f32.mrb[0].mxu0
    %v1182 = vadd.f32 %v171, %v1181
    %v1183 = vpop.f32.mrb[0].mxu0
    %v1184 = vadd.f32 %v175, %v1183
    %1185 = vmatprep.mubr.bf16.mxu0 %v313
    %1186 = vmatmul.mubr.bf16.gmra.mrb[0].mxu0 %v312
    %v1187 = vpop.f32.mrb[0].mxu0
    %v1188 = vadd.f32 %v171, %v1187
    %v1189 = vpop.f32.mrb[0].mxu0
    %v1190 = vadd.f32 %v175, %v1189
    %v1191 = vpop.f32.mrb[0].mxu0
    %v1192 = vadd.f32 %v171, %v1191
    %v1193 = vpop.f32.mrb[0].mxu0
    %v1194 = vadd.f32 %v175, %v1193
    %1195 = vmatprep.mubr.bf16.mxu0 %v315
    %1196 = vmatmul.mubr.bf16.gmra.mrb[0].mxu0 %v314
    %v1197 = vpop.f32.mrb[0].mxu0
    %v1198 = vadd.f32 %v171, %v1197
    %v1199 = vpop.f32.mrb[0].mxu0
    %v1200 = vadd.f32 %v175, %v1199
    %v1201 = vpop.f32.mrb[0].mxu0
    %v1202 = vadd.f32 %v171, %v1201
    %v1203 = vpop.f32.mrb[0].mxu0
    %v1204 = vadd.f32 %v175, %v1203
    %1205 = vmatprep.mubr.bf16.mxu0 %v317
    %1206 = vmatmul.mubr.bf16.gmra.mrb[0].mxu0 %v316
    %v1207 = vpop.f32.mrb[0].mxu0
    %v1208 = vadd.f32 %v171, %v1207
    %v1209 = vpop.f32.mrb[0].mxu0
    %v1210 = vadd.f32 %v175, %v1209
    %v1211 = vpop.f32.mrb[0].mxu0
    %v1212 = vadd.f32 %v171, %v1211
    %v1213 = vpop.f32.mrb[0].mxu0
    %v1214 = vadd.f32 %v175, %v1213
    %1215 = vdwg.mxu0
    %1216 = vmatprep.subr.bf16.mxu0 %v643
    %1217 = vmatpush1.bf16.msra.mxu0 %v642
    %1218 = vmatprep.subr.bf16.mxu0 %v649
    %1219 = vmatpush1.bf16.msra.mxu0 %v648
    %1220 = vmatprep.subr.bf16.mxu0 %v655
    %1221 = vmatpush1.bf16.msra.mxu0 %v654
    %1222 = vmatprep.subr.bf16.mxu0 %v661
    %1223 = vmatpush1.bf16.msra.mxu0 %v660
    %1224 = vmatprep.subr.bf16.mxu0 %v667
    %1225 = vmatpush1.bf16.msra.mxu0 %v666
    %1226 = vmatprep.subr.bf16.mxu0 %v673
    %1227 = vmatpush1.bf16.msra.mxu0 %v672
    %1228 = vmatprep.subr.bf16.mxu0 %v679
    %1229 = vmatpush1.bf16.msra.mxu0 %v678
    %1230 = vmatprep.subr.bf16.mxu0 %v685
    %1231 = vmatpush1.bf16.msra.mxu0 %v684
    %1232 = vmatprep.subr.bf16.mxu0 %v691
    %1233 = vmatpush1.bf16.msra.mxu0 %v690
    %1234 = vmatprep.subr.bf16.mxu0 %v697
    %1235 = vmatpush1.bf16.msra.mxu0 %v696
    %1236 = vmatprep.subr.bf16.mxu0 %v703
    %1237 = vmatpush1.bf16.msra.mxu0 %v702
    %1238 = vmatprep.subr.bf16.mxu0 %v709
    %1239 = vmatpush1.bf16.msra.mxu0 %v708
    %1240 = vmatprep.subr.bf16.mxu0 %v715
    %1241 = vmatpush1.bf16.msra.mxu0 %v714
    %1242 = vmatprep.subr.bf16.mxu0 %v721
    %1243 = vmatpush1.bf16.msra.mxu0 %v720
    %1244 = vmatprep.subr.bf16.mxu0 %v727
    %1245 = vmatpush1.bf16.msra.mxu0 %v726
    %1246 = vmatprep.subr.bf16.mxu0 %v733
    %1247 = vmatpush1.bf16.msra.mxu0 %v732
    %1248 = vmatprep.mubr.bf16.mxu0 %v287
    %1249 = vmatmul.mubr.bf16.gmra.mrb[0].mxu0 %v286
    %v1250 = vpop.f32.mrb[0].mxu0
    %v1251 = vadd.f32 %v179, %v1250
    %v1252 = vpop.f32.mrb[0].mxu0
    %v1253 = vadd.f32 %v183, %v1252
    %v1254 = vpop.f32.mrb[0].mxu0
    %v1255 = vadd.f32 %v179, %v1254
    %v1256 = vpop.f32.mrb[0].mxu0
    %v1257 = vadd.f32 %v183, %v1256
    %1258 = vmatprep.mubr.bf16.mxu0 %v289
    %1259 = vmatmul.mubr.bf16.gmra.mrb[0].mxu0 %v288
    %v1260 = vpop.f32.mrb[0].mxu0
    %v1261 = vadd.f32 %v179, %v1260
    %v1262 = vpop.f32.mrb[0].mxu0
    %v1263 = vadd.f32 %v183, %v1262
    %v1264 = vpop.f32.mrb[0].mxu0
    %v1265 = vadd.f32 %v179, %v1264
    %v1266 = vpop.f32.mrb[0].mxu0
    %v1267 = vadd.f32 %v183, %v1266
    %1268 = vmatprep.mubr.bf16.mxu0 %v291
    %1269 = vmatmul.mubr.bf16.gmra.mrb[0].mxu0 %v290
    %v1270 = vpop.f32.mrb[0].mxu0
    %v1271 = vadd.f32 %v179, %v1270
    %v1272 = vpop.f32.mrb[0].mxu0
    %v1273 = vadd.f32 %v183, %v1272
    %v1274 = vpop.f32.mrb[0].mxu0
    %v1275 = vadd.f32 %v179, %v1274
    %v1276 = vpop.f32.mrb[0].mxu0
    %v1277 = vadd.f32 %v183, %v1276
    %1278 = vmatprep.mubr.bf16.mxu0 %v293
    %1279 = vmatmul.mubr.bf16.gmra.mrb[0].mxu0 %v292
    %v1280 = vpop.f32.mrb[0].mxu0
    %v1281 = vadd.f32 %v179, %v1280
    %v1282 = vpop.f32.mrb[0].mxu0
    %v1283 = vadd.f32 %v183, %v1282
    %v1284 = vpop.f32.mrb[0].mxu0
    %v1285 = vadd.f32 %v179, %v1284
    %v1286 = vpop.f32.mrb[0].mxu0
    %v1287 = vadd.f32 %v183, %v1286
    %1288 = vmatprep.mubr.bf16.mxu0 %v295
    %1289 = vmatmul.mubr.bf16.gmra.mrb[0].mxu0 %v294
    %v1290 = vpop.f32.mrb[0].mxu0
    %v1291 = vadd.f32 %v179, %v1290
    %v1292 = vpop.f32.mrb[0].mxu0
    %v1293 = vadd.f32 %v183, %v1292
    %v1294 = vpop.f32.mrb[0].mxu0
    %v1295 = vadd.f32 %v179, %v1294
    %v1296 = vpop.f32.mrb[0].mxu0
    %v1297 = vadd.f32 %v183, %v1296
    %1298 = vmatprep.mubr.bf16.mxu0 %v297
    %1299 = vmatmul.mubr.bf16.gmra.mrb[0].mxu0 %v296
    %v1300 = vpop.f32.mrb[0].mxu0
    %v1301 = vadd.f32 %v179, %v1300
    %v1302 = vpop.f32.mrb[0].mxu0
    %v1303 = vadd.f32 %v183, %v1302
    %v1304 = vpop.f32.mrb[0].mxu0
    %v1305 = vadd.f32 %v179, %v1304
    %v1306 = vpop.f32.mrb[0].mxu0
    %v1307 = vadd.f32 %v183, %v1306
    %1308 = vmatprep.mubr.bf16.mxu0 %v299
    %1309 = vmatmul.mubr.bf16.gmra.mrb[0].mxu0 %v298
    %v1310 = vpop.f32.mrb[0].mxu0
    %v1311 = vadd.f32 %v179, %v1310
    %v1312 = vpop.f32.mrb[0].mxu0
    %v1313 = vadd.f32 %v183, %v1312
    %v1314 = vpop.f32.mrb[0].mxu0
    %v1315 = vadd.f32 %v179, %v1314
    %v1316 = vpop.f32.mrb[0].mxu0
    %v1317 = vadd.f32 %v183, %v1316
    %1318 = vmatprep.mubr.bf16.mxu0 %v301
    %1319 = vmatmul.mubr.bf16.gmra.mrb[0].mxu0 %v300
    %v1320 = vpop.f32.mrb[0].mxu0
    %v1321 = vadd.f32 %v179, %v1320
    %v1322 = vpop.f32.mrb[0].mxu0
    %v1323 = vadd.f32 %v183, %v1322
    %v1324 = vpop.f32.mrb[0].mxu0
    %v1325 = vadd.f32 %v179, %v1324
    %v1326 = vpop.f32.mrb[0].mxu0
    %v1327 = vadd.f32 %v183, %v1326
    %1328 = vmatprep.mubr.bf16.mxu0 %v303
    %1329 = vmatmul.mubr.bf16.gmra.mrb[0].mxu0 %v302
    %v1330 = vpop.f32.mrb[0].mxu0
    %v1331 = vadd.f32 %v179, %v1330
    %v1332 = vpop.f32.mrb[0].mxu0
    %v1333 = vadd.f32 %v183, %v1332
    %v1334 = vpop.f32.mrb[0].mxu0
    %v1335 = vadd.f32 %v179, %v1334
    %v1336 = vpop.f32.mrb[0].mxu0
    %v1337 = vadd.f32 %v183, %v1336
    %1338 = vmatprep.mubr.bf16.mxu0 %v305
    %1339 = vmatmul.mubr.bf16.gmra.mrb[0].mxu0 %v304
    %v1340 = vpop.f32.mrb[0].mxu0
    %v1341 = vadd.f32 %v179, %v1340
    %v1342 = vpop.f32.mrb[0].mxu0
    %v1343 = vadd.f32 %v183, %v1342
    %v1344 = vpop.f32.mrb[0].mxu0
    %v1345 = vadd.f32 %v179, %v1344
    %v1346 = vpop.f32.mrb[0].mxu0
    %v1347 = vadd.f32 %v183, %v1346
    %1348 = vmatprep.mubr.bf16.mxu0 %v307
    %1349 = vmatmul.mubr.bf16.gmra.mrb[0].mxu0 %v306
    %v1350 = vpop.f32.mrb[0].mxu0
    %v1351 = vadd.f32 %v179, %v1350
    %v1352 = vpop.f32.mrb[0].mxu0
    %v1353 = vadd.f32 %v183, %v1352
    %v1354 = vpop.f32.mrb[0].mxu0
    %v1355 = vadd.f32 %v179, %v1354
    %v1356 = vpop.f32.mrb[0].mxu0
    %v1357 = vadd.f32 %v183, %v1356
    %1358 = vmatprep.mubr.bf16.mxu0 %v309
    %1359 = vmatmul.mubr.bf16.gmra.mrb[0].mxu0 %v308
    %v1360 = vpop.f32.mrb[0].mxu0
    %v1361 = vadd.f32 %v179, %v1360
    %v1362 = vpop.f32.mrb[0].mxu0
    %v1363 = vadd.f32 %v183, %v1362
    %v1364 = vpop.f32.mrb[0].mxu0
    %v1365 = vadd.f32 %v179, %v1364
    %v1366 = vpop.f32.mrb[0].mxu0
    %v1367 = vadd.f32 %v183, %v1366
    %1368 = vmatprep.mubr.bf16.mxu0 %v311
    %1369 = vmatmul.mubr.bf16.gmra.mrb[0].mxu0 %v310
    %v1370 = vpop.f32.mrb[0].mxu0
    %v1371 = vadd.f32 %v179, %v1370
    %v1372 = vpop.f32.mrb[0].mxu0
    %v1373 = vadd.f32 %v183, %v1372
    %v1374 = vpop.f32.mrb[0].mxu0
    %v1375 = vadd.f32 %v179, %v1374
    %v1376 = vpop.f32.mrb[0].mxu0
    %v1377 = vadd.f32 %v183, %v1376
    %1378 = vmatprep.mubr.bf16.mxu0 %v313
    %1379 = vmatmul.mubr.bf16.gmra.mrb[0].mxu0 %v312
    %v1380 = vpop.f32.mrb[0].mxu0
    %v1381 = vadd.f32 %v179, %v1380
    %v1382 = vpop.f32.mrb[0].mxu0
    %v1383 = vadd.f32 %v183, %v1382
    %v1384 = vpop.f32.mrb[0].mxu0
    %v1385 = vadd.f32 %v179, %v1384
    %v1386 = vpop.f32.mrb[0].mxu0
    %v1387 = vadd.f32 %v183, %v1386
    %1388 = vmatprep.mubr.bf16.mxu0 %v315
    %1389 = vmatmul.mubr.bf16.gmra.mrb[0].mxu0 %v314
    %v1390 = vpop.f32.mrb[0].mxu0
    %v1391 = vadd.f32 %v179, %v1390
    %v1392 = vpop.f32.mrb[0].mxu0
    %v1393 = vadd.f32 %v183, %v1392
    %v1394 = vpop.f32.mrb[0].mxu0
    %v1395 = vadd.f32 %v179, %v1394
    %v1396 = vpop.f32.mrb[0].mxu0
    %v1397 = vadd.f32 %v183, %v1396
    %1398 = vmatprep.mubr.bf16.mxu0 %v317
    %1399 = vmatmul.mubr.bf16.gmra.mrb[0].mxu0 %v316
    %v1400 = vpop.f32.mrb[0].mxu0
    %v1401 = vadd.f32 %v179, %v1400
    %v1402 = vpop.f32.mrb[0].mxu0
    %v1403 = vadd.f32 %v183, %v1402
    %v1404 = vpop.f32.mrb[0].mxu0
    %v1405 = vadd.f32 %v179, %v1404
    %v1406 = vpop.f32.mrb[0].mxu0
    %v1407 = vadd.f32 %v183, %v1406
    %1408 = vdwg.mxu0
    %1409 = vst [vmem:[%s3] sm:$0xff] %v865
    %1410 = vst [vmem:[%s3 + $0x8] sm:$0xff] %v867
    %1411 = vst [vmem:[%s3 + $0x10] sm:$0xff] %v1058
    %1412 = vst [vmem:[%s3 + $0x18] sm:$0xff] %v869
    %1413 = vst [vmem:[%s3 + $0x20] sm:$0xff] %v871
    %1414 = vst [vmem:[%s3 + $0x28] sm:$0xff] %v1062
    %1415 = vst [vmem:[%s3 + $0x30] sm:$0xff] %v875
    %1416 = vst [vmem:[%s3 + $0x38] sm:$0xff] %v877
    %1417 = vst [vmem:[%s3 + $0x40] sm:$0xff] %v1068
    %1418 = vst [vmem:[%s3 + $0x48] sm:$0xff] %v879
    %1419 = vst [vmem:[%s3 + $0x50] sm:$0xff] %v881
    %1420 = vst [vmem:[%s3 + $0x58] sm:$0xff] %v1072
    %1421 = vst [vmem:[%s3 + $0x60] sm:$0xff] %v885
    %1422 = vst [vmem:[%s3 + $0x68] sm:$0xff] %v887
    %1423 = vst [vmem:[%s3 + $0x70] sm:$0xff] %v1078
    %1424 = vst [vmem:[%s3 + $0x78] sm:$0xff] %v889
    %1425 = vst [vmem:[%s3 + $0x80] sm:$0xff] %v891
    %1426 = vst [vmem:[%s3 + $0x88] sm:$0xff] %v1082
    %1427 = vst [vmem:[%s3 + $0x90] sm:$0xff] %v895
    %1428 = vst [vmem:[%s3 + $0x98] sm:$0xff] %v897
    %1429 = vst [vmem:[%s3 + $0xa0] sm:$0xff] %v1088
    %1430 = vst [vmem:[%s3 + $0xa8] sm:$0xff] %v899
    %1431 = vst [vmem:[%s3 + $0xb0] sm:$0xff] %v901
    %1432 = vst [vmem:[%s3 + $0xb8] sm:$0xff] %v1092
    %1433 = vst [vmem:[%s3 + $0xc0] sm:$0xff] %v905
    %1434 = vst [vmem:[%s3 + $0xc8] sm:$0xff] %v907
    %1435 = vst [vmem:[%s3 + $0xd0] sm:$0xff] %v1098
    %1436 = vst [vmem:[%s3 + $0xd8] sm:$0xff] %v909
    %1437 = vst [vmem:[%s3 + $0xe0] sm:$0xff] %v911
    %1438 = vst [vmem:[%s3 + $0xe8] sm:$0xff] %v1102
    %1439 = vst [vmem:[%s3 + $0xf0] sm:$0xff] %v915
    %1440 = vst [vmem:[%s3 + $0xf8] sm:$0xff] %v917
    %1441 = vst [vmem:[%s3 + $0x100] sm:$0xff] %v1108
    %1442 = vst [vmem:[%s3 + $0x108] sm:$0xff] %v919
    %1443 = vst [vmem:[%s3 + $0x110] sm:$0xff] %v921
    %1444 = vst [vmem:[%s3 + $0x118] sm:$0xff] %v1112
    %1445 = vst [vmem:[%s3 + $0x120] sm:$0xff] %v925
    %1446 = vst [vmem:[%s3 + $0x128] sm:$0xff] %v927
    %1447 = vst [vmem:[%s3 + $0x130] sm:$0xff] %v1118
    %1448 = vst [vmem:[%s3 + $0x138] sm:$0xff] %v929
    %1449 = vst [vmem:[%s3 + $0x140] sm:$0xff] %v931
    %1450 = vst [vmem:[%s3 + $0x148] sm:$0xff] %v1122
    %1451 = vst [vmem:[%s3 + $0x150] sm:$0xff] %v935
    %1452 = vst [vmem:[%s3 + $0x158] sm:$0xff] %v937
    %1453 = vst [vmem:[%s3 + $0x160] sm:$0xff] %v1128
    %1454 = vst [vmem:[%s3 + $0x168] sm:$0xff] %v939
    %1455 = vst [vmem:[%s3 + $0x170] sm:$0xff] %v941
    %1456 = vst [vmem:[%s3 + $0x178] sm:$0xff] %v1132
    %1457 = vst [vmem:[%s3 + $0x180] sm:$0xff] %v945
    %1458 = vst [vmem:[%s3 + $0x188] sm:$0xff] %v947
    %1459 = vst [vmem:[%s3 + $0x190] sm:$0xff] %v1138
    %1460 = vst [vmem:[%s3 + $0x198] sm:$0xff] %v949
    %1461 = vst [vmem:[%s3 + $0x1a0] sm:$0xff] %v951
    %1462 = vst [vmem:[%s3 + $0x1a8] sm:$0xff] %v1142
    %1463 = vst [vmem:[%s3 + $0x1b0] sm:$0xff] %v955
    %1464 = vst [vmem:[%s3 + $0x1b8] sm:$0xff] %v957
    %1465 = vst [vmem:[%s3 + $0x1c0] sm:$0xff] %v1148
    %1466 = vst [vmem:[%s3 + $0x1c8] sm:$0xff] %v959
    %1467 = vst [vmem:[%s3 + $0x1d0] sm:$0xff] %v961
    %1468 = vst [vmem:[%s3 + $0x1d8] sm:$0xff] %v1152
    %1469 = vst [vmem:[%s3 + $0x1e0] sm:$0xff] %v965
    %1470 = vst [vmem:[%s3 + $0x1e8] sm:$0xff] %v967
    %1471 = vst [vmem:[%s3 + $0x1f0] sm:$0xff] %v1158
    %1472 = vst [vmem:[%s3 + $0x1f8] sm:$0xff] %v969
    %1473 = vst [vmem:[%s3 + $0x200] sm:$0xff] %v971
    %1474 = vst [vmem:[%s3 + $0x208] sm:$0xff] %v1162
    %1475 = vst [vmem:[%s3 + $0x210] sm:$0xff] %v975
    %1476 = vst [vmem:[%s3 + $0x218] sm:$0xff] %v977
    %1477 = vst [vmem:[%s3 + $0x220] sm:$0xff] %v1168
    %1478 = vst [vmem:[%s3 + $0x228] sm:$0xff] %v979
    %1479 = vst [vmem:[%s3 + $0x230] sm:$0xff] %v981
    %1480 = vst [vmem:[%s3 + $0x238] sm:$0xff] %v1172
    %1481 = vst [vmem:[%s3 + $0x240] sm:$0xff] %v985
    %1482 = vst [vmem:[%s3 + $0x248] sm:$0xff] %v987
    %1483 = vst [vmem:[%s3 + $0x250] sm:$0xff] %v1178
    %1484 = vst [vmem:[%s3 + $0x258] sm:$0xff] %v989
    %1485 = vst [vmem:[%s3 + $0x260] sm:$0xff] %v991
    %1486 = vst [vmem:[%s3 + $0x268] sm:$0xff] %v1182
    %1487 = vst [vmem:[%s3 + $0x270] sm:$0xff] %v995
    %1488 = vst [vmem:[%s3 + $0x278] sm:$0xff] %v997
    %1489 = vst [vmem:[%s3 + $0x280] sm:$0xff] %v1188
    %1490 = vst [vmem:[%s3 + $0x288] sm:$0xff] %v999
    %1491 = vst [vmem:[%s3 + $0x290] sm:$0xff] %v1001
    %1492 = vst [vmem:[%s3 + $0x298] sm:$0xff] %v1192
    %1493 = vst [vmem:[%s3 + $0x2a0] sm:$0xff] %v1005
    %1494 = vst [vmem:[%s3 + $0x2a8] sm:$0xff] %v1007
    %1495 = vst [vmem:[%s3 + $0x2b0] sm:$0xff] %v1198
    %1496 = vst [vmem:[%s3 + $0x2b8] sm:$0xff] %v1009
    %1497 = vst [vmem:[%s3 + $0x2c0] sm:$0xff] %v1011
    %1498 = vst [vmem:[%s3 + $0x2c8] sm:$0xff] %v1202
    %1499 = vst [vmem:[%s3 + $0x2d0] sm:$0xff] %v1015
    %1500 = vst [vmem:[%s3 + $0x2d8] sm:$0xff] %v1017
    %1501 = vst [vmem:[%s3 + $0x2e0] sm:$0xff] %v1208
    %1502 = vst [vmem:[%s3 + $0x2e8] sm:$0xff] %v1019
    %1503 = vst [vmem:[%s3 + $0x2f0] sm:$0xff] %v1021
    %1504 = vst [vmem:[%s3 + $0x2f8] sm:$0xff] %v1212
    %1505 = vst [vmem:[%s4] sm:$0xff] %v1060
    %1506 = vst [vmem:[%s4 + $0x8] sm:$0xff] %v1251
    %1507 = vst [vmem:[%s4 + $0x10] sm:$0xff] %v1253
    %1508 = vst [vmem:[%s4 + $0x18] sm:$0xff] %v1064
    %1509 = vst [vmem:[%s4 + $0x20] sm:$0xff] %v1255
    %1510 = vst [vmem:[%s4 + $0x28] sm:$0xff] %v1257
    %1511 = vst [vmem:[%s4 + $0x30] sm:$0xff] %v1070
    %1512 = vst [vmem:[%s4 + $0x38] sm:$0xff] %v1261
    %1513 = vst [vmem:[%s4 + $0x40] sm:$0xff] %v1263
    %1514 = vst [vmem:[%s4 + $0x48] sm:$0xff] %v1074
    %1515 = vst [vmem:[%s4 + $0x50] sm:$0xff] %v1265
    %1516 = vst [vmem:[%s4 + $0x58] sm:$0xff] %v1267
    %1517 = vst [vmem:[%s4 + $0x60] sm:$0xff] %v1080
    %1518 = vst [vmem:[%s4 + $0x68] sm:$0xff] %v1271
    %1519 = vst [vmem:[%s4 + $0x70] sm:$0xff] %v1273
    %1520 = vst [vmem:[%s4 + $0x78] sm:$0xff] %v1084
    %1521 = vst [vmem:[%s4 + $0x80] sm:$0xff] %v1275
    %1522 = vst [vmem:[%s4 + $0x88] sm:$0xff] %v1277
    %1523 = vst [vmem:[%s4 + $0x90] sm:$0xff] %v1090
    %1524 = vst [vmem:[%s4 + $0x98] sm:$0xff] %v1281
    %1525 = vst [vmem:[%s4 + $0xa0] sm:$0xff] %v1283
    %1526 = vst [vmem:[%s4 + $0xa8] sm:$0xff] %v1094
    %1527 = vst [vmem:[%s4 + $0xb0] sm:$0xff] %v1285
    %1528 = vst [vmem:[%s4 + $0xb8] sm:$0xff] %v1287
    %1529 = vst [vmem:[%s4 + $0xc0] sm:$0xff] %v1100
    %1530 = vst [vmem:[%s4 + $0xc8] sm:$0xff] %v1291
    %1531 = vst [vmem:[%s4 + $0xd0] sm:$0xff] %v1293
    %1532 = vst [vmem:[%s4 + $0xd8] sm:$0xff] %v1104
    %1533 = vst [vmem:[%s4 + $0xe0] sm:$0xff] %v1295
    %1534 = vst [vmem:[%s4 + $0xe8] sm:$0xff] %v1297
    %1535 = vst [vmem:[%s4 + $0xf0] sm:$0xff] %v1110
    %1536 = vst [vmem:[%s4 + $0xf8] sm:$0xff] %v1301
    %1537 = vst [vmem:[%s4 + $0x100] sm:$0xff] %v1303
    %1538 = vst [vmem:[%s4 + $0x108] sm:$0xff] %v1114
    %1539 = vst [vmem:[%s4 + $0x110] sm:$0xff] %v1305
    %1540 = vst [vmem:[%s4 + $0x118] sm:$0xff] %v1307
    %1541 = vst [vmem:[%s4 + $0x120] sm:$0xff] %v1120
    %1542 = vst [vmem:[%s4 + $0x128] sm:$0xff] %v1311
    %1543 = vst [vmem:[%s4 + $0x130] sm:$0xff] %v1313
    %1544 = vst [vmem:[%s4 + $0x138] sm:$0xff] %v1124
    %1545 = vst [vmem:[%s4 + $0x140] sm:$0xff] %v1315
    %1546 = vst [vmem:[%s4 + $0x148] sm:$0xff] %v1317
    %1547 = vst [vmem:[%s4 + $0x150] sm:$0xff] %v1130
    %1548 = vst [vmem:[%s4 + $0x158] sm:$0xff] %v1321
    %1549 = vst [vmem:[%s4 + $0x160] sm:$0xff] %v1323
    %1550 = vst [vmem:[%s4 + $0x168] sm:$0xff] %v1134
    %1551 = vst [vmem:[%s4 + $0x170] sm:$0xff] %v1325
    %1552 = vst [vmem:[%s4 + $0x178] sm:$0xff] %v1327
    %1553 = vst [vmem:[%s4 + $0x180] sm:$0xff] %v1140
    %1554 = vst [vmem:[%s4 + $0x188] sm:$0xff] %v1331
    %1555 = vst [vmem:[%s4 + $0x190] sm:$0xff] %v1333
    %1556 = vst [vmem:[%s4 + $0x198] sm:$0xff] %v1144
    %1557 = vst [vmem:[%s4 + $0x1a0] sm:$0xff] %v1335
    %1558 = vst [vmem:[%s4 + $0x1a8] sm:$0xff] %v1337
    %1559 = vst [vmem:[%s4 + $0x1b0] sm:$0xff] %v1150
    %1560 = vst [vmem:[%s4 + $0x1b8] sm:$0xff] %v1341
    %1561 = vst [vmem:[%s4 + $0x1c0] sm:$0xff] %v1343
    %1562 = vst [vmem:[%s4 + $0x1c8] sm:$0xff] %v1154
    %1563 = vst [vmem:[%s4 + $0x1d0] sm:$0xff] %v1345
    %1564 = vst [vmem:[%s4 + $0x1d8] sm:$0xff] %v1347
    %1565 = vst [vmem:[%s4 + $0x1e0] sm:$0xff] %v1160
    %1566 = vst [vmem:[%s4 + $0x1e8] sm:$0xff] %v1351
    %1567 = vst [vmem:[%s4 + $0x1f0] sm:$0xff] %v1353
    %1568 = vst [vmem:[%s4 + $0x1f8] sm:$0xff] %v1164
    %1569 = vst [vmem:[%s4 + $0x200] sm:$0xff] %v1355
    %1570 = vst [vmem:[%s4 + $0x208] sm:$0xff] %v1357
    %1571 = vst [vmem:[%s4 + $0x210] sm:$0xff] %v1170
    %1572 = vst [vmem:[%s4 + $0x218] sm:$0xff] %v1361
    %1573 = vst [vmem:[%s4 + $0x220] sm:$0xff] %v1363
    %1574 = vst [vmem:[%s4 + $0x228] sm:$0xff] %v1174
    %1575 = vst [vmem:[%s4 + $0x230] sm:$0xff] %v1365
    %1576 = vst [vmem:[%s4 + $0x238] sm:$0xff] %v1367
    %1577 = vst [vmem:[%s4 + $0x240] sm:$0xff] %v1180
    %1578 = vst [vmem:[%s4 + $0x248] sm:$0xff] %v1371
    %1579 = vst [vmem:[%s4 + $0x250] sm:$0xff] %v1373
    %1580 = vst [vmem:[%s4 + $0x258] sm:$0xff] %v1184
    %1581 = vst [vmem:[%s4 + $0x260] sm:$0xff] %v1375
    %1582 = vst [vmem:[%s4 + $0x268] sm:$0xff] %v1377
    %1583 = vst [vmem:[%s4 + $0x270] sm:$0xff] %v1190
    %1584 = vst [vmem:[%s4 + $0x278] sm:$0xff] %v1381
    %1585 = vst [vmem:[%s4 + $0x280] sm:$0xff] %v1383
    %1586 = vst [vmem:[%s4 + $0x288] sm:$0xff] %v1194
    %1587 = vst [vmem:[%s4 + $0x290] sm:$0xff] %v1385
    %1588 = vst [vmem:[%s4 + $0x298] sm:$0xff] %v1387
    %1589 = vst [vmem:[%s4 + $0x2a0] sm:$0xff] %v1200
    %1590 = vst [vmem:[%s4 + $0x2a8] sm:$0xff] %v1391
    %1591 = vst [vmem:[%s4 + $0x2b0] sm:$0xff] %v1393
    %1592 = vst [vmem:[%s4 + $0x2b8] sm:$0xff] %v1204
    %1593 = vst [vmem:[%s4 + $0x2c0] sm:$0xff] %v1395
    %1594 = vst [vmem:[%s4 + $0x2c8] sm:$0xff] %v1397
    %1595 = vst [vmem:[%s4 + $0x2d0] sm:$0xff] %v1210
    %1596 = vst [vmem:[%s4 + $0x2d8] sm:$0xff] %v1401
    %1597 = vst [vmem:[%s4 + $0x2e0] sm:$0xff] %v1403
    %1598 = vst [vmem:[%s4 + $0x2e8] sm:$0xff] %v1214
    %1599 = vst [vmem:[%s4 + $0x2f0] sm:$0xff] %v1405
    %1600 = vst [vmem:[%s4 + $0x2f8] sm:$0xff] %v1407
    // Predicated region
    $region18: #{gru_fc_forward.7} parent=1 // pred_check
      _
    $region19: #{gru_fc_forward.7} parent=1 // pred_check_branch
      %1602 = sbr.rel (0) target = $region21
    $region20: #{gru_fc_forward.7} parent=1 // pred_region
      _
    $region21: #{gru_fc_forward.7} parent=1 // pred_fallthru
      _
    // Predicated region
    $region22: #{gru_fc_forward.7} parent=1 // pred_check
      _
    $region23: #{gru_fc_forward.7} parent=1 // pred_check_branch
      %1604 = sbr.rel (0) target = $region25
    $region24: #{gru_fc_forward.7} parent=1 // pred_region
      _
    $region25: #{gru_fc_forward.7} parent=1 // pred_fallthru
      _
    // Predicated region
    $region26: #{gru_fc_forward.7} parent=1 // pred_check
      _
    $region27: #{gru_fc_forward.7} parent=1 // pred_check_branch
      %1606 = sbr.rel (0) target = $region29
    $region28: #{gru_fc_forward.7} parent=1 // pred_region
      _
    $region29: #{gru_fc_forward.7} parent=1 // pred_fallthru
      _
    // Predicated region
    $region30: #{gru_fc_forward.7} parent=1 // pred_check
      _
    $region31: #{gru_fc_forward.7} parent=1 // pred_check_branch
      %1608 = sbr.rel (0) target = $region33
    $region32: #{gru_fc_forward.7} parent=1 // pred_region
      _
    $region33: #{gru_fc_forward.7} parent=1 // pred_fallthru
      _
    %1609 = vsyncpa [#allocation3], 1

// kernel: squeeze.1
$region0: #{squeeze.1}
  %s0 = inlined_call_operand.vmem [shape: f32[64], index: 0, kind: input, shape index: {}]
  %s1 = inlined_call_operand.vmem [shape: f32[8,8], index: 1, kind: output, shape index: {}]
  $region1: #{squeeze.1} parent=0
    #allocation0 [shape = 'u8[4096]{0}', space=vmem, size = 0x1000, scoped, tag = 'scoped mem for input reshape']
    %s3 = sshllo.u32 0, 1
    %v4 = vld [vmem:[%s0] sm:%s3]
    %5 = vst [vmem:[#allocation0] sm:%s3] %v4
    %v6 = vld [vmem:[#allocation0] sm:$0x1]
    %vm7 = vcmask 64512
    %8 = vst.msk [vmem:[%s1] sm:$0x1] %vm7, %v6
    %v9 = vld [vmem:[#allocation0] sm:$0x1]
    %10 = vrot.lane.b32.xlu0 %v9, 120
    %v11 = vpop.permute.xlu0 %10
    %vm12 = vcmask 64512
    %s13 = scalar_lea.vmem %s1, 1
    %14 = vst.msk [vmem:[%s13] sm:$0x1] %vm12, %v11
    %v15 = vld [vmem:[#allocation0] sm:$0x1]
    %16 = vrot.lane.b32.xlu0 %v15, 112
    %v17 = vpop.permute.xlu0 %16
    %vm18 = vcmask 64512
    %s19 = scalar_lea.vmem %s1, 2
    %20 = vst.msk [vmem:[%s19] sm:$0x1] %vm18, %v17
    %v21 = vld [vmem:[#allocation0] sm:$0x1]
    %22 = vrot.lane.b32.xlu0 %v21, 104
    %v23 = vpop.permute.xlu0 %22
    %vm24 = vcmask 64512
    %s25 = scalar_lea.vmem %s1, 3
    %26 = vst.msk [vmem:[%s25] sm:$0x1] %vm24, %v23
    %v27 = vld [vmem:[#allocation0] sm:$0x1]
    %28 = vrot.lane.b32.xlu0 %v27, 96
    %v29 = vpop.permute.xlu0 %28
    %vm30 = vcmask 64512
    %s31 = scalar_lea.vmem %s1, 4
    %32 = vst.msk [vmem:[%s31] sm:$0x1] %vm30, %v29
    %v33 = vld [vmem:[#allocation0] sm:$0x1]
    %34 = vrot.lane.b32.xlu0 %v33, 88
    %v35 = vpop.permute.xlu0 %34
    %vm36 = vcmask 64512
    %s37 = scalar_lea.vmem %s1, 5
    %38 = vst.msk [vmem:[%s37] sm:$0x1] %vm36, %v35
    %v39 = vld [vmem:[#allocation0] sm:$0x1]
    %40 = vrot.lane.b32.xlu0 %v39, 80
    %v41 = vpop.permute.xlu0 %40
    %vm42 = vcmask 64512
    %s43 = scalar_lea.vmem %s1, 6
    %44 = vst.msk [vmem:[%s43] sm:$0x1] %vm42, %v41
    %v45 = vld [vmem:[#allocation0] sm:$0x1]
    %46 = vrot.lane.b32.xlu0 %v45, 72
    %v47 = vpop.permute.xlu0 %46
    %vm48 = vcmask 64512
    %s49 = scalar_lea.vmem %s1, 7
    %50 = vst.msk [vmem:[%s49] sm:$0x1] %vm48, %v47

// kernel: gru_fc_forward.9
$region0: #{gru_fc_forward.9}
  #allocation0 [shape = 'u32[]', space=smem, size = 0x4, offset = 0x4, fixed_abs, tag = 'smem constant byte address 0x4 - core index']
  #allocation1 [shape = 'u32[144,128]{1,0:T(1,128)}', space=vmem, size = 0x12000, scoped, tag = 'internal scratch']
  %s0 = inlined_call_operand.vmem [shape: bf16[256,256], index: 0, kind: input, shape index: {}]
  %s1 = inlined_call_operand.vmem [shape: bf16[64,256], index: 1, kind: input, shape index: {}]
  %s2 = inlined_call_operand.vmem [shape: f32[64,1], index: 2, kind: input, shape index: {}]
  %s3 = inlined_call_operand.vmem [shape: bf16[16,64], index: 3, kind: input, shape index: {}]
  %s4 = inlined_call_operand.vmem [shape: f32[16,1], index: 4, kind: input, shape index: {}]
  %s5 = inlined_call_operand.vmem [shape: bf16[8,16], index: 5, kind: input, shape index: {}]
  %s6 = inlined_call_operand.vmem [shape: f32[8,1], index: 6, kind: input, shape index: {}]
  %s7 = inlined_call_operand.vmem [shape: f32[8,256], index: 7, kind: output, shape index: {}]
  %s8 = sld [smem:[#allocation0]]
  $region38: #{gru_fc_forward.9} parent=0
    _
  %s10 = ssub.s32 1, %s8
  %s11 = scalar_select 0, %s10, %s8
  // Predicated region
  $region2: #{gru_fc_forward.9} parent=0 // pred_check
    _
  $region3: #{gru_fc_forward.9} parent=0 // pred_check_branch
    %13 = sbr.rel (0) target = $region5
  $region4: #{gru_fc_forward.9} parent=0 // pred_region
    _
  $region5: #{gru_fc_forward.9} parent=0 // pred_fallthru
    _
  // Predicated region
  $region6: #{gru_fc_forward.9} parent=0 // pred_check
    _
  $region7: #{gru_fc_forward.9} parent=0 // pred_check_branch
    %15 = sbr.rel (0) target = $region9
  $region8: #{gru_fc_forward.9} parent=0 // pred_region
    _
  $region9: #{gru_fc_forward.9} parent=0 // pred_fallthru
    _
  // Predicated region
  $region10: #{gru_fc_forward.9} parent=0 // pred_check
    _
  $region11: #{gru_fc_forward.9} parent=0 // pred_check_branch
    %17 = sbr.rel (0) target = $region13
  $region12: #{gru_fc_forward.9} parent=0 // pred_region
    _
  $region13: #{gru_fc_forward.9} parent=0 // pred_fallthru
    _
  // Predicated region
  $region14: #{gru_fc_forward.9} parent=0 // pred_check
    _
  $region15: #{gru_fc_forward.9} parent=0 // pred_check_branch
    %19 = sbr.rel (0) target = $region17
  $region16: #{gru_fc_forward.9} parent=0 // pred_region
    _
  $region17: #{gru_fc_forward.9} parent=0 // pred_fallthru
    _
  // Predicated region
  $region18: #{gru_fc_forward.9} parent=0 // pred_check
    _
  $region19: #{gru_fc_forward.9} parent=0 // pred_check_branch
    %21 = sbr.rel (0) target = $region21
  $region20: #{gru_fc_forward.9} parent=0 // pred_region
    _
  $region21: #{gru_fc_forward.9} parent=0 // pred_fallthru
    _
  // Predicated region
  $region22: #{gru_fc_forward.9} parent=0 // pred_check
    _
  $region23: #{gru_fc_forward.9} parent=0 // pred_check_branch
    %23 = sbr.rel (0) target = $region25
  $region24: #{gru_fc_forward.9} parent=0 // pred_region
    _
  $region25: #{gru_fc_forward.9} parent=0 // pred_fallthru
    _
  // Predicated region
  $region26: #{gru_fc_forward.9} parent=0 // pred_check
    _
  $region27: #{gru_fc_forward.9} parent=0 // pred_check_branch
    %25 = sbr.rel (0) target = $region29
  $region28: #{gru_fc_forward.9} parent=0 // pred_region
    _
  $region29: #{gru_fc_forward.9} parent=0 // pred_fallthru
    _
  %v27 = vld [vmem:[%s1] sm:$0xff]
  %v28 = vld [vmem:[%s1 + $0x8] sm:$0xff]
  %v29 = vld [vmem:[%s1 + $0x10] sm:$0xff]
  %v30 = vld [vmem:[%s1 + $0x18] sm:$0xff]
  %v31 = vld [vmem:[%s1 + $0x20] sm:$0xff]
  %v32 = vld [vmem:[%s1 + $0x28] sm:$0xff]
  %v33 = vld [vmem:[%s1 + $0x30] sm:$0xff]
  %v34 = vld [vmem:[%s1 + $0x38] sm:$0xff]
  %v35 = vld [vmem:[%s0] sm:$0xff]
  %v36 = vld [vmem:[%s0 + $0x8] sm:$0xff]
  %v37 = vld [vmem:[%s0 + $0x10] sm:$0xff]
  %v38 = vld [vmem:[%s0 + $0x18] sm:$0xff]
  %v39 = vld [vmem:[%s0 + $0x20] sm:$0xff]
  %v40 = vld [vmem:[%s0 + $0x28] sm:$0xff]
  %v41 = vld [vmem:[%s0 + $0x30] sm:$0xff]
  %v42 = vld [vmem:[%s0 + $0x38] sm:$0xff]
  %v43 = vld [vmem:[%s0 + $0x40] sm:$0xff]
  %v44 = vld [vmem:[%s0 + $0x48] sm:$0xff]
  %v45 = vld [vmem:[%s0 + $0x50] sm:$0xff]
  %v46 = vld [vmem:[%s0 + $0x58] sm:$0xff]
  %v47 = vld [vmem:[%s0 + $0x60] sm:$0xff]
  %v48 = vld [vmem:[%s0 + $0x68] sm:$0xff]
  %v49 = vld [vmem:[%s0 + $0x70] sm:$0xff]
  %v50 = vld [vmem:[%s0 + $0x78] sm:$0xff]
  %v51 = vld [vmem:[%s0 + $0x80] sm:$0xff]
  %v52 = vld [vmem:[%s0 + $0x88] sm:$0xff]
  %v53 = vld [vmem:[%s0 + $0x90] sm:$0xff]
  %v54 = vld [vmem:[%s0 + $0x98] sm:$0xff]
  %v55 = vld [vmem:[%s0 + $0xa0] sm:$0xff]
  %v56 = vld [vmem:[%s0 + $0xa8] sm:$0xff]
  %v57 = vld [vmem:[%s0 + $0xb0] sm:$0xff]
  %v58 = vld [vmem:[%s0 + $0xb8] sm:$0xff]
  %v59 = vld [vmem:[%s0 + $0xc0] sm:$0xff]
  %v60 = vld [vmem:[%s0 + $0xc8] sm:$0xff]
  %v61 = vld [vmem:[%s0 + $0xd0] sm:$0xff]
  %v62 = vld [vmem:[%s0 + $0xd8] sm:$0xff]
  %v63 = vld [vmem:[%s0 + $0xe0] sm:$0xff]
  %v64 = vld [vmem:[%s0 + $0xe8] sm:$0xff]
  %v65 = vld [vmem:[%s0 + $0xf0] sm:$0xff]
  %v66 = vld [vmem:[%s0 + $0xf8] sm:$0xff]
  %v67 = vld [vmem:[%s2] sm:$0xff]
  %v68 = vld [vmem:[%s2 + $0x8] sm:$0xff]
  %v69 = vld [vmem:[%s2 + $0x10] sm:$0xff]
  %v70 = vld [vmem:[%s2 + $0x18] sm:$0xff]
  %v71 = vld [vmem:[%s2 + $0x20] sm:$0xff]
  %v72 = vld [vmem:[%s2 + $0x28] sm:$0xff]
  %v73 = vld [vmem:[%s2 + $0x30] sm:$0xff]
  %v74 = vld [vmem:[%s2 + $0x38] sm:$0xff]
  %76 = vset.pattern.permute.xlu0 0
  %77 = vperm.xlu0 %76, %v67
  %v78 = vpop.permute.xlu0 %77
  %81 = vset.pattern.permute.xlu0 0
  %82 = vperm.xlu0 %81, %v68
  %v83 = vpop.permute.xlu0 %82
  %86 = vset.pattern.permute.xlu0 0
  %87 = vperm.xlu0 %86, %v69
  %v88 = vpop.permute.xlu0 %87
  %91 = vset.pattern.permute.xlu0 0
  %92 = vperm.xlu0 %91, %v70
  %v93 = vpop.permute.xlu0 %92
  %96 = vset.pattern.permute.xlu0 0
  %97 = vperm.xlu0 %96, %v71
  %v98 = vpop.permute.xlu0 %97
  %101 = vset.pattern.permute.xlu0 0
  %102 = vperm.xlu0 %101, %v72
  %v103 = vpop.permute.xlu0 %102
  %106 = vset.pattern.permute.xlu0 0
  %107 = vperm.xlu0 %106, %v73
  %v108 = vpop.permute.xlu0 %107
  %111 = vset.pattern.permute.xlu0 0
  %112 = vperm.xlu0 %111, %v74
  %v113 = vpop.permute.xlu0 %112
  %v123 = vunpack.c.l.b16 %v27
  %v124 = vunpack.c.h.b16 %v27
  %v125 = vunpack.c.l.b16 %v28
  %v126 = vunpack.c.h.b16 %v28
  %v127 = vunpack.c.l.b16 %v29
  %v128 = vunpack.c.h.b16 %v29
  %v129 = vunpack.c.l.b16 %v30
  %v130 = vunpack.c.h.b16 %v30
  %v131 = vunpack.c.l.b16 %v31
  %v132 = vunpack.c.h.b16 %v31
  %v133 = vunpack.c.l.b16 %v32
  %v134 = vunpack.c.h.b16 %v32
  %v135 = vunpack.c.l.b16 %v33
  %v136 = vunpack.c.h.b16 %v33
  %v137 = vunpack.c.l.b16 %v34
  %v138 = vunpack.c.h.b16 %v34
  %v139 = vpack.c.b16 %v125, %v123
  %v140 = vpack.c.b16 %v126, %v124
  %v141 = vpack.c.b16 %v129, %v127
  %v142 = vpack.c.b16 %v130, %v128
  %v143 = vpack.c.b16 %v133, %v131
  %v144 = vpack.c.b16 %v134, %v132
  %v145 = vpack.c.b16 %v137, %v135
  %v146 = vpack.c.b16 %v138, %v136
  %v187 = vunpack.c.l.b16 %v35
  %v188 = vunpack.c.h.b16 %v35
  %v189 = vunpack.c.l.b16 %v36
  %v190 = vunpack.c.h.b16 %v36
  %v191 = vunpack.c.l.b16 %v37
  %v192 = vunpack.c.h.b16 %v37
  %v193 = vunpack.c.l.b16 %v38
  %v194 = vunpack.c.h.b16 %v38
  %v195 = vunpack.c.l.b16 %v39
  %v196 = vunpack.c.h.b16 %v39
  %v197 = vunpack.c.l.b16 %v40
  %v198 = vunpack.c.h.b16 %v40
  %v199 = vunpack.c.l.b16 %v41
  %v200 = vunpack.c.h.b16 %v41
  %v201 = vunpack.c.l.b16 %v42
  %v202 = vunpack.c.h.b16 %v42
  %v203 = vunpack.c.l.b16 %v43
  %v204 = vunpack.c.h.b16 %v43
  %v205 = vunpack.c.l.b16 %v44
  %v206 = vunpack.c.h.b16 %v44
  %v207 = vunpack.c.l.b16 %v45
  %v208 = vunpack.c.h.b16 %v45
  %v209 = vunpack.c.l.b16 %v46
  %v210 = vunpack.c.h.b16 %v46
  %v211 = vunpack.c.l.b16 %v47
  %v212 = vunpack.c.h.b16 %v47
  %v213 = vunpack.c.l.b16 %v48
  %v214 = vunpack.c.h.b16 %v48
  %v215 = vunpack.c.l.b16 %v49
  %v216 = vunpack.c.h.b16 %v49
  %v217 = vunpack.c.l.b16 %v50
  %v218 = vunpack.c.h.b16 %v50
  %v219 = vunpack.c.l.b16 %v51
  %v220 = vunpack.c.h.b16 %v51
  %v221 = vunpack.c.l.b16 %v52
  %v222 = vunpack.c.h.b16 %v52
  %v223 = vunpack.c.l.b16 %v53
  %v224 = vunpack.c.h.b16 %v53
  %v225 = vunpack.c.l.b16 %v54
  %v226 = vunpack.c.h.b16 %v54
  %v227 = vunpack.c.l.b16 %v55
  %v228 = vunpack.c.h.b16 %v55
  %v229 = vunpack.c.l.b16 %v56
  %v230 = vunpack.c.h.b16 %v56
  %v231 = vunpack.c.l.b16 %v57
  %v232 = vunpack.c.h.b16 %v57
  %v233 = vunpack.c.l.b16 %v58
  %v234 = vunpack.c.h.b16 %v58
  %v235 = vunpack.c.l.b16 %v59
  %v236 = vunpack.c.h.b16 %v59
  %v237 = vunpack.c.l.b16 %v60
  %v238 = vunpack.c.h.b16 %v60
  %v239 = vunpack.c.l.b16 %v61
  %v240 = vunpack.c.h.b16 %v61
  %v241 = vunpack.c.l.b16 %v62
  %v242 = vunpack.c.h.b16 %v62
  %v243 = vunpack.c.l.b16 %v63
  %v244 = vunpack.c.h.b16 %v63
  %v245 = vunpack.c.l.b16 %v64
  %v246 = vunpack.c.h.b16 %v64
  %v247 = vunpack.c.l.b16 %v65
  %v248 = vunpack.c.h.b16 %v65
  %v249 = vunpack.c.l.b16 %v66
  %v250 = vunpack.c.h.b16 %v66
  %v251 = vpack.c.b16 %v189, %v187
  %v252 = vpack.c.b16 %v190, %v188
  %v253 = vpack.c.b16 %v193, %v191
  %v254 = vpack.c.b16 %v194, %v192
  %v255 = vpack.c.b16 %v197, %v195
  %v256 = vpack.c.b16 %v198, %v196
  %v257 = vpack.c.b16 %v201, %v199
  %v258 = vpack.c.b16 %v202, %v200
  %v259 = vpack.c.b16 %v205, %v203
  %v260 = vpack.c.b16 %v206, %v204
  %v261 = vpack.c.b16 %v209, %v207
  %v262 = vpack.c.b16 %v210, %v208
  %v263 = vpack.c.b16 %v213, %v211
  %v264 = vpack.c.b16 %v214, %v212
  %v265 = vpack.c.b16 %v217, %v215
  %v266 = vpack.c.b16 %v218, %v216
  %v267 = vpack.c.b16 %v221, %v219
  %v268 = vpack.c.b16 %v222, %v220
  %v269 = vpack.c.b16 %v225, %v223
  %v270 = vpack.c.b16 %v226, %v224
  %v271 = vpack.c.b16 %v229, %v227
  %v272 = vpack.c.b16 %v230, %v228
  %v273 = vpack.c.b16 %v233, %v231
  %v274 = vpack.c.b16 %v234, %v232
  %v275 = vpack.c.b16 %v237, %v235
  %v276 = vpack.c.b16 %v238, %v236
  %v277 = vpack.c.b16 %v241, %v239
  %v278 = vpack.c.b16 %v242, %v240
  %v279 = vpack.c.b16 %v245, %v243
  %v280 = vpack.c.b16 %v246, %v244
  %v281 = vpack.c.b16 %v249, %v247
  %v282 = vpack.c.b16 %v250, %v248
  %315 = vmatprep.subr.bf16.mxu0 %v252
  %316 = vmatpush1.bf16.msra.mxu0 %v251
  %317 = vmatprep.subr.bf16.mxu0 %v254
  %318 = vmatpush1.bf16.msra.mxu0 %v253
  %319 = vmatprep.subr.bf16.mxu0 %v256
  %320 = vmatpush1.bf16.msra.mxu0 %v255
  %321 = vmatprep.subr.bf16.mxu0 %v258
  %322 = vmatpush1.bf16.msra.mxu0 %v257
  %323 = vmatprep.subr.bf16.mxu0 %v260
  %324 = vmatpush1.bf16.msra.mxu0 %v259
  %325 = vmatprep.subr.bf16.mxu0 %v262
  %326 = vmatpush1.bf16.msra.mxu0 %v261
  %327 = vmatprep.subr.bf16.mxu0 %v264
  %328 = vmatpush1.bf16.msra.mxu0 %v263
  %329 = vmatprep.subr.bf16.mxu0 %v266
  %330 = vmatpush1.bf16.msra.mxu0 %v265
  %331 = vmatprep.subr.bf16.mxu0 %v268
  %332 = vmatpush1.bf16.msra.mxu0 %v267
  %333 = vmatprep.subr.bf16.mxu0 %v270
  %334 = vmatpush1.bf16.msra.mxu0 %v269
  %335 = vmatprep.subr.bf16.mxu0 %v272
  %336 = vmatpush1.bf16.msra.mxu0 %v271
  %337 = vmatprep.subr.bf16.mxu0 %v274
  %338 = vmatpush1.bf16.msra.mxu0 %v273
  %339 = vmatprep.subr.bf16.mxu0 %v276
  %340 = vmatpush1.bf16.msra.mxu0 %v275
  %341 = vmatprep.subr.bf16.mxu0 %v278
  %342 = vmatpush1.bf16.msra.mxu0 %v277
  %343 = vmatprep.subr.bf16.mxu0 %v280
  %344 = vmatpush1.bf16.msra.mxu0 %v279
  %345 = vmatprep.subr.bf16.mxu0 %v282
  %346 = vmatpush1.bf16.msra.mxu0 %v281
  %347 = vmatprep.mubr.bf16.mxu0 %v140
  %348 = vmatmul.mubr.bf16.gmra.mrb[0].mxu0 %v139
  %v349 = vpop.f32.mrb[0].mxu0
  %v350 = vadd.f32 %v78, %v349
  %v351 = vpop.f32.mrb[0].mxu0
  %v352 = vadd.f32 %v78, %v351
  %v353 = vpop.f32.mrb[0].mxu0
  %v354 = vadd.f32 %v83, %v353
  %v355 = vpop.f32.mrb[0].mxu0
  %v356 = vadd.f32 %v83, %v355
  %357 = vmatprep.mubr.bf16.mxu0 %v142
  %358 = vmatmul.mubr.bf16.gmra.mrb[0].mxu0 %v141
  %v359 = vpop.f32.mrb[0].mxu0
  %v360 = vadd.f32 %v88, %v359
  %v361 = vpop.f32.mrb[0].mxu0
  %v362 = vadd.f32 %v88, %v361
  %v363 = vpop.f32.mrb[0].mxu0
  %v364 = vadd.f32 %v93, %v363
  %v365 = vpop.f32.mrb[0].mxu0
  %v366 = vadd.f32 %v93, %v365
  %367 = vmatprep.mubr.bf16.mxu0 %v144
  %368 = vmatmul.mubr.bf16.gmra.mrb[0].mxu0 %v143
  %v369 = vpop.f32.mrb[0].mxu0
  %v370 = vadd.f32 %v98, %v369
  %v371 = vpop.f32.mrb[0].mxu0
  %v372 = vadd.f32 %v98, %v371
  %v373 = vpop.f32.mrb[0].mxu0
  %v374 = vadd.f32 %v103, %v373
  %v375 = vpop.f32.mrb[0].mxu0
  %v376 = vadd.f32 %v103, %v375
  %377 = vmatprep.mubr.bf16.mxu0 %v146
  %378 = vmatmul.mubr.bf16.gmra.mrb[0].mxu0 %v145
  %v379 = vpop.f32.mrb[0].mxu0
  %v380 = vadd.f32 %v108, %v379
  %v381 = vpop.f32.mrb[0].mxu0
  %v382 = vadd.f32 %v108, %v381
  %v383 = vpop.f32.mrb[0].mxu0
  %v384 = vadd.f32 %v113, %v383
  %v385 = vpop.f32.mrb[0].mxu0
  %v386 = vadd.f32 %v113, %v385
  %387 = vdwg.mxu0
  %v388 = vmul.f32 %v350, 0.5
  %v389 = vmul.f32 %v352, 0.5
  %v390 = vmul.f32 %v354, 0.5
  %v391 = vmul.f32 %v356, 0.5
  %v392 = vmul.f32 %v360, 0.5
  %v393 = vmul.f32 %v362, 0.5
  %v394 = vmul.f32 %v364, 0.5
  %v395 = vmul.f32 %v366, 0.5
  %v396 = vmul.f32 %v370, 0.5
  %v397 = vmul.f32 %v372, 0.5
  %v398 = vmul.f32 %v374, 0.5
  %v399 = vmul.f32 %v376, 0.5
  %v400 = vmul.f32 %v380, 0.5
  %v401 = vmul.f32 %v382, 0.5
  %v402 = vmul.f32 %v384, 0.5
  %v403 = vmul.f32 %v386, 0.5
  %v404 = vmul.f32 %v350, 0.044715
  %v405 = vmul.f32 %v352, 0.044715
  %v406 = vmul.f32 %v354, 0.044715
  %v407 = vmul.f32 %v356, 0.044715
  %v408 = vmul.f32 %v360, 0.044715
  %v409 = vmul.f32 %v362, 0.044715
  %v410 = vmul.f32 %v364, 0.044715
  %v411 = vmul.f32 %v366, 0.044715
  %v412 = vmul.f32 %v370, 0.044715
  %v413 = vmul.f32 %v372, 0.044715
  %v414 = vmul.f32 %v374, 0.044715
  %v415 = vmul.f32 %v376, 0.044715
  %v416 = vmul.f32 %v380, 0.044715
  %v417 = vmul.f32 %v382, 0.044715
  %v418 = vmul.f32 %v384, 0.044715
  %v419 = vmul.f32 %v386, 0.044715
  %v420 = vmul.f32 %v404, %v350
  %v421 = vmul.f32 %v405, %v352
  %v422 = vmul.f32 %v406, %v354
  %v423 = vmul.f32 %v407, %v356
  %v424 = vmul.f32 %v408, %v360
  %v425 = vmul.f32 %v409, %v362
  %v426 = vmul.f32 %v410, %v364
  %v427 = vmul.f32 %v411, %v366
  %v428 = vmul.f32 %v412, %v370
  %v429 = vmul.f32 %v413, %v372
  %v430 = vmul.f32 %v414, %v374
  %v431 = vmul.f32 %v415, %v376
  %v432 = vmul.f32 %v416, %v380
  %v433 = vmul.f32 %v417, %v382
  %v434 = vmul.f32 %v418, %v384
  %v435 = vmul.f32 %v419, %v386
  %v436 = vmul.f32 %v420, %v350
  %v437 = vmul.f32 %v421, %v352
  %v438 = vmul.f32 %v422, %v354
  %v439 = vmul.f32 %v423, %v356
  %v440 = vmul.f32 %v424, %v360
  %v441 = vmul.f32 %v425, %v362
  %v442 = vmul.f32 %v426, %v364
  %v443 = vmul.f32 %v427, %v366
  %v444 = vmul.f32 %v428, %v370
  %v445 = vmul.f32 %v429, %v372
  %v446 = vmul.f32 %v430, %v374
  %v447 = vmul.f32 %v431, %v376
  %v448 = vmul.f32 %v432, %v380
  %v449 = vmul.f32 %v433, %v382
  %v450 = vmul.f32 %v434, %v384
  %v451 = vmul.f32 %v435, %v386
  %v452 = vadd.f32 %v350, %v436
  %v453 = vadd.f32 %v352, %v437
  %v454 = vadd.f32 %v354, %v438
  %v455 = vadd.f32 %v356, %v439
  %v456 = vadd.f32 %v360, %v440
  %v457 = vadd.f32 %v362, %v441
  %v458 = vadd.f32 %v364, %v442
  %v459 = vadd.f32 %v366, %v443
  %v460 = vadd.f32 %v370, %v444
  %v461 = vadd.f32 %v372, %v445
  %v462 = vadd.f32 %v374, %v446
  %v463 = vadd.f32 %v376, %v447
  %v464 = vadd.f32 %v380, %v448
  %v465 = vadd.f32 %v382, %v449
  %v466 = vadd.f32 %v384, %v450
  %v467 = vadd.f32 %v386, %v451
  %v468 = vmul.f32 %v452, 0.7978846
  %v469 = vmul.f32 %v453, 0.7978846
  %v470 = vmul.f32 %v454, 0.7978846
  %v471 = vmul.f32 %v455, 0.7978846
  %v472 = vmul.f32 %v456, 0.7978846
  %v473 = vmul.f32 %v457, 0.7978846
  %v474 = vmul.f32 %v458, 0.7978846
  %v475 = vmul.f32 %v459, 0.7978846
  %v476 = vmul.f32 %v460, 0.7978846
  %v477 = vmul.f32 %v461, 0.7978846
  %v478 = vmul.f32 %v462, 0.7978846
  %v479 = vmul.f32 %v463, 0.7978846
  %v480 = vmul.f32 %v464, 0.7978846
  %v481 = vmul.f32 %v465, 0.7978846
  %v482 = vmul.f32 %v466, 0.7978846
  %v483 = vmul.f32 %v467, 0.7978846
  %v484 = vtanh.pop %v468
  %v485 = vtanh.pop %v469
  %v486 = vtanh.pop %v470
  %v487 = vtanh.pop %v471
  %v488 = vtanh.pop %v472
  %v489 = vtanh.pop %v473
  %v490 = vtanh.pop %v474
  %v491 = vtanh.pop %v475
  %v492 = vtanh.pop %v476
  %v493 = vtanh.pop %v477
  %v494 = vtanh.pop %v478
  %v495 = vtanh.pop %v479
  %v496 = vtanh.pop %v480
  %v497 = vtanh.pop %v481
  %v498 = vtanh.pop %v482
  %v499 = vtanh.pop %v483
  %v500 = vadd.f32 %v484, 1.0
  %v501 = vadd.f32 %v485, 1.0
  %v502 = vadd.f32 %v486, 1.0
  %v503 = vadd.f32 %v487, 1.0
  %v504 = vadd.f32 %v488, 1.0
  %v505 = vadd.f32 %v489, 1.0
  %v506 = vadd.f32 %v490, 1.0
  %v507 = vadd.f32 %v491, 1.0
  %v508 = vadd.f32 %v492, 1.0
  %v509 = vadd.f32 %v493, 1.0
  %v510 = vadd.f32 %v494, 1.0
  %v511 = vadd.f32 %v495, 1.0
  %v512 = vadd.f32 %v496, 1.0
  %v513 = vadd.f32 %v497, 1.0
  %v514 = vadd.f32 %v498, 1.0
  %v515 = vadd.f32 %v499, 1.0
  %v516 = vmul.f32 %v388, %v500
  %v517 = vmul.f32 %v389, %v501
  %v518 = vmul.f32 %v390, %v502
  %v519 = vmul.f32 %v391, %v503
  %v520 = vmul.f32 %v392, %v504
  %v521 = vmul.f32 %v393, %v505
  %v522 = vmul.f32 %v394, %v506
  %v523 = vmul.f32 %v395, %v507
  %v524 = vmul.f32 %v396, %v508
  %v525 = vmul.f32 %v397, %v509
  %v526 = vmul.f32 %v398, %v510
  %v527 = vmul.f32 %v399, %v511
  %v528 = vmul.f32 %v400, %v512
  %v529 = vmul.f32 %v401, %v513
  %v530 = vmul.f32 %v402, %v514
  %v531 = vmul.f32 %v403, %v515
  %v532 = vld [vmem:[%s3] sm:$0xf]
  %v533 = vld [vmem:[%s3 + $0x4] sm:$0xf]
  %v534 = vpack.c.bf16 %v518, %v516
  %v535 = vpack.c.bf16 %v519, %v517
  %v536 = vpack.c.bf16 %v522, %v520
  %v537 = vpack.c.bf16 %v523, %v521
  %v538 = vpack.c.bf16 %v526, %v524
  %v539 = vpack.c.bf16 %v527, %v525
  %v540 = vpack.c.bf16 %v530, %v528
  %v541 = vpack.c.bf16 %v531, %v529
  %v542 = vld [vmem:[%s4] sm:$0xff]
  %v543 = vld [vmem:[%s4 + $0x8] sm:$0xff]
  %545 = vset.pattern.permute.xlu0 0
  %546 = vperm.xlu0 %545, %v542
  %v547 = vpop.permute.xlu0 %546
  %550 = vset.pattern.permute.xlu0 0
  %551 = vperm.xlu0 %550, %v543
  %v552 = vpop.permute.xlu0 %551
  %v556 = vunpack.c.l.b16 %v532
  %v557 = vunpack.c.l.b16 %v533
  %v558 = vpack.c.b16 %v557, %v556
  %vm559 = vcmask 523264
  %v561 = vsel %vm559, %v558, 0
  %563 = vmatprep.subr.bf16.mxu0 %v535
  %564 = vmatpush1.bf16.msra.mxu0 %v534
  %565 = vmatprep.subr.bf16.mxu0 %v537
  %566 = vmatpush1.bf16.msra.mxu0 %v536
  %567 = vmatprep.subr.bf16.mxu0 %v539
  %568 = vmatpush1.bf16.msra.mxu0 %v538
  %569 = vmatprep.subr.bf16.mxu0 %v541
  %570 = vmatpush1.bf16.msra.mxu0 %v540
  %571 = vmatprep.subr.bf16.mxu0 0
  %572 = vmatpush1.bf16.msra.mxu0 0
  %573 = vmatprep.subr.bf16.mxu0 0
  %574 = vmatpush1.bf16.msra.mxu0 0
  %575 = vmatprep.subr.bf16.mxu0 0
  %576 = vmatpush1.bf16.msra.mxu0 0
  %577 = vmatprep.subr.bf16.mxu0 0
  %578 = vmatpush1.bf16.msra.mxu0 0
  %579 = vmatprep.subr.bf16.mxu0 0
  %580 = vmatpush1.bf16.msra.mxu0 0
  %581 = vmatprep.subr.bf16.mxu0 0
  %582 = vmatpush1.bf16.msra.mxu0 0
  %583 = vmatprep.subr.bf16.mxu0 0
  %584 = vmatpush1.bf16.msra.mxu0 0
  %585 = vmatprep.subr.bf16.mxu0 0
  %586 = vmatpush1.bf16.msra.mxu0 0
  %587 = vmatprep.subr.bf16.mxu0 0
  %588 = vmatpush1.bf16.msra.mxu0 0
  %589 = vmatprep.subr.bf16.mxu0 0
  %590 = vmatpush1.bf16.msra.mxu0 0
  %591 = vmatprep.subr.bf16.mxu0 0
  %592 = vmatpush1.bf16.msra.mxu0 0
  %593 = vmatprep.subr.bf16.mxu0 0
  %594 = vmatpush1.bf16.msra.mxu0 0
  %595 = vmatprep.mubr.bf16.mxu0 0
  %596 = vmatmul.mubr.bf16.gmra.mrb[0].mxu0 %v561
  %v597 = vpop.f32.mrb[0].mxu0
  %v598 = vadd.f32 %v547, %v597
  %v599 = vpop.f32.mrb[0].mxu0
  %v600 = vadd.f32 %v547, %v599
  %v601 = vpop.f32.mrb[0].mxu0
  %v602 = vadd.f32 %v552, %v601
  %v603 = vpop.f32.mrb[0].mxu0
  %v604 = vadd.f32 %v552, %v603
  %605 = vdwg.mxu0
  %v606 = vmul.f32 %v598, 0.5
  %v607 = vmul.f32 %v600, 0.5
  %v608 = vmul.f32 %v602, 0.5
  %v609 = vmul.f32 %v604, 0.5
  %v610 = vmul.f32 %v598, 0.044715
  %v611 = vmul.f32 %v600, 0.044715
  %v612 = vmul.f32 %v602, 0.044715
  %v613 = vmul.f32 %v604, 0.044715
  %v614 = vmul.f32 %v610, %v598
  %v615 = vmul.f32 %v611, %v600
  %v616 = vmul.f32 %v612, %v602
  %v617 = vmul.f32 %v613, %v604
  %v618 = vmul.f32 %v614, %v598
  %v619 = vmul.f32 %v615, %v600
  %v620 = vmul.f32 %v616, %v602
  %v621 = vmul.f32 %v617, %v604
  %v622 = vadd.f32 %v598, %v618
  %v623 = vadd.f32 %v600, %v619
  %v624 = vadd.f32 %v602, %v620
  %v625 = vadd.f32 %v604, %v621
  %v626 = vmul.f32 %v622, 0.7978846
  %v627 = vmul.f32 %v623, 0.7978846
  %v628 = vmul.f32 %v624, 0.7978846
  %v629 = vmul.f32 %v625, 0.7978846
  %v630 = vtanh.pop %v626
  %v631 = vtanh.pop %v627
  %v632 = vtanh.pop %v628
  %v633 = vtanh.pop %v629
  %v634 = vadd.f32 %v630, 1.0
  %v635 = vadd.f32 %v631, 1.0
  %v636 = vadd.f32 %v632, 1.0
  %v637 = vadd.f32 %v633, 1.0
  %v638 = vmul.f32 %v606, %v634
  %v639 = vmul.f32 %v607, %v635
  %v640 = vmul.f32 %v608, %v636
  %v641 = vmul.f32 %v609, %v637
  %v642 = vld [vmem:[%s5] sm:$0xf]
  %v643 = vpack.c.bf16 %v640, %v638
  %v644 = vpack.c.bf16 %v641, %v639
  %v645 = vld [vmem:[%s6] sm:$0xff]
  %647 = vset.pattern.permute.xlu0 0
  %648 = vperm.xlu0 %647, %v645
  %v649 = vpop.permute.xlu0 %648
  %vm651 = vcmask 130048
  %v653 = vsel %vm651, %v642, 0
  %655 = vmatprep.subr.bf16.mxu0 %v644
  %656 = vmatpush1.bf16.msra.mxu0 %v643
  %657 = vmatprep.subr.bf16.mxu0 0
  %658 = vmatpush1.bf16.msra.mxu0 0
  %659 = vmatprep.subr.bf16.mxu0 0
  %660 = vmatpush1.bf16.msra.mxu0 0
  %661 = vmatprep.subr.bf16.mxu0 0
  %662 = vmatpush1.bf16.msra.mxu0 0
  %663 = vmatprep.subr.bf16.mxu0 0
  %664 = vmatpush1.bf16.msra.mxu0 0
  %665 = vmatprep.subr.bf16.mxu0 0
  %666 = vmatpush1.bf16.msra.mxu0 0
  %667 = vmatprep.subr.bf16.mxu0 0
  %668 = vmatpush1.bf16.msra.mxu0 0
  %669 = vmatprep.subr.bf16.mxu0 0
  %670 = vmatpush1.bf16.msra.mxu0 0
  %671 = vmatprep.subr.bf16.mxu0 0
  %672 = vmatpush1.bf16.msra.mxu0 0
  %673 = vmatprep.subr.bf16.mxu0 0
  %674 = vmatpush1.bf16.msra.mxu0 0
  %675 = vmatprep.subr.bf16.mxu0 0
  %676 = vmatpush1.bf16.msra.mxu0 0
  %677 = vmatprep.subr.bf16.mxu0 0
  %678 = vmatpush1.bf16.msra.mxu0 0
  %679 = vmatprep.subr.bf16.mxu0 0
  %680 = vmatpush1.bf16.msra.mxu0 0
  %681 = vmatprep.subr.bf16.mxu0 0
  %682 = vmatpush1.bf16.msra.mxu0 0
  %683 = vmatprep.subr.bf16.mxu0 0
  %684 = vmatpush1.bf16.msra.mxu0 0
  %685 = vmatprep.subr.bf16.mxu0 0
  %686 = vmatpush1.bf16.msra.mxu0 0
  %687 = vmatprep.mubr.bf16.mxu0 0
  %688 = vmatmul.mubr.bf16.gmra.mrb[0].mxu0 %v653
  %v689 = vpop.f32.mrb[0].mxu0
  %v690 = vadd.f32 %v649, %v689
  %v691 = vpop.f32.mrb[0].mxu0
  %v692 = vadd.f32 %v649, %v691
  %v693 = vpop.f32.mrb[0].mxu0
  %v694 = vpop.f32.mrb[0].mxu0
  %695 = vdwg.mxu0
  %v696 = vsub.f32 0.0, %v690
  %v697 = vsub.f32 0.0, %v692
  %v698 = vmul.f32 %v696, 1.442695
  %v699 = vpow.pop %v698
  %v700 = vmul.f32 %v697, 1.442695
  %v701 = vpow.pop %v700
  %v702 = vadd.f32 %v699, 1.0
  %v703 = vadd.f32 %v701, 1.0
  %v704 = vrcp.pop %v702
  %v705 = vmul.f32 1.0, %v704
  %v706 = vrcp.pop %v703
  %v707 = vmul.f32 1.0, %v706
  %708 = vst [vmem:[%s7] sm:$0xff] %v705
  %709 = vst [vmem:[%s7 + $0x8] sm:$0xff] %v707
  // Predicated region
  $region30: #{gru_fc_forward.9} parent=0 // pred_check
    _
  $region31: #{gru_fc_forward.9} parent=0 // pred_check_branch
    %711 = sbr.rel (0) target = $region33
  $region32: #{gru_fc_forward.9} parent=0 // pred_region
    _
  $region33: #{gru_fc_forward.9} parent=0 // pred_fallthru
    _
  // Predicated region
  $region34: #{gru_fc_forward.9} parent=0 // pred_check
    _
  $region35: #{gru_fc_forward.9} parent=0 // pred_check_branch
    %713 = sbr.rel (0) target = $region37
  $region36: #{gru_fc_forward.9} parent=0 // pred_region
    _
  $region37: #{gru_fc_forward.9} parent=0 // pred_fallthru
    _

</llo_original>
